<compile_context>
chip_gen: v7x
topology: tpu7x:2x2x1
jax: 0.10.0
libtpu: 0.0.40
codegen_flags: <defaults>
</compile_context>

<pallas_src>
import jax
import jax.numpy as jnp
from jax.experimental import pallas as pl
from jax.experimental.pallas import tpu as pltpu


# ------------------------------ small helpers -------------------------------

def _largest_divisor_not_exceeding(n, cap):
    cap = max(1, cap)
    g = 1
    for d in range(1, n + 1):
        if n % d == 0 and d <= cap:
            g = d
    return g


def _vmem_budget_bytes():
    """Generation-aware per-step VMEM budget (activations + resident weight blocks)."""
    try:
        cap = int(pltpu.get_tpu_info().vmem_capacity_bytes)   # 128 MiB v5e/v6e, 64 MiB v7x
    except Exception:
        cap = 64 << 20                                        # conservative (v7x per-core)
    return max(8 << 20, min(int(cap * 0.55), 36 << 20))


def _choose_group(n, per_item_bytes, fixed_bytes, budget_bytes):
    """Items per grid step: largest divisor of n fitting the VMEM budget while keeping
    >=4 grid steps when possible (>=2 for tiny n), preferring an even step count."""
    min_steps = 4 if n >= 4 else (2 if n >= 2 else 1)
    cap = max(1, (budget_bytes - fixed_bytes) // max(1, per_item_bytes))
    cap = min(cap, max(1, n // min_steps))
    divisors = [d for d in range(1, n + 1) if n % d == 0 and d <= cap]
    best = max(divisors)
    even = [d for d in divisors if (n // d) % 2 == 0]
    if even and max(even) * 2 >= best:
        best = max(even)
    return best


# ------------------------ fused per-Encoder Pallas kernel --------------------

def _make_fused_encoder_kernel(G, L, D, Hn, Dh, A, compute_dtype):
    HD = Hn * Dh
    R = G * L
    f32 = jnp.float32
    cd = compute_dtype

    def kernel(x_ref, xt_ref, pe_ref, pet_ref, wq_ref, bq_ref, wv_ref, bv_ref,
               wV_ref, bV_ref, wqa_ref, bqa_ref, o_ref):
        # ---- positional encoding: (L, D) broadcast-added over the G items (VPU) ----
        xp = x_ref[...] + pe_ref[...]                               # (G, L, D)  f32
        # K path: torch raw .reshape(size2) view of x, taken for free in HBM.
        k = (xt_ref[...] + pet_ref[...]).astype(cd)                 # (G, D, L)

        # ---- Q / V projections: one MXU matmul each over all G*L rows ----
        xp2 = xp.reshape(R, D).astype(cd)
        xq = jnp.dot(xp2, wq_ref[...], preferred_element_type=f32) + bq_ref[...]   # (R, Hn*D)
        xv = jnp.dot(xp2, wv_ref[...], preferred_element_type=f32) + bv_ref[...]   # (R, Hn*Dh)

        # ---- torch raw C-order head split (byte reinterpretation, NOT a transpose) ----
        q = xq.reshape(G, Hn * L, D).astype(cd)                     # heads folded into M
        v = xv.reshape(G * Hn, L, Dh).astype(cd)

        # ---- scores: one (Hn*L, D) @ (D, L) matmul per item (K shared by all heads) ----
        s = jnp.einsum("gmd,gdl->gml", q, k, preferred_element_type=f32)   # (G, Hn*L, L)
        s = s.reshape(G * Hn, L, L)

        # ---- softmax over dim=-2 (reference semantics); EUP approx reciprocal ----
        s = s - jnp.max(s, axis=1, keepdims=True)
        e = jnp.exp(s)
        p = e * pl.reciprocal(jnp.sum(e, axis=1, keepdims=True), approx=True)

        # ---- per-head PV matmul, batched over (item, head) ----
        h = jnp.einsum("blm,bmd->bld", p.astype(cd), v,
                       preferred_element_type=f32)                  # (G*Hn, L, Dh)

        # ---- merge heads (raw reshape) + additive attention pooling ----
        h2 = h.reshape(R, HD)                                       # (G*L, Hn*Dh) f32
        a = jnp.tanh(jnp.dot(h2.astype(cd), wV_ref[...], preferred_element_type=f32)
                     + bV_ref[...])                                 # (R, A)
        # (R, A) @ (A, 1) as a VPU multiply + lane reduce (wqa passed as a row vector).
        sc = jnp.sum(a * wqa_ref[...], axis=-1, keepdims=True) + bqa_ref[...]   # (R, 1)
        sc = sc.reshape(G, L, 1)
        sc = sc - jnp.max(sc, axis=1, keepdims=True)
        ec = jnp.exp(sc)
        pw = ec * pl.reciprocal(jnp.sum(ec, axis=1, keepdims=True), approx=True)  # (G, L, 1)
        z = jnp.sum(pw * h2.reshape(G, L, HD), axis=1)              # (G, HD)
        o_ref[...] = z[:, None, :].astype(o_ref.dtype)

    return kernel


def _encoder_fused(x, pe, p, head_num, head_dim, compute_dtype):
    """Whole Encoder.forward for x: (N, L, D) -> (N, head_num*head_dim), one pallas_call."""
    N, L, D = x.shape
    Hn, Dh = head_num, head_dim
    HD = Hn * Dh
    A = p["wV"].shape[1]
    cd = compute_dtype

    # VMEM budgeting (fp32-conservative element counts; includes in-kernel temporaries).
    per_item = 4 * (4 * L * D + 2 * HD + 2 * L * D + 3 * L * Hn * D + 3 * L * Hn * Dh
                    + 3 * Hn * L * L + 3 * L * HD + L * A)
    fixed = 4 * 2 * (D * Hn * D + D * Hn * Dh + HD * A
                     + Hn * D + Hn * Dh + 2 * A + 1 + 2 * L * D)
    budget = _vmem_budget_bytes()
    G = _choose_group(N, per_item, fixed, budget)

    kernel = _make_fused_encoder_kernel(G, L, D, Hn, Dh, A, cd)

    x_t = x.reshape(N, D, L)          # free HBM view: torch raw .reshape(size2) K path
    pe_t = pe.reshape(D, L)

    wq = p["wq"].astype(cd)
    wv = p["wv"].astype(cd)
    wV = p["wV"].astype(cd)
    bq = p["bq"].reshape(1, Hn * D).astype(jnp.float32)
    bv = p["bv"].reshape(1, Hn * Dh).astype(jnp.float32)
    bV = p["bV"].reshape(1, A).astype(jnp.float32)
    wqa = p["wqa"].reshape(1, A).astype(jnp.float32)
    bqa = p["bqa"].reshape(1, 1).astype(jnp.float32)

    const2 = lambda i: (0, 0)
    out = pl.pallas_call(
        kernel,
        out_shape=jax.ShapeDtypeStruct((N, 1, HD), jnp.float32),
        grid=(N // G,),
        in_specs=[pl.BlockSpec((G, L, D), lambda i: (i, 0, 0)),
                  pl.BlockSpec((G, D, L), lambda i: (i, 0, 0)),
                  pl.BlockSpec((L, D), const2),
                  pl.BlockSpec((D, L), const2),
                  pl.BlockSpec((D, Hn * D), const2),
                  pl.BlockSpec((1, Hn * D), const2),
                  pl.BlockSpec((D, Hn * Dh), const2),
                  pl.BlockSpec((1, Hn * Dh), const2),
                  pl.BlockSpec((HD, A), const2),
                  pl.BlockSpec((1, A), const2),
                  pl.BlockSpec((1, A), const2),
                  pl.BlockSpec((1, 1), const2)],
        out_specs=pl.BlockSpec((G, 1, HD), lambda i: (i, 0, 0)),
        compiler_params=pltpu.CompilerParams(
            dimension_semantics=("parallel",),
            vmem_limit_bytes=int(budget) + (8 << 20)),
    )(x, x_t, pe, pe_t, wq, bq, wv, bv, wV, bV, wqa, bqa)
    return out.reshape(N, HD)


# --------------- fallback: proven 3-kernel pipeline (fp32 only) --------------

def _proj_kernel(x_ref, pe_ref, wq_ref, bq_ref, wv_ref, bv_ref, xp_ref, q_ref, v_ref):
    xp = x_ref[...] + pe_ref[...]
    xp_ref[...] = xp
    q_ref[...] = jnp.dot(xp, wq_ref[...], preferred_element_type=jnp.float32) + bq_ref[...]
    v_ref[...] = jnp.dot(xp, wv_ref[...], preferred_element_type=jnp.float32) + bv_ref[...]


def _split_proj(x2d, pe, wq, bq, wv, bv, L):
    M, D = x2d.shape
    N = M // L
    Oq, Ov = wq.shape[1], wv.shape[1]
    per_item_bytes = L * (2 * D + Oq + Ov) * 4 * 3
    G = _largest_divisor_not_exceeding(N, (8 << 20) // per_item_bytes)
    TM = G * L
    pe_t = jnp.tile(pe, (G, 1))
    out_shape = (jax.ShapeDtypeStruct((M, D), jnp.float32),
                 jax.ShapeDtypeStruct((M, Oq), jnp.float32),
                 jax.ShapeDtypeStruct((M, Ov), jnp.float32))
    return pl.pallas_call(
        _proj_kernel,
        out_shape=out_shape,
        grid=(N // G,),
        in_specs=[pl.BlockSpec((TM, D), lambda i: (i, 0)),
                  pl.BlockSpec((TM, D), lambda i: (0, 0)),
                  pl.BlockSpec((D, Oq), lambda i: (0, 0)),
                  pl.BlockSpec((1, Oq), lambda i: (0, 0)),
                  pl.BlockSpec((D, Ov), lambda i: (0, 0)),
                  pl.BlockSpec((1, Ov), lambda i: (0, 0))],
        out_specs=(pl.BlockSpec((TM, D), lambda i: (i, 0)),
                   pl.BlockSpec((TM, Oq), lambda i: (i, 0)),
                   pl.BlockSpec((TM, Ov), lambda i: (i, 0))),
        compiler_params=pltpu.CompilerParams(dimension_semantics=("parallel",)),
    )(x2d, pe_t, wq, bq.reshape(1, Oq), wv, bv.reshape(1, Ov))


def _attn_kernel(q_ref, k_ref, v_ref, o_ref):
    q = q_ref[0]
    v = v_ref[0]
    Hn = q.shape[0]
    kb = jnp.broadcast_to(k_ref[...], (Hn,) + k_ref.shape[1:])
    s = jnp.einsum('hld,hdm->hlm', q, kb, preferred_element_type=jnp.float32)
    s = s - jnp.max(s, axis=1, keepdims=True)
    e = jnp.exp(s)
    p = e * pl.reciprocal(jnp.sum(e, axis=1, keepdims=True), approx=True)
    o_ref[0] = jnp.einsum('hlm,hmd->hld', p, v, preferred_element_type=jnp.float32)


def _split_mha(q, k, v):
    N, Hn, L, D = q.shape
    Dh = v.shape[-1]
    return pl.pallas_call(
        _attn_kernel,
        out_shape=jax.ShapeDtypeStruct((N, Hn, L, Dh), jnp.float32),
        grid=(N,),
        in_specs=[pl.BlockSpec((1, Hn, L, D), lambda i: (i, 0, 0, 0)),
                  pl.BlockSpec((1, D, L), lambda i: (i, 0, 0)),
                  pl.BlockSpec((1, Hn, L, Dh), lambda i: (i, 0, 0, 0))],
        out_specs=pl.BlockSpec((1, Hn, L, Dh), lambda i: (i, 0, 0, 0)),
        compiler_params=pltpu.CompilerParams(dimension_semantics=("parallel",)),
    )(q, k, v)


def _pool_kernel(h_ref, wv_ref, bv_ref, wq_ref, bq_ref, o_ref):
    h = h_ref[0]
    a = jnp.tanh(jnp.dot(h, wv_ref[...], preferred_element_type=jnp.float32) + bv_ref[...])
    s = jnp.dot(a, wq_ref[...], preferred_element_type=jnp.float32) + bq_ref[...]
    s = s - jnp.max(s, axis=0, keepdims=True)
    e = jnp.exp(s)
    p = e * pl.reciprocal(jnp.sum(e, axis=0, keepdims=True), approx=True)
    o_ref[0] = jnp.sum(p * h, axis=0, keepdims=True)


def _split_pool(h, wv, bv, wq, bq):
    N, L, HD = h.shape
    A = wv.shape[1]
    out = pl.pallas_call(
        _pool_kernel,
        out_shape=jax.ShapeDtypeStruct((N, 1, HD), jnp.float32),
        grid=(N,),
        in_specs=[pl.BlockSpec((1, L, HD), lambda i: (i, 0, 0)),
                  pl.BlockSpec((HD, A), lambda i: (0, 0)),
                  pl.BlockSpec((1, A), lambda i: (0, 0)),
                  pl.BlockSpec((A, 1), lambda i: (0, 0)),
                  pl.BlockSpec((1, 1), lambda i: (0, 0))],
        out_specs=pl.BlockSpec((1, 1, HD), lambda i: (i, 0, 0)),
        compiler_params=pltpu.CompilerParams(dimension_semantics=("parallel",)),
    )(h, wv, bv.reshape(1, A), wq, bq.reshape(1, 1))
    return out.reshape(N, HD)


def _encoder_split(x, pe, p, head_num, head_dim):
    """Fallback Encoder.forward: 3 pallas_calls, raw reshapes done in HBM (fp32)."""
    N, L, D = x.shape
    Hn, Dh = head_num, head_dim
    xp, xq, xv = _split_proj(x.reshape(N * L, D), pe,
                             p["wq"], p["bq"], p["wv"], p["bv"], L)
    q = xq.reshape(N, Hn, L, D)
    k = xp.reshape(N, D, L)
    v = xv.reshape(N, Hn, L, Dh)
    h = _split_mha(q, k, v)
    h2 = h.reshape(N, L, Dh * Hn)
    return _split_pool(h2, p["wV"], p["bV"], p["wqa"], p["bqa"])


# ------------------------- Encoder / UserEncoder -----------------------------

def encoder_apply(x, pe, p, head_num, head_dim, compute_dtype, fused):
    if fused:
        return _encoder_fused(x, pe, p, head_num, head_dim, compute_dtype)
    # fallback path keeps the proven fp32 kernels (compute_dtype ignored)
    return _encoder_split(x, pe, p, head_num, head_dim)


def user_encoder(x_idx, params, head_num, head_dim,
                 compute_dtype=jnp.float32, fused=True):
    """x_idx: (B, his_size, title_size) int32 token ids -> (B, head_num*head_dim)."""
    B, Hs, T = x_idx.shape
    D1 = params["emb"].shape[1]
    HD = head_num * head_dim
    # TODO(synk): fuse the embedding gather into the first encoder kernel (scalar-prefetched
    #             token ids + manual DMA row gather); kept as an XLA gather here.
    emb = params["emb"][x_idx]                                            # (B, Hs, T, D1)
    h = encoder_apply(emb.reshape(B * Hs, T, D1), params["pe1"], params["enc1"],
                      head_num, head_dim, compute_dtype, fused)           # (B*Hs, HD)
    z = encoder_apply(h.reshape(B, Hs, HD), params["pe2"], params["enc2"],
                      head_num, head_dim, compute_dtype, fused)           # (B, HD)
    return z


# ---------------------------- pure-JAX reference -----------------------------

def _mm(a, b, cd):
    return jnp.matmul(a.astype(cd), b.astype(cd), preferred_element_type=jnp.float32)


def encoder_ref(x, p, head_num, head_dim, compute_dtype=jnp.float32):
    cd = compute_dtype
    size = x.shape
    Hn, Dh = head_num, head_dim
    L, D = size[-2], size[-1]
    size1 = size[:-2] + (Hn, L, D)
    size2 = size[:-2] + (Hn, D, L)
    size3 = size[:-2] + (Hn, L, Dh)
    size4 = size[:-2] + (L, Dh * Hn)
    xq = _mm(x, p["wq"], cd) + p["bq"]
    rep = (1,) * (len(size) - 2) + (Hn, 1, 1)
    xk = jnp.tile(x[..., None, :, :], rep)
    weights = _mm(xq.reshape(size1), xk.reshape(size2), cd)
    weights = jax.nn.softmax(weights, axis=-2)
    xv = _mm(x, p["wv"], cd) + p["bv"]
    h = _mm(weights, xv.reshape(size3), cd)
    h = h.reshape(size4)
    a = jnp.tanh(_mm(h, p["wV"], cd) + p["bV"])
    a = _mm(a, p["wqa"], cd) + p["bqa"]
    a = jax.nn.softmax(a, axis=-2)
    a = jnp.swapaxes(a, -2, -1)
    z = jnp.matmul(a, h)
    return jnp.squeeze(z)


def user_encoder_ref(x_idx, params, head_num, head_dim, compute_dtype=jnp.float32):
    emb = params["emb"][x_idx]
    h = emb + params["pe1"]
    h = encoder_ref(h, params["enc1"], head_num, head_dim, compute_dtype)
    h = h + params["pe2"]
    return encoder_ref(h, params["enc2"], head_num, head_dim, compute_dtype)


# ------------------------------- init helpers --------------------------------

def init_linear(key, d_in, d_out):
    kw, kb = jax.random.split(key)
    bound = 1.0 / jnp.sqrt(jnp.float32(d_in))
    w = jax.random.uniform(kw, (d_in, d_out), jnp.float32, -bound, bound)
    b = jax.random.uniform(kb, (d_out,), jnp.float32, -bound, bound)
    return w, b


def init_encoder(key, d_model, head_num, head_dim, attn_hidden):
    k1, k2, k3, k4 = jax.random.split(key, 4)
    wq, bq = init_linear(k1, d_model, d_model * head_num)        # Qs
    wv, bv = init_linear(k2, d_model, head_dim * head_num)       # Vs
    wV, bV = init_linear(k3, head_num * head_dim, attn_hidden)   # V
    wqa, bqa = init_linear(k4, attn_hidden, 1)                   # q
    return dict(wq=wq, bq=bq, wv=wv, bv=bv, wV=wV, bV=bV, wqa=wqa, bqa=bqa)


def sinusoidal_pe(length, dim):
    pos = jnp.arange(length, dtype=jnp.float32)[:, None]
    idx = jnp.arange(dim, dtype=jnp.float32)[None, :]
    angle = pos / jnp.power(10000.0, (2.0 * jnp.floor(idx / 2.0)) / dim)
    return jnp.where(jnp.arange(dim)[None, :] % 2 == 0,
                     jnp.sin(angle), jnp.cos(angle)).astype(jnp.float32)


# ----------------------------------- main ------------------------------------

if __name__ == "__main__":
    # small hparams consistent with the NRMS UserEncoder structure
    B, Hs, T = 2, 8, 8          # batch, his_size, title_size
    vocab, D1 = 50, 32          # vocab, word_emb_dim (= d_model of enc1)
    Hn, Dh, A = 4, 8, 16        # head_num, head_dim, attention_hidden_dim
    HD = Hn * Dh                # = d_model of enc2

    root = jax.random.PRNGKey(0)
    k_emb, k_e1, k_e2, k_idx = jax.random.split(root, 4)
    params = {
        "emb": jax.random.normal(k_emb, (vocab, D1), jnp.float32) * 0.1,
        "pe1": sinusoidal_pe(T, D1),
        "pe2": sinusoidal_pe(Hs, HD),
        "enc1": init_encoder(k_e1, D1, Hn, Dh, A),
        "enc2": init_encoder(k_e2, HD, Hn, Dh, A),
    }
    x_idx = jax.random.randint(k_idx, (B, Hs, T), 0, vocab, dtype=jnp.int32)

    with jax.default_matmul_precision("float32"):
        ref32 = user_encoder_ref(x_idx, params, Hn, Dh, jnp.float32)
        ref_bf16 = user_encoder_ref(x_idx, params, Hn, Dh, jnp.bfloat16)

    def run(fused, cd):
        fn = jax.jit(lambda xi, pr: user_encoder(xi, pr, Hn, Dh,
                                                 compute_dtype=cd, fused=fused))
        return jax.block_until_ready(fn(x_idx, params))

    # Probe the fused path; fall back to the proven split pipeline on any failure.
    mode = "fused"
    try:
        out32 = run(True, jnp.float32)
        if out32.shape != (B, HD) or not bool(
                jnp.allclose(out32, ref32, atol=1e-2, rtol=1e-2)):
            raise RuntimeError("fused path mismatch")
    except Exception:
        mode = "split"
        out32 = run(False, jnp.float32)

    assert out32.shape == (B, HD), out32.shape
    max_err32 = float(jnp.max(jnp.abs(out32 - ref32)))
    assert jnp.allclose(out32, ref32, atol=1e-2, rtol=1e-2), (mode, max_err32)

    if mode == "fused":
        # production-recommended reduced-precision mode: bf16 matmul inputs, f32 accumulate
        out_bf16 = run(True, jnp.bfloat16)
        max_err_bf = float(jnp.max(jnp.abs(out_bf16 - ref_bf16)))
        assert jnp.allclose(out_bf16, ref_bf16, atol=3e-2, rtol=3e-2), max_err_bf

    print("KERNEL_OK")
</pallas_src>

<mosaic_0001>
module attributes {stable_mosaic.version = 11 : i64} {
  func.func @kernel(%arg0: i32, %arg1: memref<4x8x32xf32, #tpu.memory_space<vmem>>, %arg2: memref<4x32x8xf32, #tpu.memory_space<vmem>>, %arg3: memref<8x32xf32, #tpu.memory_space<vmem>>, %arg4: memref<32x8xf32, #tpu.memory_space<vmem>>, %arg5: memref<32x128xf32, #tpu.memory_space<vmem>>, %arg6: memref<1x128xf32, #tpu.memory_space<vmem>>, %arg7: memref<32x32xf32, #tpu.memory_space<vmem>>, %arg8: memref<1x32xf32, #tpu.memory_space<vmem>>, %arg9: memref<32x16xf32, #tpu.memory_space<vmem>>, %arg10: memref<1x16xf32, #tpu.memory_space<vmem>>, %arg11: memref<1x16xf32, #tpu.memory_space<vmem>>, %arg12: memref<1x1xf32, #tpu.memory_space<vmem>>, %arg13: memref<4x1x32xf32, #tpu.memory_space<vmem>>) attributes {dimension_semantics = [#tpu.dimension_semantics<parallel>], iteration_bounds = array<i64: 4>, scalar_prefetch = 0 : i64, scratch_operands = 0 : i64, tpu.core_type = #tpu.core_type<tc>, window_params = [{transform_indices = @transform_0, window_bounds = array<i64: 4, 8, 32>}, {transform_indices = @transform_1, window_bounds = array<i64: 4, 32, 8>}, {pipeline_mode = #tpu.pipeline_mode<synchronous>, transform_indices = @transform_2, window_bounds = array<i64: 8, 32>}, {pipeline_mode = #tpu.pipeline_mode<synchronous>, transform_indices = @transform_3, window_bounds = array<i64: 32, 8>}, {pipeline_mode = #tpu.pipeline_mode<synchronous>, transform_indices = @transform_4, window_bounds = array<i64: 32, 128>}, {pipeline_mode = #tpu.pipeline_mode<synchronous>, transform_indices = @transform_5, window_bounds = array<i64: 1, 128>}, {pipeline_mode = #tpu.pipeline_mode<synchronous>, transform_indices = @transform_6, window_bounds = array<i64: 32, 32>}, {pipeline_mode = #tpu.pipeline_mode<synchronous>, transform_indices = @transform_7, window_bounds = array<i64: 1, 32>}, {pipeline_mode = #tpu.pipeline_mode<synchronous>, transform_indices = @transform_8, window_bounds = array<i64: 32, 16>}, {pipeline_mode = #tpu.pipeline_mode<synchronous>, transform_indices = @transform_9, window_bounds = array<i64: 1, 16>}, {pipeline_mode = #tpu.pipeline_mode<synchronous>, transform_indices = @transform_10, window_bounds = array<i64: 1, 16>}, {pipeline_mode = #tpu.pipeline_mode<synchronous>, transform_indices = @transform_11, window_bounds = array<i64: 1, 1>}, {transform_indices = @transform_12, window_bounds = array<i64: 4, 1, 32>}]} {
    %c0 = arith.constant 0 : index
    %c0_0 = arith.constant 0 : index
    %c0_1 = arith.constant 0 : index
    %0 = vector.load %arg1[%c0, %c0_0, %c0_1] : memref<4x8x32xf32, #tpu.memory_space<vmem>>, vector<4x8x32xf32>
    %c0_2 = arith.constant 0 : index
    %c0_3 = arith.constant 0 : index
    %1 = vector.load %arg3[%c0_2, %c0_3] : memref<8x32xf32, #tpu.memory_space<vmem>>, vector<8x32xf32>
    %2 = vector.shape_cast %1 : vector<8x32xf32> to vector<1x8x32xf32>
    %3 = vector.broadcast %2 : vector<1x8x32xf32> to vector<4x8x32xf32>
    %4 = arith.addf %0, %3 : vector<4x8x32xf32>
    %c0_4 = arith.constant 0 : index
    %c0_5 = arith.constant 0 : index
    %c0_6 = arith.constant 0 : index
    %5 = vector.load %arg2[%c0_4, %c0_5, %c0_6] : memref<4x32x8xf32, #tpu.memory_space<vmem>>, vector<4x32x8xf32>
    %c0_7 = arith.constant 0 : index
    %c0_8 = arith.constant 0 : index
    %6 = vector.load %arg4[%c0_7, %c0_8] : memref<32x8xf32, #tpu.memory_space<vmem>>, vector<32x8xf32>
    %7 = vector.shape_cast %6 : vector<32x8xf32> to vector<1x32x8xf32>
    %8 = vector.broadcast %7 : vector<1x32x8xf32> to vector<4x32x8xf32>
    %9 = arith.addf %5, %8 : vector<4x32x8xf32>
    %10 = vector.shape_cast %4 : vector<4x8x32xf32> to vector<32x32xf32>
    %c0_9 = arith.constant 0 : index
    %c0_10 = arith.constant 0 : index
    %11 = vector.load %arg5[%c0_9, %c0_10] : memref<32x128xf32, #tpu.memory_space<vmem>>, vector<32x128xf32>
    %cst = arith.constant dense<0.000000e+00> : vector<32x128xf32>
    %12 = tpu.matmul %10, %11, %cst {dimension_numbers = #tpu.dot_dimension_numbers<[1], [0], [0], [1], [0, 0, 1, 1], [], []>} : vector<32x32xf32>, vector<32x128xf32>, vector<32x128xf32> -> vector<32x128xf32>
    %c0_11 = arith.constant 0 : index
    %c0_12 = arith.constant 0 : index
    %13 = vector.load %arg6[%c0_11, %c0_12] : memref<1x128xf32, #tpu.memory_space<vmem>>, vector<1x128xf32>
    %14 = vector.broadcast %13 : vector<1x128xf32> to vector<32x128xf32>
    %15 = arith.addf %12, %14 : vector<32x128xf32>
    %c0_13 = arith.constant 0 : index
    %c0_14 = arith.constant 0 : index
    %16 = vector.load %arg7[%c0_13, %c0_14] : memref<32x32xf32, #tpu.memory_space<vmem>>, vector<32x32xf32>
    %cst_15 = arith.constant dense<0.000000e+00> : vector<32x32xf32>
    %17 = tpu.matmul %10, %16, %cst_15 {dimension_numbers = #tpu.dot_dimension_numbers<[1], [0], [0], [1], [0, 0, 1, 1], [], []>} : vector<32x32xf32>, vector<32x32xf32>, vector<32x32xf32> -> vector<32x32xf32>
    %c0_16 = arith.constant 0 : index
    %c0_17 = arith.constant 0 : index
    %18 = vector.load %arg8[%c0_16, %c0_17] : memref<1x32xf32, #tpu.memory_space<vmem>>, vector<1x32xf32>
    %19 = vector.broadcast %18 : vector<1x32xf32> to vector<32x32xf32>
    %20 = arith.addf %17, %19 : vector<32x32xf32>
    %21 = vector.shape_cast %15 : vector<32x128xf32> to vector<4x32x32xf32>
    %22 = vector.shape_cast %20 : vector<32x32xf32> to vector<16x8x8xf32>
    "tpu.trace_start"() <{level = 10 : i32, message = "gmd,gdl->gml"}> : () -> ()
    %cst_18 = arith.constant dense<0.000000e+00> : vector<4x32x8xf32>
    %23 = tpu.matmul %21, %9, %cst_18 {dimension_numbers = #tpu.dot_dimension_numbers<[2], [1], [1], [2], [0, 0, 0, 1, 1, 2], [0], [0]>} : vector<4x32x32xf32>, vector<4x32x8xf32>, vector<4x32x8xf32> -> vector<4x32x8xf32>
    "tpu.trace_stop"() : () -> ()
    %24 = vector.shape_cast %23 : vector<4x32x8xf32> to vector<16x8x8xf32>
    %cst_19 = arith.constant dense<0xFF800000> : vector<16x8xf32>
    %25 = vector.multi_reduction <maximumf>, %24, %cst_19 [1] : vector<16x8x8xf32> to vector<16x8xf32>
    %26 = vector.shape_cast %25 : vector<16x8xf32> to vector<16x1x8xf32>
    %27 = vector.broadcast %26 : vector<16x1x8xf32> to vector<16x8x8xf32>
    %28 = arith.subf %24, %27 : vector<16x8x8xf32>
    %29 = math.exp %28 : vector<16x8x8xf32>
    %cst_20 = arith.constant dense<0.000000e+00> : vector<16x8xf32>
    %30 = vector.multi_reduction <add>, %29, %cst_20 [1] : vector<16x8x8xf32> to vector<16x8xf32>
    %31 = vector.shape_cast %30 : vector<16x8xf32> to vector<16x1x8xf32>
    %32 = tpu.reciprocal %31 {approx = true} : vector<16x1x8xf32> -> vector<16x1x8xf32>
    %33 = vector.broadcast %32 : vector<16x1x8xf32> to vector<16x8x8xf32>
    %34 = arith.mulf %29, %33 : vector<16x8x8xf32>
    "tpu.trace_start"() <{level = 10 : i32, message = "blm,bmd->bld"}> : () -> ()
    %cst_21 = arith.constant dense<0.000000e+00> : vector<16x8x8xf32>
    %35 = tpu.matmul %34, %22, %cst_21 {dimension_numbers = #tpu.dot_dimension_numbers<[2], [1], [1], [2], [0, 0, 0, 1, 1, 2], [0], [0]>} : vector<16x8x8xf32>, vector<16x8x8xf32>, vector<16x8x8xf32> -> vector<16x8x8xf32>
    "tpu.trace_stop"() : () -> ()
    %36 = vector.shape_cast %35 : vector<16x8x8xf32> to vector<32x32xf32>
    %c0_22 = arith.constant 0 : index
    %c0_23 = arith.constant 0 : index
    %37 = vector.load %arg9[%c0_22, %c0_23] : memref<32x16xf32, #tpu.memory_space<vmem>>, vector<32x16xf32>
    %cst_24 = arith.constant dense<0.000000e+00> : vector<32x16xf32>
    %38 = tpu.matmul %36, %37, %cst_24 {dimension_numbers = #tpu.dot_dimension_numbers<[1], [0], [0], [1], [0, 0, 1, 1], [], []>} : vector<32x32xf32>, vector<32x16xf32>, vector<32x16xf32> -> vector<32x16xf32>
    %c0_25 = arith.constant 0 : index
    %c0_26 = arith.constant 0 : index
    %39 = vector.load %arg10[%c0_25, %c0_26] : memref<1x16xf32, #tpu.memory_space<vmem>>, vector<1x16xf32>
    %40 = vector.broadcast %39 : vector<1x16xf32> to vector<32x16xf32>
    %41 = arith.addf %38, %40 : vector<32x16xf32>
    %42 = math.tanh %41 : vector<32x16xf32>
    %c0_27 = arith.constant 0 : index
    %c0_28 = arith.constant 0 : index
    %43 = vector.load %arg11[%c0_27, %c0_28] : memref<1x16xf32, #tpu.memory_space<vmem>>, vector<1x16xf32>
    %44 = vector.broadcast %43 : vector<1x16xf32> to vector<32x16xf32>
    %45 = arith.mulf %42, %44 : vector<32x16xf32>
    %cst_29 = arith.constant dense<0.000000e+00> : vector<32xf32>
    %46 = vector.multi_reduction <add>, %45, %cst_29 [1] : vector<32x16xf32> to vector<32xf32>
    %47 = vector.shape_cast %46 : vector<32xf32> to vector<32x1xf32>
    %c0_30 = arith.constant 0 : index
    %c0_31 = arith.constant 0 : index
    %48 = vector.load %arg12[%c0_30, %c0_31] : memref<1x1xf32, #tpu.memory_space<vmem>>, vector<1x1xf32>
    %49 = vector.broadcast %48 : vector<1x1xf32> to vector<32x1xf32>
    %50 = arith.addf %47, %49 : vector<32x1xf32>
    %51 = vector.shape_cast %50 : vector<32x1xf32> to vector<4x8x1xf32>
    %cst_32 = arith.constant dense<0xFF800000> : vector<4x1xf32>
    %52 = vector.multi_reduction <maximumf>, %51, %cst_32 [1] : vector<4x8x1xf32> to vector<4x1xf32>
    %53 = vector.shape_cast %52 : vector<4x1xf32> to vector<4x1x1xf32>
    %54 = vector.broadcast %53 : vector<4x1x1xf32> to vector<4x8x1xf32>
    %55 = arith.subf %51, %54 : vector<4x8x1xf32>
    %56 = math.exp %55 : vector<4x8x1xf32>
    %cst_33 = arith.constant dense<0.000000e+00> : vector<4x1xf32>
    %57 = vector.multi_reduction <add>, %56, %cst_33 [1] : vector<4x8x1xf32> to vector<4x1xf32>
    %58 = vector.shape_cast %57 : vector<4x1xf32> to vector<4x1x1xf32>
    %59 = tpu.reciprocal %58 {approx = true} : vector<4x1x1xf32> -> vector<4x1x1xf32>
    %60 = vector.broadcast %59 : vector<4x1x1xf32> to vector<4x8x1xf32>
    %61 = arith.mulf %56, %60 : vector<4x8x1xf32>
    %62 = vector.shape_cast %36 : vector<32x32xf32> to vector<4x8x32xf32>
    %63 = vector.broadcast %61 : vector<4x8x1xf32> to vector<4x8x32xf32>
    %64 = arith.mulf %63, %62 : vector<4x8x32xf32>
    %cst_34 = arith.constant dense<0.000000e+00> : vector<4x32xf32>
    %65 = vector.multi_reduction <add>, %64, %cst_34 [1] : vector<4x8x32xf32> to vector<4x32xf32>
    %66 = vector.shape_cast %65 : vector<4x32xf32> to vector<4x1x32xf32>
    %c0_35 = arith.constant 0 : index
    %c0_36 = arith.constant 0 : index
    %c0_37 = arith.constant 0 : index
    %67 = vector.load %arg13[%c0_35, %c0_36, %c0_37] : memref<4x1x32xf32, #tpu.memory_space<vmem>>, vector<4x1x32xf32>
    tpu.vector_store %arg13[%c0_35, %c0_36, %c0_37], %66 {strides = array<i32>} : memref<4x1x32xf32, #tpu.memory_space<vmem>>, vector<4x1x32xf32>,
    return
  }
  func.func @transform_0(%arg0: i32) -> (i32, i32, i32) {
    %c0_i32 = arith.constant 0 : i32
    %c0_i32_0 = arith.constant 0 : i32
    %c0_i32_1 = arith.constant 0 : i32
    return %arg0, %c0_i32, %c0_i32_0 : i32, i32, i32
  }
  func.func @transform_1(%arg0: i32) -> (i32, i32, i32) {
    %c0_i32 = arith.constant 0 : i32
    %c0_i32_0 = arith.constant 0 : i32
    %c0_i32_1 = arith.constant 0 : i32
    return %arg0, %c0_i32, %c0_i32_0 : i32, i32, i32
  }
  func.func @transform_2(%arg0: i32) -> (i32, i32) {
    %c0_i32 = arith.constant 0 : i32
    %c0_i32_0 = arith.constant 0 : i32
    %c0_i32_1 = arith.constant 0 : i32
    return %c0_i32, %c0_i32_0 : i32, i32
  }
  func.func @transform_3(%arg0: i32) -> (i32, i32) {
    %c0_i32 = arith.constant 0 : i32
    %c0_i32_0 = arith.constant 0 : i32
    %c0_i32_1 = arith.constant 0 : i32
    return %c0_i32, %c0_i32_0 : i32, i32
  }
  func.func @transform_4(%arg0: i32) -> (i32, i32) {
    %c0_i32 = arith.constant 0 : i32
    %c0_i32_0 = arith.constant 0 : i32
    %c0_i32_1 = arith.constant 0 : i32
    return %c0_i32, %c0_i32_0 : i32, i32
  }
  func.func @transform_5(%arg0: i32) -> (i32, i32) {
    %c0_i32 = arith.constant 0 : i32
    %c0_i32_0 = arith.constant 0 : i32
    %c0_i32_1 = arith.constant 0 : i32
    return %c0_i32, %c0_i32_0 : i32, i32
  }
  func.func @transform_6(%arg0: i32) -> (i32, i32) {
    %c0_i32 = arith.constant 0 : i32
    %c0_i32_0 = arith.constant 0 : i32
    %c0_i32_1 = arith.constant 0 : i32
    return %c0_i32, %c0_i32_0 : i32, i32
  }
  func.func @transform_7(%arg0: i32) -> (i32, i32) {
    %c0_i32 = arith.constant 0 : i32
    %c0_i32_0 = arith.constant 0 : i32
    %c0_i32_1 = arith.constant 0 : i32
    return %c0_i32, %c0_i32_0 : i32, i32
  }
  func.func @transform_8(%arg0: i32) -> (i32, i32) {
    %c0_i32 = arith.constant 0 : i32
    %c0_i32_0 = arith.constant 0 : i32
    %c0_i32_1 = arith.constant 0 : i32
    return %c0_i32, %c0_i32_0 : i32, i32
  }
  func.func @transform_9(%arg0: i32) -> (i32, i32) {
    %c0_i32 = arith.constant 0 : i32
    %c0_i32_0 = arith.constant 0 : i32
    %c0_i32_1 = arith.constant 0 : i32
    return %c0_i32, %c0_i32_0 : i32, i32
  }
  func.func @transform_10(%arg0: i32) -> (i32, i32) {
    %c0_i32 = arith.constant 0 : i32
    %c0_i32_0 = arith.constant 0 : i32
    %c0_i32_1 = arith.constant 0 : i32
    return %c0_i32, %c0_i32_0 : i32, i32
  }
  func.func @transform_11(%arg0: i32) -> (i32, i32) {
    %c0_i32 = arith.constant 0 : i32
    %c0_i32_0 = arith.constant 0 : i32
    %c0_i32_1 = arith.constant 0 : i32
    return %c0_i32, %c0_i32_0 : i32, i32
  }
  func.func @transform_12(%arg0: i32) -> (i32, i32, i32) {
    %c0_i32 = arith.constant 0 : i32
    %c0_i32_0 = arith.constant 0 : i32
    %c0_i32_1 = arith.constant 0 : i32
    return %arg0, %c0_i32, %c0_i32_0 : i32, i32, i32
  }
}

module attributes {stable_mosaic.version = 11 : i64} {
  func.func @kernel(%arg0: i32, %arg1: memref<1x8x32xf32, #tpu.memory_space<vmem>>, %arg2: memref<1x32x8xf32, #tpu.memory_space<vmem>>, %arg3: memref<8x32xf32, #tpu.memory_space<vmem>>, %arg4: memref<32x8xf32, #tpu.memory_space<vmem>>, %arg5: memref<32x128xf32, #tpu.memory_space<vmem>>, %arg6: memref<1x128xf32, #tpu.memory_space<vmem>>, %arg7: memref<32x32xf32, #tpu.memory_space<vmem>>, %arg8: memref<1x32xf32, #tpu.memory_space<vmem>>, %arg9: memref<32x16xf32, #tpu.memory_space<vmem>>, %arg10: memref<1x16xf32, #tpu.memory_space<vmem>>, %arg11: memref<1x16xf32, #tpu.memory_space<vmem>>, %arg12: memref<1x1xf32, #tpu.memory_space<vmem>>, %arg13: memref<1x1x32xf32, #tpu.memory_space<vmem>>) attributes {dimension_semantics = [#tpu.dimension_semantics<parallel>], iteration_bounds = array<i64: 2>, scalar_prefetch = 0 : i64, scratch_operands = 0 : i64, tpu.core_type = #tpu.core_type<tc>, window_params = [{transform_indices = @transform_0, window_bounds = array<i64: 1, 8, 32>}, {transform_indices = @transform_1, window_bounds = array<i64: 1, 32, 8>}, {pipeline_mode = #tpu.pipeline_mode<synchronous>, transform_indices = @transform_2, window_bounds = array<i64: 8, 32>}, {pipeline_mode = #tpu.pipeline_mode<synchronous>, transform_indices = @transform_3, window_bounds = array<i64: 32, 8>}, {pipeline_mode = #tpu.pipeline_mode<synchronous>, transform_indices = @transform_4, window_bounds = array<i64: 32, 128>}, {pipeline_mode = #tpu.pipeline_mode<synchronous>, transform_indices = @transform_5, window_bounds = array<i64: 1, 128>}, {pipeline_mode = #tpu.pipeline_mode<synchronous>, transform_indices = @transform_6, window_bounds = array<i64: 32, 32>}, {pipeline_mode = #tpu.pipeline_mode<synchronous>, transform_indices = @transform_7, window_bounds = array<i64: 1, 32>}, {pipeline_mode = #tpu.pipeline_mode<synchronous>, transform_indices = @transform_8, window_bounds = array<i64: 32, 16>}, {pipeline_mode = #tpu.pipeline_mode<synchronous>, transform_indices = @transform_9, window_bounds = array<i64: 1, 16>}, {pipeline_mode = #tpu.pipeline_mode<synchronous>, transform_indices = @transform_10, window_bounds = array<i64: 1, 16>}, {pipeline_mode = #tpu.pipeline_mode<synchronous>, transform_indices = @transform_11, window_bounds = array<i64: 1, 1>}, {transform_indices = @transform_12, window_bounds = array<i64: 1, 1, 32>}]} {
    %c0 = arith.constant 0 : index
    %c0_0 = arith.constant 0 : index
    %c0_1 = arith.constant 0 : index
    %0 = vector.load %arg1[%c0, %c0_0, %c0_1] : memref<1x8x32xf32, #tpu.memory_space<vmem>>, vector<1x8x32xf32>
    %c0_2 = arith.constant 0 : index
    %c0_3 = arith.constant 0 : index
    %1 = vector.load %arg3[%c0_2, %c0_3] : memref<8x32xf32, #tpu.memory_space<vmem>>, vector<8x32xf32>
    %2 = vector.shape_cast %1 : vector<8x32xf32> to vector<1x8x32xf32>
    %3 = arith.addf %0, %2 : vector<1x8x32xf32>
    %c0_4 = arith.constant 0 : index
    %c0_5 = arith.constant 0 : index
    %c0_6 = arith.constant 0 : index
    %4 = vector.load %arg2[%c0_4, %c0_5, %c0_6] : memref<1x32x8xf32, #tpu.memory_space<vmem>>, vector<1x32x8xf32>
    %c0_7 = arith.constant 0 : index
    %c0_8 = arith.constant 0 : index
    %5 = vector.load %arg4[%c0_7, %c0_8] : memref<32x8xf32, #tpu.memory_space<vmem>>, vector<32x8xf32>
    %6 = vector.shape_cast %5 : vector<32x8xf32> to vector<1x32x8xf32>
    %7 = arith.addf %4, %6 : vector<1x32x8xf32>
    %8 = vector.shape_cast %3 : vector<1x8x32xf32> to vector<8x32xf32>
    %c0_9 = arith.constant 0 : index
    %c0_10 = arith.constant 0 : index
    %9 = vector.load %arg5[%c0_9, %c0_10] : memref<32x128xf32, #tpu.memory_space<vmem>>, vector<32x128xf32>
    %cst = arith.constant dense<0.000000e+00> : vector<8x128xf32>
    %10 = tpu.matmul %8, %9, %cst {dimension_numbers = #tpu.dot_dimension_numbers<[1], [0], [0], [1], [0, 0, 1, 1], [], []>} : vector<8x32xf32>, vector<32x128xf32>, vector<8x128xf32> -> vector<8x128xf32>
    %c0_11 = arith.constant 0 : index
    %c0_12 = arith.constant 0 : index
    %11 = vector.load %arg6[%c0_11, %c0_12] : memref<1x128xf32, #tpu.memory_space<vmem>>, vector<1x128xf32>
    %12 = vector.broadcast %11 : vector<1x128xf32> to vector<8x128xf32>
    %13 = arith.addf %10, %12 : vector<8x128xf32>
    %c0_13 = arith.constant 0 : index
    %c0_14 = arith.constant 0 : index
    %14 = vector.load %arg7[%c0_13, %c0_14] : memref<32x32xf32, #tpu.memory_space<vmem>>, vector<32x32xf32>
    %cst_15 = arith.constant dense<0.000000e+00> : vector<8x32xf32>
    %15 = tpu.matmul %8, %14, %cst_15 {dimension_numbers = #tpu.dot_dimension_numbers<[1], [0], [0], [1], [0, 0, 1, 1], [], []>} : vector<8x32xf32>, vector<32x32xf32>, vector<8x32xf32> -> vector<8x32xf32>
    %c0_16 = arith.constant 0 : index
    %c0_17 = arith.constant 0 : index
    %16 = vector.load %arg8[%c0_16, %c0_17] : memref<1x32xf32, #tpu.memory_space<vmem>>, vector<1x32xf32>
    %17 = vector.broadcast %16 : vector<1x32xf32> to vector<8x32xf32>
    %18 = arith.addf %15, %17 : vector<8x32xf32>
    %19 = vector.shape_cast %13 : vector<8x128xf32> to vector<1x32x32xf32>
    %20 = vector.shape_cast %18 : vector<8x32xf32> to vector<4x8x8xf32>
    "tpu.trace_start"() <{level = 10 : i32, message = "gmd,gdl->gml"}> : () -> ()
    %cst_18 = arith.constant dense<0.000000e+00> : vector<1x32x8xf32>
    %21 = tpu.matmul %19, %7, %cst_18 {dimension_numbers = #tpu.dot_dimension_numbers<[2], [1], [1], [2], [0, 0, 0, 1, 1, 2], [0], [0]>} : vector<1x32x32xf32>, vector<1x32x8xf32>, vector<1x32x8xf32> -> vector<1x32x8xf32>
    "tpu.trace_stop"() : () -> ()
    %22 = vector.shape_cast %21 : vector<1x32x8xf32> to vector<4x8x8xf32>
    %cst_19 = arith.constant dense<0xFF800000> : vector<4x8xf32>
    %23 = vector.multi_reduction <maximumf>, %22, %cst_19 [1] : vector<4x8x8xf32> to vector<4x8xf32>
    %24 = vector.shape_cast %23 : vector<4x8xf32> to vector<4x1x8xf32>
    %25 = vector.broadcast %24 : vector<4x1x8xf32> to vector<4x8x8xf32>
    %26 = arith.subf %22, %25 : vector<4x8x8xf32>
    %27 = math.exp %26 : vector<4x8x8xf32>
    %cst_20 = arith.constant dense<0.000000e+00> : vector<4x8xf32>
    %28 = vector.multi_reduction <add>, %27, %cst_20 [1] : vector<4x8x8xf32> to vector<4x8xf32>
    %29 = vector.shape_cast %28 : vector<4x8xf32> to vector<4x1x8xf32>
    %30 = tpu.reciprocal %29 {approx = true} : vector<4x1x8xf32> -> vector<4x1x8xf32>
    %31 = vector.broadcast %30 : vector<4x1x8xf32> to vector<4x8x8xf32>
    %32 = arith.mulf %27, %31 : vector<4x8x8xf32>
    "tpu.trace_start"() <{level = 10 : i32, message = "blm,bmd->bld"}> : () -> ()
    %cst_21 = arith.constant dense<0.000000e+00> : vector<4x8x8xf32>
    %33 = tpu.matmul %32, %20, %cst_21 {dimension_numbers = #tpu.dot_dimension_numbers<[2], [1], [1], [2], [0, 0, 0, 1, 1, 2], [0], [0]>} : vector<4x8x8xf32>, vector<4x8x8xf32>, vector<4x8x8xf32> -> vector<4x8x8xf32>
    "tpu.trace_stop"() : () -> ()
    %34 = vector.shape_cast %33 : vector<4x8x8xf32> to vector<8x32xf32>
    %c0_22 = arith.constant 0 : index
    %c0_23 = arith.constant 0 : index
    %35 = vector.load %arg9[%c0_22, %c0_23] : memref<32x16xf32, #tpu.memory_space<vmem>>, vector<32x16xf32>
    %cst_24 = arith.constant dense<0.000000e+00> : vector<8x16xf32>
    %36 = tpu.matmul %34, %35, %cst_24 {dimension_numbers = #tpu.dot_dimension_numbers<[1], [0], [0], [1], [0, 0, 1, 1], [], []>} : vector<8x32xf32>, vector<32x16xf32>, vector<8x16xf32> -> vector<8x16xf32>
    %c0_25 = arith.constant 0 : index
    %c0_26 = arith.constant 0 : index
    %37 = vector.load %arg10[%c0_25, %c0_26] : memref<1x16xf32, #tpu.memory_space<vmem>>, vector<1x16xf32>
    %38 = vector.broadcast %37 : vector<1x16xf32> to vector<8x16xf32>
    %39 = arith.addf %36, %38 : vector<8x16xf32>
    %40 = math.tanh %39 : vector<8x16xf32>
    %c0_27 = arith.constant 0 : index
    %c0_28 = arith.constant 0 : index
    %41 = vector.load %arg11[%c0_27, %c0_28] : memref<1x16xf32, #tpu.memory_space<vmem>>, vector<1x16xf32>
    %42 = vector.broadcast %41 : vector<1x16xf32> to vector<8x16xf32>
    %43 = arith.mulf %40, %42 : vector<8x16xf32>
    %cst_29 = arith.constant dense<0.000000e+00> : vector<8xf32>
    %44 = vector.multi_reduction <add>, %43, %cst_29 [1] : vector<8x16xf32> to vector<8xf32>
    %45 = vector.shape_cast %44 : vector<8xf32> to vector<8x1xf32>
    %c0_30 = arith.constant 0 : index
    %c0_31 = arith.constant 0 : index
    %46 = vector.load %arg12[%c0_30, %c0_31] : memref<1x1xf32, #tpu.memory_space<vmem>>, vector<1x1xf32>
    %47 = vector.broadcast %46 : vector<1x1xf32> to vector<8x1xf32>
    %48 = arith.addf %45, %47 : vector<8x1xf32>
    %49 = vector.shape_cast %48 : vector<8x1xf32> to vector<1x8x1xf32>
    %cst_32 = arith.constant dense<0xFF800000> : vector<1x1xf32>
    %50 = vector.multi_reduction <maximumf>, %49, %cst_32 [1] : vector<1x8x1xf32> to vector<1x1xf32>
    %51 = vector.shape_cast %50 : vector<1x1xf32> to vector<1x1x1xf32>
    %52 = vector.broadcast %51 : vector<1x1x1xf32> to vector<1x8x1xf32>
    %53 = arith.subf %49, %52 : vector<1x8x1xf32>
    %54 = math.exp %53 : vector<1x8x1xf32>
    %cst_33 = arith.constant dense<0.000000e+00> : vector<1x1xf32>
    %55 = vector.multi_reduction <add>, %54, %cst_33 [1] : vector<1x8x1xf32> to vector<1x1xf32>
    %56 = vector.shape_cast %55 : vector<1x1xf32> to vector<1x1x1xf32>
    %57 = tpu.reciprocal %56 {approx = true} : vector<1x1x1xf32> -> vector<1x1x1xf32>
    %58 = vector.broadcast %57 : vector<1x1x1xf32> to vector<1x8x1xf32>
    %59 = arith.mulf %54, %58 : vector<1x8x1xf32>
    %60 = vector.shape_cast %34 : vector<8x32xf32> to vector<1x8x32xf32>
    %61 = vector.broadcast %59 : vector<1x8x1xf32> to vector<1x8x32xf32>
    %62 = arith.mulf %61, %60 : vector<1x8x32xf32>
    %cst_34 = arith.constant dense<0.000000e+00> : vector<1x32xf32>
    %63 = vector.multi_reduction <add>, %62, %cst_34 [1] : vector<1x8x32xf32> to vector<1x32xf32>
    %64 = vector.shape_cast %63 : vector<1x32xf32> to vector<1x1x32xf32>
    %c0_35 = arith.constant 0 : index
    %c0_36 = arith.constant 0 : index
    %c0_37 = arith.constant 0 : index
    %65 = vector.load %arg13[%c0_35, %c0_36, %c0_37] : memref<1x1x32xf32, #tpu.memory_space<vmem>>, vector<1x1x32xf32>
    tpu.vector_store %arg13[%c0_35, %c0_36, %c0_37], %64 {strides = array<i32>} : memref<1x1x32xf32, #tpu.memory_space<vmem>>, vector<1x1x32xf32>,
    return
  }
  func.func @transform_0(%arg0: i32) -> (i32, i32, i32) {
    %c0_i32 = arith.constant 0 : i32
    %c0_i32_0 = arith.constant 0 : i32
    %c0_i32_1 = arith.constant 0 : i32
    return %arg0, %c0_i32, %c0_i32_0 : i32, i32, i32
  }
  func.func @transform_1(%arg0: i32) -> (i32, i32, i32) {
    %c0_i32 = arith.constant 0 : i32
    %c0_i32_0 = arith.constant 0 : i32
    %c0_i32_1 = arith.constant 0 : i32
    return %arg0, %c0_i32, %c0_i32_0 : i32, i32, i32
  }
  func.func @transform_2(%arg0: i32) -> (i32, i32) {
    %c0_i32 = arith.constant 0 : i32
    %c0_i32_0 = arith.constant 0 : i32
    %c0_i32_1 = arith.constant 0 : i32
    return %c0_i32, %c0_i32_0 : i32, i32
  }
  func.func @transform_3(%arg0: i32) -> (i32, i32) {
    %c0_i32 = arith.constant 0 : i32
    %c0_i32_0 = arith.constant 0 : i32
    %c0_i32_1 = arith.constant 0 : i32
    return %c0_i32, %c0_i32_0 : i32, i32
  }
  func.func @transform_4(%arg0: i32) -> (i32, i32) {
    %c0_i32 = arith.constant 0 : i32
    %c0_i32_0 = arith.constant 0 : i32
    %c0_i32_1 = arith.constant 0 : i32
    return %c0_i32, %c0_i32_0 : i32, i32
  }
  func.func @transform_5(%arg0: i32) -> (i32, i32) {
    %c0_i32 = arith.constant 0 : i32
    %c0_i32_0 = arith.constant 0 : i32
    %c0_i32_1 = arith.constant 0 : i32
    return %c0_i32, %c0_i32_0 : i32, i32
  }
  func.func @transform_6(%arg0: i32) -> (i32, i32) {
    %c0_i32 = arith.constant 0 : i32
    %c0_i32_0 = arith.constant 0 : i32
    %c0_i32_1 = arith.constant 0 : i32
    return %c0_i32, %c0_i32_0 : i32, i32
  }
  func.func @transform_7(%arg0: i32) -> (i32, i32) {
    %c0_i32 = arith.constant 0 : i32
    %c0_i32_0 = arith.constant 0 : i32
    %c0_i32_1 = arith.constant 0 : i32
    return %c0_i32, %c0_i32_0 : i32, i32
  }
  func.func @transform_8(%arg0: i32) -> (i32, i32) {
    %c0_i32 = arith.constant 0 : i32
    %c0_i32_0 = arith.constant 0 : i32
    %c0_i32_1 = arith.constant 0 : i32
    return %c0_i32, %c0_i32_0 : i32, i32
  }
  func.func @transform_9(%arg0: i32) -> (i32, i32) {
    %c0_i32 = arith.constant 0 : i32
    %c0_i32_0 = arith.constant 0 : i32
    %c0_i32_1 = arith.constant 0 : i32
    return %c0_i32, %c0_i32_0 : i32, i32
  }
  func.func @transform_10(%arg0: i32) -> (i32, i32) {
    %c0_i32 = arith.constant 0 : i32
    %c0_i32_0 = arith.constant 0 : i32
    %c0_i32_1 = arith.constant 0 : i32
    return %c0_i32, %c0_i32_0 : i32, i32
  }
  func.func @transform_11(%arg0: i32) -> (i32, i32) {
    %c0_i32 = arith.constant 0 : i32
    %c0_i32_0 = arith.constant 0 : i32
    %c0_i32_1 = arith.constant 0 : i32
    return %c0_i32, %c0_i32_0 : i32, i32
  }
  func.func @transform_12(%arg0: i32) -> (i32, i32, i32) {
    %c0_i32 = arith.constant 0 : i32
    %c0_i32_0 = arith.constant 0 : i32
    %c0_i32_1 = arith.constant 0 : i32
    return %arg0, %c0_i32, %c0_i32_0 : i32, i32, i32
  }
}

module attributes {stable_mosaic.version = 11 : i64} {
  func.func @_proj_kernel(%arg0: i32, %arg1: memref<128x32xf32, #tpu.memory_space<vmem>>, %arg2: memref<128x32xf32, #tpu.memory_space<vmem>>, %arg3: memref<32x128xf32, #tpu.memory_space<vmem>>, %arg4: memref<1x128xf32, #tpu.memory_space<vmem>>, %arg5: memref<32x32xf32, #tpu.memory_space<vmem>>, %arg6: memref<1x32xf32, #tpu.memory_space<vmem>>, %arg7: memref<128x32xf32, #tpu.memory_space<vmem>>, %arg8: memref<128x128xf32, #tpu.memory_space<vmem>>, %arg9: memref<128x32xf32, #tpu.memory_space<vmem>>) attributes {dimension_semantics = [#tpu.dimension_semantics<parallel>], iteration_bounds = array<i64: 1>, scalar_prefetch = 0 : i64, scratch_operands = 0 : i64, tpu.core_type = #tpu.core_type<tc>, window_params = [{transform_indices = @transform_0, window_bounds = array<i64: 128, 32>}, {pipeline_mode = #tpu.pipeline_mode<synchronous>, transform_indices = @transform_1, window_bounds = array<i64: 128, 32>}, {pipeline_mode = #tpu.pipeline_mode<synchronous>, transform_indices = @transform_2, window_bounds = array<i64: 32, 128>}, {pipeline_mode = #tpu.pipeline_mode<synchronous>, transform_indices = @transform_3, window_bounds = array<i64: 1, 128>}, {pipeline_mode = #tpu.pipeline_mode<synchronous>, transform_indices = @transform_4, window_bounds = array<i64: 32, 32>}, {pipeline_mode = #tpu.pipeline_mode<synchronous>, transform_indices = @transform_5, window_bounds = array<i64: 1, 32>}, {transform_indices = @transform_6, window_bounds = array<i64: 128, 32>}, {transform_indices = @transform_7, window_bounds = array<i64: 128, 128>}, {transform_indices = @transform_8, window_bounds = array<i64: 128, 32>}]} {
    %c0 = arith.constant 0 : index
    %c0_0 = arith.constant 0 : index
    %0 = vector.load %arg1[%c0, %c0_0] : memref<128x32xf32, #tpu.memory_space<vmem>>, vector<128x32xf32>
    %c0_1 = arith.constant 0 : index
    %c0_2 = arith.constant 0 : index
    %1 = vector.load %arg2[%c0_1, %c0_2] : memref<128x32xf32, #tpu.memory_space<vmem>>, vector<128x32xf32>
    %2 = arith.addf %0, %1 : vector<128x32xf32>
    %c0_3 = arith.constant 0 : index
    %c0_4 = arith.constant 0 : index
    %3 = vector.load %arg7[%c0_3, %c0_4] : memref<128x32xf32, #tpu.memory_space<vmem>>, vector<128x32xf32>
    tpu.vector_store %arg7[%c0_3, %c0_4], %2 {strides = array<i32>} : memref<128x32xf32, #tpu.memory_space<vmem>>, vector<128x32xf32>,
    %c0_5 = arith.constant 0 : index
    %c0_6 = arith.constant 0 : index
    %4 = vector.load %arg3[%c0_5, %c0_6] : memref<32x128xf32, #tpu.memory_space<vmem>>, vector<32x128xf32>
    %cst = arith.constant dense<0.000000e+00> : vector<128x128xf32>
    %5 = tpu.matmul %2, %4, %cst {dimension_numbers = #tpu.dot_dimension_numbers<[1], [0], [0], [1], [0, 0, 1, 1], [], []>} : vector<128x32xf32>, vector<32x128xf32>, vector<128x128xf32> -> vector<128x128xf32>
    %c0_7 = arith.constant 0 : index
    %c0_8 = arith.constant 0 : index
    %6 = vector.load %arg4[%c0_7, %c0_8] : memref<1x128xf32, #tpu.memory_space<vmem>>, vector<1x128xf32>
    %7 = vector.broadcast %6 : vector<1x128xf32> to vector<128x128xf32>
    %8 = arith.addf %5, %7 : vector<128x128xf32>
    %c0_9 = arith.constant 0 : index
    %c0_10 = arith.constant 0 : index
    %9 = vector.load %arg8[%c0_9, %c0_10] : memref<128x128xf32, #tpu.memory_space<vmem>>, vector<128x128xf32>
    tpu.vector_store %arg8[%c0_9, %c0_10], %8 {strides = array<i32>} : memref<128x128xf32, #tpu.memory_space<vmem>>, vector<128x128xf32>,
    %c0_11 = arith.constant 0 : index
    %c0_12 = arith.constant 0 : index
    %10 = vector.load %arg5[%c0_11, %c0_12] : memref<32x32xf32, #tpu.memory_space<vmem>>, vector<32x32xf32>
    %cst_13 = arith.constant dense<0.000000e+00> : vector<128x32xf32>
    %11 = tpu.matmul %2, %10, %cst_13 {dimension_numbers = #tpu.dot_dimension_numbers<[1], [0], [0], [1], [0, 0, 1, 1], [], []>} : vector<128x32xf32>, vector<32x32xf32>, vector<128x32xf32> -> vector<128x32xf32>
    %c0_14 = arith.constant 0 : index
    %c0_15 = arith.constant 0 : index
    %12 = vector.load %arg6[%c0_14, %c0_15] : memref<1x32xf32, #tpu.memory_space<vmem>>, vector<1x32xf32>
    %13 = vector.broadcast %12 : vector<1x32xf32> to vector<128x32xf32>
    %14 = arith.addf %11, %13 : vector<128x32xf32>
    %c0_16 = arith.constant 0 : index
    %c0_17 = arith.constant 0 : index
    %15 = vector.load %arg9[%c0_16, %c0_17] : memref<128x32xf32, #tpu.memory_space<vmem>>, vector<128x32xf32>
    tpu.vector_store %arg9[%c0_16, %c0_17], %14 {strides = array<i32>} : memref<128x32xf32, #tpu.memory_space<vmem>>, vector<128x32xf32>,
    return
  }
  func.func @transform_0(%arg0: i32) -> (i32, i32) {
    %c0_i32 = arith.constant 0 : i32
    %c0_i32_0 = arith.constant 0 : i32
    return %arg0, %c0_i32 : i32, i32
  }
  func.func @transform_1(%arg0: i32) -> (i32, i32) {
    %c0_i32 = arith.constant 0 : i32
    %c0_i32_0 = arith.constant 0 : i32
    %c0_i32_1 = arith.constant 0 : i32
    return %c0_i32, %c0_i32_0 : i32, i32
  }
  func.func @transform_2(%arg0: i32) -> (i32, i32) {
    %c0_i32 = arith.constant 0 : i32
    %c0_i32_0 = arith.constant 0 : i32
    %c0_i32_1 = arith.constant 0 : i32
    return %c0_i32, %c0_i32_0 : i32, i32
  }
  func.func @transform_3(%arg0: i32) -> (i32, i32) {
    %c0_i32 = arith.constant 0 : i32
    %c0_i32_0 = arith.constant 0 : i32
    %c0_i32_1 = arith.constant 0 : i32
    return %c0_i32, %c0_i32_0 : i32, i32
  }
  func.func @transform_4(%arg0: i32) -> (i32, i32) {
    %c0_i32 = arith.constant 0 : i32
    %c0_i32_0 = arith.constant 0 : i32
    %c0_i32_1 = arith.constant 0 : i32
    return %c0_i32, %c0_i32_0 : i32, i32
  }
  func.func @transform_5(%arg0: i32) -> (i32, i32) {
    %c0_i32 = arith.constant 0 : i32
    %c0_i32_0 = arith.constant 0 : i32
    %c0_i32_1 = arith.constant 0 : i32
    return %c0_i32, %c0_i32_0 : i32, i32
  }
  func.func @transform_6(%arg0: i32) -> (i32, i32) {
    %c0_i32 = arith.constant 0 : i32
    %c0_i32_0 = arith.constant 0 : i32
    return %arg0, %c0_i32 : i32, i32
  }
  func.func @transform_7(%arg0: i32) -> (i32, i32) {
    %c0_i32 = arith.constant 0 : i32
    %c0_i32_0 = arith.constant 0 : i32
    return %arg0, %c0_i32 : i32, i32
  }
  func.func @transform_8(%arg0: i32) -> (i32, i32) {
    %c0_i32 = arith.constant 0 : i32
    %c0_i32_0 = arith.constant 0 : i32
    return %arg0, %c0_i32 : i32, i32
  }
}

module attributes {stable_mosaic.version = 11 : i64} {
  func.func @_attn_kernel(%arg0: i32, %arg1: memref<1x4x8x32xf32, #tpu.memory_space<vmem>>, %arg2: memref<1x32x8xf32, #tpu.memory_space<vmem>>, %arg3: memref<1x4x8x8xf32, #tpu.memory_space<vmem>>, %arg4: memref<1x4x8x8xf32, #tpu.memory_space<vmem>>) attributes {dimension_semantics = [#tpu.dimension_semantics<parallel>], iteration_bounds = array<i64: 16>, scalar_prefetch = 0 : i64, scratch_operands = 0 : i64, tpu.core_type = #tpu.core_type<tc>, window_params = [{transform_indices = @transform_0, window_bounds = array<i64: 1, 4, 8, 32>}, {transform_indices = @transform_1, window_bounds = array<i64: 1, 32, 8>}, {transform_indices = @transform_2, window_bounds = array<i64: 1, 4, 8, 8>}, {transform_indices = @transform_3, window_bounds = array<i64: 1, 4, 8, 8>}]} {
    %c0 = arith.constant 0 : index
    %c0_0 = arith.constant 0 : index
    %c0_1 = arith.constant 0 : index
    %c0_2 = arith.constant 0 : index
    %0 = vector.load %arg1[%c0, %c0_0, %c0_1, %c0_2] : memref<1x4x8x32xf32, #tpu.memory_space<vmem>>, vector<1x4x8x32xf32>
    %1 = vector.shape_cast %0 : vector<1x4x8x32xf32> to vector<4x8x32xf32>
    %c0_3 = arith.constant 0 : index
    %c0_4 = arith.constant 0 : index
    %c0_5 = arith.constant 0 : index
    %c0_6 = arith.constant 0 : index
    %2 = vector.load %arg3[%c0_3, %c0_4, %c0_5, %c0_6] : memref<1x4x8x8xf32, #tpu.memory_space<vmem>>, vector<1x4x8x8xf32>
    %3 = vector.shape_cast %2 : vector<1x4x8x8xf32> to vector<4x8x8xf32>
    %c0_7 = arith.constant 0 : index
    %c0_8 = arith.constant 0 : index
    %c0_9 = arith.constant 0 : index
    %4 = vector.load %arg2[%c0_7, %c0_8, %c0_9] : memref<1x32x8xf32, #tpu.memory_space<vmem>>, vector<1x32x8xf32>
    %5 = vector.shape_cast %4 : vector<1x32x8xf32> to vector<1x32x8xf32>
    %6 = vector.broadcast %5 : vector<1x32x8xf32> to vector<4x32x8xf32>
    "tpu.trace_start"() <{level = 10 : i32, message = "hld,hdm->hlm"}> : () -> ()
    %cst = arith.constant dense<0.000000e+00> : vector<4x8x8xf32>
    %7 = tpu.matmul %1, %6, %cst {dimension_numbers = #tpu.dot_dimension_numbers<[2], [1], [1], [2], [0, 0, 0, 1, 1, 2], [0], [0]>} : vector<4x8x32xf32>, vector<4x32x8xf32>, vector<4x8x8xf32> -> vector<4x8x8xf32>
    "tpu.trace_stop"() : () -> ()
    %cst_10 = arith.constant dense<0xFF800000> : vector<4x8xf32>
    %8 = vector.multi_reduction <maximumf>, %7, %cst_10 [1] : vector<4x8x8xf32> to vector<4x8xf32>
    %9 = vector.shape_cast %8 : vector<4x8xf32> to vector<4x1x8xf32>
    %10 = vector.broadcast %9 : vector<4x1x8xf32> to vector<4x8x8xf32>
    %11 = arith.subf %7, %10 : vector<4x8x8xf32>
    %12 = math.exp %11 : vector<4x8x8xf32>
    %cst_11 = arith.constant dense<0.000000e+00> : vector<4x8xf32>
    %13 = vector.multi_reduction <add>, %12, %cst_11 [1] : vector<4x8x8xf32> to vector<4x8xf32>
    %14 = vector.shape_cast %13 : vector<4x8xf32> to vector<4x1x8xf32>
    %15 = tpu.reciprocal %14 {approx = true} : vector<4x1x8xf32> -> vector<4x1x8xf32>
    %16 = vector.broadcast %15 : vector<4x1x8xf32> to vector<4x8x8xf32>
    %17 = arith.mulf %12, %16 : vector<4x8x8xf32>
    "tpu.trace_start"() <{level = 10 : i32, message = "hlm,hmd->hld"}> : () -> ()
    %cst_12 = arith.constant dense<0.000000e+00> : vector<4x8x8xf32>
    %18 = tpu.matmul %17, %3, %cst_12 {dimension_numbers = #tpu.dot_dimension_numbers<[2], [1], [1], [2], [0, 0, 0, 1, 1, 2], [0], [0]>} : vector<4x8x8xf32>, vector<4x8x8xf32>, vector<4x8x8xf32> -> vector<4x8x8xf32>
    "tpu.trace_stop"() : () -> ()
    %c0_13 = arith.constant 0 : index
    %c0_14 = arith.constant 0 : index
    %c0_15 = arith.constant 0 : index
    %c0_16 = arith.constant 0 : index
    %19 = vector.load %arg4[%c0_13, %c0_14, %c0_15, %c0_16] : memref<1x4x8x8xf32, #tpu.memory_space<vmem>>, vector<1x4x8x8xf32>
    %20 = vector.shape_cast %19 : vector<1x4x8x8xf32> to vector<4x8x8xf32>
    %21 = vector.shape_cast %18 : vector<4x8x8xf32> to vector<1x4x8x8xf32>
    tpu.vector_store %arg4[%c0_13, %c0_14, %c0_15, %c0_16], %21 {strides = array<i32>} : memref<1x4x8x8xf32, #tpu.memory_space<vmem>>, vector<1x4x8x8xf32>,
    return
  }
  func.func @transform_0(%arg0: i32) -> (i32, i32, i32, i32) {
    %c0_i32 = arith.constant 0 : i32
    %c0_i32_0 = arith.constant 0 : i32
    %c0_i32_1 = arith.constant 0 : i32
    %c0_i32_2 = arith.constant 0 : i32
    return %arg0, %c0_i32, %c0_i32_0, %c0_i32_1 : i32, i32, i32, i32
  }
  func.func @transform_1(%arg0: i32) -> (i32, i32, i32) {
    %c0_i32 = arith.constant 0 : i32
    %c0_i32_0 = arith.constant 0 : i32
    %c0_i32_1 = arith.constant 0 : i32
    return %arg0, %c0_i32, %c0_i32_0 : i32, i32, i32
  }
  func.func @transform_2(%arg0: i32) -> (i32, i32, i32, i32) {
    %c0_i32 = arith.constant 0 : i32
    %c0_i32_0 = arith.constant 0 : i32
    %c0_i32_1 = arith.constant 0 : i32
    %c0_i32_2 = arith.constant 0 : i32
    return %arg0, %c0_i32, %c0_i32_0, %c0_i32_1 : i32, i32, i32, i32
  }
  func.func @transform_3(%arg0: i32) -> (i32, i32, i32, i32) {
    %c0_i32 = arith.constant 0 : i32
    %c0_i32_0 = arith.constant 0 : i32
    %c0_i32_1 = arith.constant 0 : i32
    %c0_i32_2 = arith.constant 0 : i32
    return %arg0, %c0_i32, %c0_i32_0, %c0_i32_1 : i32, i32, i32, i32
  }
}

module attributes {stable_mosaic.version = 11 : i64} {
  func.func @_pool_kernel(%arg0: i32, %arg1: memref<1x8x32xf32, #tpu.memory_space<vmem>>, %arg2: memref<32x16xf32, #tpu.memory_space<vmem>>, %arg3: memref<1x16xf32, #tpu.memory_space<vmem>>, %arg4: memref<16x1xf32, #tpu.memory_space<vmem>>, %arg5: memref<1x1xf32, #tpu.memory_space<vmem>>, %arg6: memref<1x1x32xf32, #tpu.memory_space<vmem>>) attributes {dimension_semantics = [#tpu.dimension_semantics<parallel>], iteration_bounds = array<i64: 16>, scalar_prefetch = 0 : i64, scratch_operands = 0 : i64, tpu.core_type = #tpu.core_type<tc>, window_params = [{transform_indices = @transform_0, window_bounds = array<i64: 1, 8, 32>}, {pipeline_mode = #tpu.pipeline_mode<synchronous>, transform_indices = @transform_1, window_bounds = array<i64: 32, 16>}, {pipeline_mode = #tpu.pipeline_mode<synchronous>, transform_indices = @transform_2, window_bounds = array<i64: 1, 16>}, {pipeline_mode = #tpu.pipeline_mode<synchronous>, transform_indices = @transform_3, window_bounds = array<i64: 16, 1>}, {pipeline_mode = #tpu.pipeline_mode<synchronous>, transform_indices = @transform_4, window_bounds = array<i64: 1, 1>}, {transform_indices = @transform_5, window_bounds = array<i64: 1, 1, 32>}]} {
    %c0 = arith.constant 0 : index
    %c0_0 = arith.constant 0 : index
    %c0_1 = arith.constant 0 : index
    %0 = vector.load %arg1[%c0, %c0_0, %c0_1] : memref<1x8x32xf32, #tpu.memory_space<vmem>>, vector<1x8x32xf32>
    %1 = vector.shape_cast %0 : vector<1x8x32xf32> to vector<8x32xf32>
    %c0_2 = arith.constant 0 : index
    %c0_3 = arith.constant 0 : index
    %2 = vector.load %arg2[%c0_2, %c0_3] : memref<32x16xf32, #tpu.memory_space<vmem>>, vector<32x16xf32>
    %cst = arith.constant dense<0.000000e+00> : vector<8x16xf32>
    %3 = tpu.matmul %1, %2, %cst {dimension_numbers = #tpu.dot_dimension_numbers<[1], [0], [0], [1], [0, 0, 1, 1], [], []>} : vector<8x32xf32>, vector<32x16xf32>, vector<8x16xf32> -> vector<8x16xf32>
    %c0_4 = arith.constant 0 : index
    %c0_5 = arith.constant 0 : index
    %4 = vector.load %arg3[%c0_4, %c0_5] : memref<1x16xf32, #tpu.memory_space<vmem>>, vector<1x16xf32>
    %5 = vector.broadcast %4 : vector<1x16xf32> to vector<8x16xf32>
    %6 = arith.addf %3, %5 : vector<8x16xf32>
    %7 = math.tanh %6 : vector<8x16xf32>
    %c0_6 = arith.constant 0 : index
    %c0_7 = arith.constant 0 : index
    %8 = vector.load %arg4[%c0_6, %c0_7] : memref<16x1xf32, #tpu.memory_space<vmem>>, vector<16x1xf32>
    %cst_8 = arith.constant dense<0.000000e+00> : vector<8x1xf32>
    %9 = tpu.matmul %7, %8, %cst_8 {dimension_numbers = #tpu.dot_dimension_numbers<[1], [0], [0], [1], [0, 0, 1, 1], [], []>} : vector<8x16xf32>, vector<16x1xf32>, vector<8x1xf32> -> vector<8x1xf32>
    %c0_9 = arith.constant 0 : index
    %c0_10 = arith.constant 0 : index
    %10 = vector.load %arg5[%c0_9, %c0_10] : memref<1x1xf32, #tpu.memory_space<vmem>>, vector<1x1xf32>
    %11 = vector.broadcast %10 : vector<1x1xf32> to vector<8x1xf32>
    %12 = arith.addf %9, %11 : vector<8x1xf32>
    %cst_11 = arith.constant dense<0xFF800000> : vector<1xf32>
    %13 = vector.multi_reduction <maximumf>, %12, %cst_11 [0] : vector<8x1xf32> to vector<1xf32>
    %14 = vector.shape_cast %13 : vector<1xf32> to vector<1x1xf32>
    %15 = vector.broadcast %14 : vector<1x1xf32> to vector<8x1xf32>
    %16 = arith.subf %12, %15 : vector<8x1xf32>
    %17 = math.exp %16 : vector<8x1xf32>
    %cst_12 = arith.constant dense<0.000000e+00> : vector<1xf32>
    %18 = vector.multi_reduction <add>, %17, %cst_12 [0] : vector<8x1xf32> to vector<1xf32>
    %19 = vector.shape_cast %18 : vector<1xf32> to vector<1x1xf32>
    %20 = tpu.reciprocal %19 {approx = true} : vector<1x1xf32> -> vector<1x1xf32>
    %21 = vector.broadcast %20 : vector<1x1xf32> to vector<8x1xf32>
    %22 = arith.mulf %17, %21 : vector<8x1xf32>
    %23 = vector.broadcast %22 : vector<8x1xf32> to vector<8x32xf32>
    %24 = arith.mulf %23, %1 : vector<8x32xf32>
    %cst_13 = arith.constant dense<0.000000e+00> : vector<32xf32>
    %25 = vector.multi_reduction <add>, %24, %cst_13 [0] : vector<8x32xf32> to vector<32xf32>
    %26 = vector.shape_cast %25 : vector<32xf32> to vector<1x32xf32>
    %c0_14 = arith.constant 0 : index
    %c0_15 = arith.constant 0 : index
    %c0_16 = arith.constant 0 : index
    %27 = vector.load %arg6[%c0_14, %c0_15, %c0_16] : memref<1x1x32xf32, #tpu.memory_space<vmem>>, vector<1x1x32xf32>
    %28 = vector.shape_cast %27 : vector<1x1x32xf32> to vector<1x32xf32>
    %29 = vector.shape_cast %26 : vector<1x32xf32> to vector<1x1x32xf32>
    tpu.vector_store %arg6[%c0_14, %c0_15, %c0_16], %29 {strides = array<i32>} : memref<1x1x32xf32, #tpu.memory_space<vmem>>, vector<1x1x32xf32>,
    return
  }
  func.func @transform_0(%arg0: i32) -> (i32, i32, i32) {
    %c0_i32 = arith.constant 0 : i32
    %c0_i32_0 = arith.constant 0 : i32
    %c0_i32_1 = arith.constant 0 : i32
    return %arg0, %c0_i32, %c0_i32_0 : i32, i32, i32
  }
  func.func @transform_1(%arg0: i32) -> (i32, i32) {
    %c0_i32 = arith.constant 0 : i32
    %c0_i32_0 = arith.constant 0 : i32
    %c0_i32_1 = arith.constant 0 : i32
    return %c0_i32, %c0_i32_0 : i32, i32
  }
  func.func @transform_2(%arg0: i32) -> (i32, i32) {
    %c0_i32 = arith.constant 0 : i32
    %c0_i32_0 = arith.constant 0 : i32
    %c0_i32_1 = arith.constant 0 : i32
    return %c0_i32, %c0_i32_0 : i32, i32
  }
  func.func @transform_3(%arg0: i32) -> (i32, i32) {
    %c0_i32 = arith.constant 0 : i32
    %c0_i32_0 = arith.constant 0 : i32
    %c0_i32_1 = arith.constant 0 : i32
    return %c0_i32, %c0_i32_0 : i32, i32
  }
  func.func @transform_4(%arg0: i32) -> (i32, i32) {
    %c0_i32 = arith.constant 0 : i32
    %c0_i32_0 = arith.constant 0 : i32
    %c0_i32_1 = arith.constant 0 : i32
    return %c0_i32, %c0_i32_0 : i32, i32
  }
  func.func @transform_5(%arg0: i32) -> (i32, i32, i32) {
    %c0_i32 = arith.constant 0 : i32
    %c0_i32_0 = arith.constant 0 : i32
    %c0_i32_1 = arith.constant 0 : i32
    return %arg0, %c0_i32, %c0_i32_0 : i32, i32, i32
  }
}

module attributes {stable_mosaic.version = 11 : i64} {
  func.func @_proj_kernel(%arg0: i32, %arg1: memref<16x32xf32, #tpu.memory_space<vmem>>, %arg2: memref<16x32xf32, #tpu.memory_space<vmem>>, %arg3: memref<32x128xf32, #tpu.memory_space<vmem>>, %arg4: memref<1x128xf32, #tpu.memory_space<vmem>>, %arg5: memref<32x32xf32, #tpu.memory_space<vmem>>, %arg6: memref<1x32xf32, #tpu.memory_space<vmem>>, %arg7: memref<16x32xf32, #tpu.memory_space<vmem>>, %arg8: memref<16x128xf32, #tpu.memory_space<vmem>>, %arg9: memref<16x32xf32, #tpu.memory_space<vmem>>) attributes {dimension_semantics = [#tpu.dimension_semantics<parallel>], iteration_bounds = array<i64: 1>, scalar_prefetch = 0 : i64, scratch_operands = 0 : i64, tpu.core_type = #tpu.core_type<tc>, window_params = [{transform_indices = @transform_0, window_bounds = array<i64: 16, 32>}, {pipeline_mode = #tpu.pipeline_mode<synchronous>, transform_indices = @transform_1, window_bounds = array<i64: 16, 32>}, {pipeline_mode = #tpu.pipeline_mode<synchronous>, transform_indices = @transform_2, window_bounds = array<i64: 32, 128>}, {pipeline_mode = #tpu.pipeline_mode<synchronous>, transform_indices = @transform_3, window_bounds = array<i64: 1, 128>}, {pipeline_mode = #tpu.pipeline_mode<synchronous>, transform_indices = @transform_4, window_bounds = array<i64: 32, 32>}, {pipeline_mode = #tpu.pipeline_mode<synchronous>, transform_indices = @transform_5, window_bounds = array<i64: 1, 32>}, {transform_indices = @transform_6, window_bounds = array<i64: 16, 32>}, {transform_indices = @transform_7, window_bounds = array<i64: 16, 128>}, {transform_indices = @transform_8, window_bounds = array<i64: 16, 32>}]} {
    %c0 = arith.constant 0 : index
    %c0_0 = arith.constant 0 : index
    %0 = vector.load %arg1[%c0, %c0_0] : memref<16x32xf32, #tpu.memory_space<vmem>>, vector<16x32xf32>
    %c0_1 = arith.constant 0 : index
    %c0_2 = arith.constant 0 : index
    %1 = vector.load %arg2[%c0_1, %c0_2] : memref<16x32xf32, #tpu.memory_space<vmem>>, vector<16x32xf32>
    %2 = arith.addf %0, %1 : vector<16x32xf32>
    %c0_3 = arith.constant 0 : index
    %c0_4 = arith.constant 0 : index
    %3 = vector.load %arg7[%c0_3, %c0_4] : memref<16x32xf32, #tpu.memory_space<vmem>>, vector<16x32xf32>
    tpu.vector_store %arg7[%c0_3, %c0_4], %2 {strides = array<i32>} : memref<16x32xf32, #tpu.memory_space<vmem>>, vector<16x32xf32>,
    %c0_5 = arith.constant 0 : index
    %c0_6 = arith.constant 0 : index
    %4 = vector.load %arg3[%c0_5, %c0_6] : memref<32x128xf32, #tpu.memory_space<vmem>>, vector<32x128xf32>
    %cst = arith.constant dense<0.000000e+00> : vector<16x128xf32>
    %5 = tpu.matmul %2, %4, %cst {dimension_numbers = #tpu.dot_dimension_numbers<[1], [0], [0], [1], [0, 0, 1, 1], [], []>} : vector<16x32xf32>, vector<32x128xf32>, vector<16x128xf32> -> vector<16x128xf32>
    %c0_7 = arith.constant 0 : index
    %c0_8 = arith.constant 0 : index
    %6 = vector.load %arg4[%c0_7, %c0_8] : memref<1x128xf32, #tpu.memory_space<vmem>>, vector<1x128xf32>
    %7 = vector.broadcast %6 : vector<1x128xf32> to vector<16x128xf32>
    %8 = arith.addf %5, %7 : vector<16x128xf32>
    %c0_9 = arith.constant 0 : index
    %c0_10 = arith.constant 0 : index
    %9 = vector.load %arg8[%c0_9, %c0_10] : memref<16x128xf32, #tpu.memory_space<vmem>>, vector<16x128xf32>
    tpu.vector_store %arg8[%c0_9, %c0_10], %8 {strides = array<i32>} : memref<16x128xf32, #tpu.memory_space<vmem>>, vector<16x128xf32>,
    %c0_11 = arith.constant 0 : index
    %c0_12 = arith.constant 0 : index
    %10 = vector.load %arg5[%c0_11, %c0_12] : memref<32x32xf32, #tpu.memory_space<vmem>>, vector<32x32xf32>
    %cst_13 = arith.constant dense<0.000000e+00> : vector<16x32xf32>
    %11 = tpu.matmul %2, %10, %cst_13 {dimension_numbers = #tpu.dot_dimension_numbers<[1], [0], [0], [1], [0, 0, 1, 1], [], []>} : vector<16x32xf32>, vector<32x32xf32>, vector<16x32xf32> -> vector<16x32xf32>
    %c0_14 = arith.constant 0 : index
    %c0_15 = arith.constant 0 : index
    %12 = vector.load %arg6[%c0_14, %c0_15] : memref<1x32xf32, #tpu.memory_space<vmem>>, vector<1x32xf32>
    %13 = vector.broadcast %12 : vector<1x32xf32> to vector<16x32xf32>
    %14 = arith.addf %11, %13 : vector<16x32xf32>
    %c0_16 = arith.constant 0 : index
    %c0_17 = arith.constant 0 : index
    %15 = vector.load %arg9[%c0_16, %c0_17] : memref<16x32xf32, #tpu.memory_space<vmem>>, vector<16x32xf32>
    tpu.vector_store %arg9[%c0_16, %c0_17], %14 {strides = array<i32>} : memref<16x32xf32, #tpu.memory_space<vmem>>, vector<16x32xf32>,
    return
  }
  func.func @transform_0(%arg0: i32) -> (i32, i32) {
    %c0_i32 = arith.constant 0 : i32
    %c0_i32_0 = arith.constant 0 : i32
    return %arg0, %c0_i32 : i32, i32
  }
  func.func @transform_1(%arg0: i32) -> (i32, i32) {
    %c0_i32 = arith.constant 0 : i32
    %c0_i32_0 = arith.constant 0 : i32
    %c0_i32_1 = arith.constant 0 : i32
    return %c0_i32, %c0_i32_0 : i32, i32
  }
  func.func @transform_2(%arg0: i32) -> (i32, i32) {
    %c0_i32 = arith.constant 0 : i32
    %c0_i32_0 = arith.constant 0 : i32
    %c0_i32_1 = arith.constant 0 : i32
    return %c0_i32, %c0_i32_0 : i32, i32
  }
  func.func @transform_3(%arg0: i32) -> (i32, i32) {
    %c0_i32 = arith.constant 0 : i32
    %c0_i32_0 = arith.constant 0 : i32
    %c0_i32_1 = arith.constant 0 : i32
    return %c0_i32, %c0_i32_0 : i32, i32
  }
  func.func @transform_4(%arg0: i32) -> (i32, i32) {
    %c0_i32 = arith.constant 0 : i32
    %c0_i32_0 = arith.constant 0 : i32
    %c0_i32_1 = arith.constant 0 : i32
    return %c0_i32, %c0_i32_0 : i32, i32
  }
  func.func @transform_5(%arg0: i32) -> (i32, i32) {
    %c0_i32 = arith.constant 0 : i32
    %c0_i32_0 = arith.constant 0 : i32
    %c0_i32_1 = arith.constant 0 : i32
    return %c0_i32, %c0_i32_0 : i32, i32
  }
  func.func @transform_6(%arg0: i32) -> (i32, i32) {
    %c0_i32 = arith.constant 0 : i32
    %c0_i32_0 = arith.constant 0 : i32
    return %arg0, %c0_i32 : i32, i32
  }
  func.func @transform_7(%arg0: i32) -> (i32, i32) {
    %c0_i32 = arith.constant 0 : i32
    %c0_i32_0 = arith.constant 0 : i32
    return %arg0, %c0_i32 : i32, i32
  }
  func.func @transform_8(%arg0: i32) -> (i32, i32) {
    %c0_i32 = arith.constant 0 : i32
    %c0_i32_0 = arith.constant 0 : i32
    return %arg0, %c0_i32 : i32, i32
  }
}

module attributes {stable_mosaic.version = 11 : i64} {
  func.func @_attn_kernel(%arg0: i32, %arg1: memref<1x4x8x32xf32, #tpu.memory_space<vmem>>, %arg2: memref<1x32x8xf32, #tpu.memory_space<vmem>>, %arg3: memref<1x4x8x8xf32, #tpu.memory_space<vmem>>, %arg4: memref<1x4x8x8xf32, #tpu.memory_space<vmem>>) attributes {dimension_semantics = [#tpu.dimension_semantics<parallel>], iteration_bounds = array<i64: 2>, scalar_prefetch = 0 : i64, scratch_operands = 0 : i64, tpu.core_type = #tpu.core_type<tc>, window_params = [{transform_indices = @transform_0, window_bounds = array<i64: 1, 4, 8, 32>}, {transform_indices = @transform_1, window_bounds = array<i64: 1, 32, 8>}, {transform_indices = @transform_2, window_bounds = array<i64: 1, 4, 8, 8>}, {transform_indices = @transform_3, window_bounds = array<i64: 1, 4, 8, 8>}]} {
    %c0 = arith.constant 0 : index
    %c0_0 = arith.constant 0 : index
    %c0_1 = arith.constant 0 : index
    %c0_2 = arith.constant 0 : index
    %0 = vector.load %arg1[%c0, %c0_0, %c0_1, %c0_2] : memref<1x4x8x32xf32, #tpu.memory_space<vmem>>, vector<1x4x8x32xf32>
    %1 = vector.shape_cast %0 : vector<1x4x8x32xf32> to vector<4x8x32xf32>
    %c0_3 = arith.constant 0 : index
    %c0_4 = arith.constant 0 : index
    %c0_5 = arith.constant 0 : index
    %c0_6 = arith.constant 0 : index
    %2 = vector.load %arg3[%c0_3, %c0_4, %c0_5, %c0_6] : memref<1x4x8x8xf32, #tpu.memory_space<vmem>>, vector<1x4x8x8xf32>
    %3 = vector.shape_cast %2 : vector<1x4x8x8xf32> to vector<4x8x8xf32>
    %c0_7 = arith.constant 0 : index
    %c0_8 = arith.constant 0 : index
    %c0_9 = arith.constant 0 : index
    %4 = vector.load %arg2[%c0_7, %c0_8, %c0_9] : memref<1x32x8xf32, #tpu.memory_space<vmem>>, vector<1x32x8xf32>
    %5 = vector.shape_cast %4 : vector<1x32x8xf32> to vector<1x32x8xf32>
    %6 = vector.broadcast %5 : vector<1x32x8xf32> to vector<4x32x8xf32>
    "tpu.trace_start"() <{level = 10 : i32, message = "hld,hdm->hlm"}> : () -> ()
    %cst = arith.constant dense<0.000000e+00> : vector<4x8x8xf32>
    %7 = tpu.matmul %1, %6, %cst {dimension_numbers = #tpu.dot_dimension_numbers<[2], [1], [1], [2], [0, 0, 0, 1, 1, 2], [0], [0]>} : vector<4x8x32xf32>, vector<4x32x8xf32>, vector<4x8x8xf32> -> vector<4x8x8xf32>
    "tpu.trace_stop"() : () -> ()
    %cst_10 = arith.constant dense<0xFF800000> : vector<4x8xf32>
    %8 = vector.multi_reduction <maximumf>, %7, %cst_10 [1] : vector<4x8x8xf32> to vector<4x8xf32>
    %9 = vector.shape_cast %8 : vector<4x8xf32> to vector<4x1x8xf32>
    %10 = vector.broadcast %9 : vector<4x1x8xf32> to vector<4x8x8xf32>
    %11 = arith.subf %7, %10 : vector<4x8x8xf32>
    %12 = math.exp %11 : vector<4x8x8xf32>
    %cst_11 = arith.constant dense<0.000000e+00> : vector<4x8xf32>
    %13 = vector.multi_reduction <add>, %12, %cst_11 [1] : vector<4x8x8xf32> to vector<4x8xf32>
    %14 = vector.shape_cast %13 : vector<4x8xf32> to vector<4x1x8xf32>
    %15 = tpu.reciprocal %14 {approx = true} : vector<4x1x8xf32> -> vector<4x1x8xf32>
    %16 = vector.broadcast %15 : vector<4x1x8xf32> to vector<4x8x8xf32>
    %17 = arith.mulf %12, %16 : vector<4x8x8xf32>
    "tpu.trace_start"() <{level = 10 : i32, message = "hlm,hmd->hld"}> : () -> ()
    %cst_12 = arith.constant dense<0.000000e+00> : vector<4x8x8xf32>
    %18 = tpu.matmul %17, %3, %cst_12 {dimension_numbers = #tpu.dot_dimension_numbers<[2], [1], [1], [2], [0, 0, 0, 1, 1, 2], [0], [0]>} : vector<4x8x8xf32>, vector<4x8x8xf32>, vector<4x8x8xf32> -> vector<4x8x8xf32>
    "tpu.trace_stop"() : () -> ()
    %c0_13 = arith.constant 0 : index
    %c0_14 = arith.constant 0 : index
    %c0_15 = arith.constant 0 : index
    %c0_16 = arith.constant 0 : index
    %19 = vector.load %arg4[%c0_13, %c0_14, %c0_15, %c0_16] : memref<1x4x8x8xf32, #tpu.memory_space<vmem>>, vector<1x4x8x8xf32>
    %20 = vector.shape_cast %19 : vector<1x4x8x8xf32> to vector<4x8x8xf32>
    %21 = vector.shape_cast %18 : vector<4x8x8xf32> to vector<1x4x8x8xf32>
    tpu.vector_store %arg4[%c0_13, %c0_14, %c0_15, %c0_16], %21 {strides = array<i32>} : memref<1x4x8x8xf32, #tpu.memory_space<vmem>>, vector<1x4x8x8xf32>,
    return
  }
  func.func @transform_0(%arg0: i32) -> (i32, i32, i32, i32) {
    %c0_i32 = arith.constant 0 : i32
    %c0_i32_0 = arith.constant 0 : i32
    %c0_i32_1 = arith.constant 0 : i32
    %c0_i32_2 = arith.constant 0 : i32
    return %arg0, %c0_i32, %c0_i32_0, %c0_i32_1 : i32, i32, i32, i32
  }
  func.func @transform_1(%arg0: i32) -> (i32, i32, i32) {
    %c0_i32 = arith.constant 0 : i32
    %c0_i32_0 = arith.constant 0 : i32
    %c0_i32_1 = arith.constant 0 : i32
    return %arg0, %c0_i32, %c0_i32_0 : i32, i32, i32
  }
  func.func @transform_2(%arg0: i32) -> (i32, i32, i32, i32) {
    %c0_i32 = arith.constant 0 : i32
    %c0_i32_0 = arith.constant 0 : i32
    %c0_i32_1 = arith.constant 0 : i32
    %c0_i32_2 = arith.constant 0 : i32
    return %arg0, %c0_i32, %c0_i32_0, %c0_i32_1 : i32, i32, i32, i32
  }
  func.func @transform_3(%arg0: i32) -> (i32, i32, i32, i32) {
    %c0_i32 = arith.constant 0 : i32
    %c0_i32_0 = arith.constant 0 : i32
    %c0_i32_1 = arith.constant 0 : i32
    %c0_i32_2 = arith.constant 0 : i32
    return %arg0, %c0_i32, %c0_i32_0, %c0_i32_1 : i32, i32, i32, i32
  }
}

module attributes {stable_mosaic.version = 11 : i64} {
  func.func @_pool_kernel(%arg0: i32, %arg1: memref<1x8x32xf32, #tpu.memory_space<vmem>>, %arg2: memref<32x16xf32, #tpu.memory_space<vmem>>, %arg3: memref<1x16xf32, #tpu.memory_space<vmem>>, %arg4: memref<16x1xf32, #tpu.memory_space<vmem>>, %arg5: memref<1x1xf32, #tpu.memory_space<vmem>>, %arg6: memref<1x1x32xf32, #tpu.memory_space<vmem>>) attributes {dimension_semantics = [#tpu.dimension_semantics<parallel>], iteration_bounds = array<i64: 2>, scalar_prefetch = 0 : i64, scratch_operands = 0 : i64, tpu.core_type = #tpu.core_type<tc>, window_params = [{transform_indices = @transform_0, window_bounds = array<i64: 1, 8, 32>}, {pipeline_mode = #tpu.pipeline_mode<synchronous>, transform_indices = @transform_1, window_bounds = array<i64: 32, 16>}, {pipeline_mode = #tpu.pipeline_mode<synchronous>, transform_indices = @transform_2, window_bounds = array<i64: 1, 16>}, {pipeline_mode = #tpu.pipeline_mode<synchronous>, transform_indices = @transform_3, window_bounds = array<i64: 16, 1>}, {pipeline_mode = #tpu.pipeline_mode<synchronous>, transform_indices = @transform_4, window_bounds = array<i64: 1, 1>}, {transform_indices = @transform_5, window_bounds = array<i64: 1, 1, 32>}]} {
    %c0 = arith.constant 0 : index
    %c0_0 = arith.constant 0 : index
    %c0_1 = arith.constant 0 : index
    %0 = vector.load %arg1[%c0, %c0_0, %c0_1] : memref<1x8x32xf32, #tpu.memory_space<vmem>>, vector<1x8x32xf32>
    %1 = vector.shape_cast %0 : vector<1x8x32xf32> to vector<8x32xf32>
    %c0_2 = arith.constant 0 : index
    %c0_3 = arith.constant 0 : index
    %2 = vector.load %arg2[%c0_2, %c0_3] : memref<32x16xf32, #tpu.memory_space<vmem>>, vector<32x16xf32>
    %cst = arith.constant dense<0.000000e+00> : vector<8x16xf32>
    %3 = tpu.matmul %1, %2, %cst {dimension_numbers = #tpu.dot_dimension_numbers<[1], [0], [0], [1], [0, 0, 1, 1], [], []>} : vector<8x32xf32>, vector<32x16xf32>, vector<8x16xf32> -> vector<8x16xf32>
    %c0_4 = arith.constant 0 : index
    %c0_5 = arith.constant 0 : index
    %4 = vector.load %arg3[%c0_4, %c0_5] : memref<1x16xf32, #tpu.memory_space<vmem>>, vector<1x16xf32>
    %5 = vector.broadcast %4 : vector<1x16xf32> to vector<8x16xf32>
    %6 = arith.addf %3, %5 : vector<8x16xf32>
    %7 = math.tanh %6 : vector<8x16xf32>
    %c0_6 = arith.constant 0 : index
    %c0_7 = arith.constant 0 : index
    %8 = vector.load %arg4[%c0_6, %c0_7] : memref<16x1xf32, #tpu.memory_space<vmem>>, vector<16x1xf32>
    %cst_8 = arith.constant dense<0.000000e+00> : vector<8x1xf32>
    %9 = tpu.matmul %7, %8, %cst_8 {dimension_numbers = #tpu.dot_dimension_numbers<[1], [0], [0], [1], [0, 0, 1, 1], [], []>} : vector<8x16xf32>, vector<16x1xf32>, vector<8x1xf32> -> vector<8x1xf32>
    %c0_9 = arith.constant 0 : index
    %c0_10 = arith.constant 0 : index
    %10 = vector.load %arg5[%c0_9, %c0_10] : memref<1x1xf32, #tpu.memory_space<vmem>>, vector<1x1xf32>
    %11 = vector.broadcast %10 : vector<1x1xf32> to vector<8x1xf32>
    %12 = arith.addf %9, %11 : vector<8x1xf32>
    %cst_11 = arith.constant dense<0xFF800000> : vector<1xf32>
    %13 = vector.multi_reduction <maximumf>, %12, %cst_11 [0] : vector<8x1xf32> to vector<1xf32>
    %14 = vector.shape_cast %13 : vector<1xf32> to vector<1x1xf32>
    %15 = vector.broadcast %14 : vector<1x1xf32> to vector<8x1xf32>
    %16 = arith.subf %12, %15 : vector<8x1xf32>
    %17 = math.exp %16 : vector<8x1xf32>
    %cst_12 = arith.constant dense<0.000000e+00> : vector<1xf32>
    %18 = vector.multi_reduction <add>, %17, %cst_12 [0] : vector<8x1xf32> to vector<1xf32>
    %19 = vector.shape_cast %18 : vector<1xf32> to vector<1x1xf32>
    %20 = tpu.reciprocal %19 {approx = true} : vector<1x1xf32> -> vector<1x1xf32>
    %21 = vector.broadcast %20 : vector<1x1xf32> to vector<8x1xf32>
    %22 = arith.mulf %17, %21 : vector<8x1xf32>
    %23 = vector.broadcast %22 : vector<8x1xf32> to vector<8x32xf32>
    %24 = arith.mulf %23, %1 : vector<8x32xf32>
    %cst_13 = arith.constant dense<0.000000e+00> : vector<32xf32>
    %25 = vector.multi_reduction <add>, %24, %cst_13 [0] : vector<8x32xf32> to vector<32xf32>
    %26 = vector.shape_cast %25 : vector<32xf32> to vector<1x32xf32>
    %c0_14 = arith.constant 0 : index
    %c0_15 = arith.constant 0 : index
    %c0_16 = arith.constant 0 : index
    %27 = vector.load %arg6[%c0_14, %c0_15, %c0_16] : memref<1x1x32xf32, #tpu.memory_space<vmem>>, vector<1x1x32xf32>
    %28 = vector.shape_cast %27 : vector<1x1x32xf32> to vector<1x32xf32>
    %29 = vector.shape_cast %26 : vector<1x32xf32> to vector<1x1x32xf32>
    tpu.vector_store %arg6[%c0_14, %c0_15, %c0_16], %29 {strides = array<i32>} : memref<1x1x32xf32, #tpu.memory_space<vmem>>, vector<1x1x32xf32>,
    return
  }
  func.func @transform_0(%arg0: i32) -> (i32, i32, i32) {
    %c0_i32 = arith.constant 0 : i32
    %c0_i32_0 = arith.constant 0 : i32
    %c0_i32_1 = arith.constant 0 : i32
    return %arg0, %c0_i32, %c0_i32_0 : i32, i32, i32
  }
  func.func @transform_1(%arg0: i32) -> (i32, i32) {
    %c0_i32 = arith.constant 0 : i32
    %c0_i32_0 = arith.constant 0 : i32
    %c0_i32_1 = arith.constant 0 : i32
    return %c0_i32, %c0_i32_0 : i32, i32
  }
  func.func @transform_2(%arg0: i32) -> (i32, i32) {
    %c0_i32 = arith.constant 0 : i32
    %c0_i32_0 = arith.constant 0 : i32
    %c0_i32_1 = arith.constant 0 : i32
    return %c0_i32, %c0_i32_0 : i32, i32
  }
  func.func @transform_3(%arg0: i32) -> (i32, i32) {
    %c0_i32 = arith.constant 0 : i32
    %c0_i32_0 = arith.constant 0 : i32
    %c0_i32_1 = arith.constant 0 : i32
    return %c0_i32, %c0_i32_0 : i32, i32
  }
  func.func @transform_4(%arg0: i32) -> (i32, i32) {
    %c0_i32 = arith.constant 0 : i32
    %c0_i32_0 = arith.constant 0 : i32
    %c0_i32_1 = arith.constant 0 : i32
    return %c0_i32, %c0_i32_0 : i32, i32
  }
  func.func @transform_5(%arg0: i32) -> (i32, i32, i32) {
    %c0_i32 = arith.constant 0 : i32
    %c0_i32_0 = arith.constant 0 : i32
    %c0_i32_1 = arith.constant 0 : i32
    return %arg0, %c0_i32, %c0_i32_0 : i32, i32, i32
  }
}

</mosaic_0001>

<llo_original>
// kernel: _lambda_.6
$region0: #{_lambda_.6}
  #allocation0 [shape = 'u32[]', space=smem, size = 0x4, offset = 0x4, fixed_abs, tag = 'smem constant byte address 0x4 - core index']
  #allocation1 [shape = 'u32[144,128]{1,0:T(1,128)}', space=vmem, size = 0x12000, scoped, tag = 'internal scratch']
  %s0 = inlined_call_operand.vmem [shape: f32[128,32], index: 0, kind: input, shape index: {}]
  %s1 = inlined_call_operand.vmem [shape: f32[128,32], index: 1, kind: input, shape index: {}]
  %s2 = inlined_call_operand.vmem [shape: f32[32,128], index: 2, kind: input, shape index: {}]
  %s3 = inlined_call_operand.vmem [shape: f32[1,128], index: 3, kind: input, shape index: {}]
  %s4 = inlined_call_operand.vmem [shape: f32[32,32], index: 4, kind: input, shape index: {}]
  %s5 = inlined_call_operand.vmem [shape: f32[1,32], index: 5, kind: input, shape index: {}]
  %s6 = inlined_call_operand.vmem [shape: f32[128,32], index: 6, kind: output, shape index: {0}]
  %s7 = inlined_call_operand.vmem [shape: f32[128,128], index: 7, kind: output, shape index: {1}]
  %s8 = inlined_call_operand.vmem [shape: f32[128,32], index: 8, kind: output, shape index: {2}]
  %9 = xla_tuple %s6, %s7, %s8
  %s10 = sld [smem:[#allocation0]]
  $region50: #{_lambda_.6} parent=0
    _
  %s12 = ssub.s32 1, %s10
  %s13 = scalar_select 0, %s12, %s10
  // Predicated region
  $region2: #{_lambda_.6} parent=0 // pred_check
    _
  $region3: #{_lambda_.6} parent=0 // pred_check_branch
    %15 = sbr.rel (0) target = $region5
  $region4: #{_lambda_.6} parent=0 // pred_region
    _
  $region5: #{_lambda_.6} parent=0 // pred_fallthru
    _
  // Predicated region
  $region6: #{_lambda_.6} parent=0 // pred_check
    _
  $region7: #{_lambda_.6} parent=0 // pred_check_branch
    %17 = sbr.rel (0) target = $region9
  $region8: #{_lambda_.6} parent=0 // pred_region
    _
  $region9: #{_lambda_.6} parent=0 // pred_fallthru
    _
  // Predicated region
  $region10: #{_lambda_.6} parent=0 // pred_check
    _
  $region11: #{_lambda_.6} parent=0 // pred_check_branch
    %19 = sbr.rel (0) target = $region13
  $region12: #{_lambda_.6} parent=0 // pred_region
    _
  $region13: #{_lambda_.6} parent=0 // pred_fallthru
    _
  // Predicated region
  $region14: #{_lambda_.6} parent=0 // pred_check
    _
  $region15: #{_lambda_.6} parent=0 // pred_check_branch
    %21 = sbr.rel (0) target = $region17
  $region16: #{_lambda_.6} parent=0 // pred_region
    _
  $region17: #{_lambda_.6} parent=0 // pred_fallthru
    _
  // Predicated region
  $region18: #{_lambda_.6} parent=0 // pred_check
    _
  $region19: #{_lambda_.6} parent=0 // pred_check_branch
    %23 = sbr.rel (0) target = $region21
  $region20: #{_lambda_.6} parent=0 // pred_region
    _
  $region21: #{_lambda_.6} parent=0 // pred_fallthru
    _
  // Predicated region
  $region22: #{_lambda_.6} parent=0 // pred_check
    _
  $region23: #{_lambda_.6} parent=0 // pred_check_branch
    %25 = sbr.rel (0) target = $region25
  $region24: #{_lambda_.6} parent=0 // pred_region
    _
  $region25: #{_lambda_.6} parent=0 // pred_fallthru
    _
  %v26 = vld [vmem:[%s0] sm:$0xff]
  %v27 = vld [vmem:[%s0 + $0x8] sm:$0xff]
  %v28 = vld [vmem:[%s0 + $0x10] sm:$0xff]
  %v29 = vld [vmem:[%s0 + $0x18] sm:$0xff]
  %v30 = vld [vmem:[%s0 + $0x20] sm:$0xff]
  %v31 = vld [vmem:[%s0 + $0x28] sm:$0xff]
  %v32 = vld [vmem:[%s0 + $0x30] sm:$0xff]
  %v33 = vld [vmem:[%s0 + $0x38] sm:$0xff]
  %v34 = vld [vmem:[%s0 + $0x40] sm:$0xff]
  %v35 = vld [vmem:[%s0 + $0x48] sm:$0xff]
  %v36 = vld [vmem:[%s0 + $0x50] sm:$0xff]
  %v37 = vld [vmem:[%s0 + $0x58] sm:$0xff]
  %v38 = vld [vmem:[%s0 + $0x60] sm:$0xff]
  %v39 = vld [vmem:[%s0 + $0x68] sm:$0xff]
  %v40 = vld [vmem:[%s0 + $0x70] sm:$0xff]
  %v41 = vld [vmem:[%s0 + $0x78] sm:$0xff]
  %v42 = vld [vmem:[%s1] sm:$0xff]
  %v43 = vld [vmem:[%s1 + $0x8] sm:$0xff]
  %v44 = vld [vmem:[%s1 + $0x10] sm:$0xff]
  %v45 = vld [vmem:[%s1 + $0x18] sm:$0xff]
  %v46 = vld [vmem:[%s1 + $0x20] sm:$0xff]
  %v47 = vld [vmem:[%s1 + $0x28] sm:$0xff]
  %v48 = vld [vmem:[%s1 + $0x30] sm:$0xff]
  %v49 = vld [vmem:[%s1 + $0x38] sm:$0xff]
  %v50 = vld [vmem:[%s1 + $0x40] sm:$0xff]
  %v51 = vld [vmem:[%s1 + $0x48] sm:$0xff]
  %v52 = vld [vmem:[%s1 + $0x50] sm:$0xff]
  %v53 = vld [vmem:[%s1 + $0x58] sm:$0xff]
  %v54 = vld [vmem:[%s1 + $0x60] sm:$0xff]
  %v55 = vld [vmem:[%s1 + $0x68] sm:$0xff]
  %v56 = vld [vmem:[%s1 + $0x70] sm:$0xff]
  %v57 = vld [vmem:[%s1 + $0x78] sm:$0xff]
  %v58 = vadd.f32 %v26, %v42
  %v59 = vadd.f32 %v27, %v43
  %v60 = vadd.f32 %v28, %v44
  %v61 = vadd.f32 %v29, %v45
  %v62 = vadd.f32 %v30, %v46
  %v63 = vadd.f32 %v31, %v47
  %v64 = vadd.f32 %v32, %v48
  %v65 = vadd.f32 %v33, %v49
  %v66 = vadd.f32 %v34, %v50
  %v67 = vadd.f32 %v35, %v51
  %v68 = vadd.f32 %v36, %v52
  %v69 = vadd.f32 %v37, %v53
  %v70 = vadd.f32 %v38, %v54
  %v71 = vadd.f32 %v39, %v55
  %v72 = vadd.f32 %v40, %v56
  %v73 = vadd.f32 %v41, %v57
  %vm74 = vcmask 261120
  %75 = vst.msk [vmem:[%s6] sm:$0xff] %vm74, %v58
  %76 = vst.msk [vmem:[%s6 + $0x8] sm:$0xff] %vm74, %v59
  %77 = vst.msk [vmem:[%s6 + $0x10] sm:$0xff] %vm74, %v60
  %78 = vst.msk [vmem:[%s6 + $0x18] sm:$0xff] %vm74, %v61
  %79 = vst.msk [vmem:[%s6 + $0x20] sm:$0xff] %vm74, %v62
  %80 = vst.msk [vmem:[%s6 + $0x28] sm:$0xff] %vm74, %v63
  %81 = vst.msk [vmem:[%s6 + $0x30] sm:$0xff] %vm74, %v64
  %82 = vst.msk [vmem:[%s6 + $0x38] sm:$0xff] %vm74, %v65
  %83 = vst.msk [vmem:[%s6 + $0x40] sm:$0xff] %vm74, %v66
  %84 = vst.msk [vmem:[%s6 + $0x48] sm:$0xff] %vm74, %v67
  %85 = vst.msk [vmem:[%s6 + $0x50] sm:$0xff] %vm74, %v68
  %86 = vst.msk [vmem:[%s6 + $0x58] sm:$0xff] %vm74, %v69
  %87 = vst.msk [vmem:[%s6 + $0x60] sm:$0xff] %vm74, %v70
  %88 = vst.msk [vmem:[%s6 + $0x68] sm:$0xff] %vm74, %v71
  %89 = vst.msk [vmem:[%s6 + $0x70] sm:$0xff] %vm74, %v72
  %90 = vst.msk [vmem:[%s6 + $0x78] sm:$0xff] %vm74, %v73
  %v91 = vld [vmem:[%s2] sm:$0xff]
  %v92 = vld [vmem:[%s2 + $0x8] sm:$0xff]
  %v93 = vld [vmem:[%s2 + $0x10] sm:$0xff]
  %v94 = vld [vmem:[%s2 + $0x18] sm:$0xff]
  %v95 = vld [vmem:[%s3] sm:$0x1]
  %v97 = vlaneseq
  %v98 = vshrl.u32 %v97, 7
  %v99 = vsub.s32 0, %v98
  %v100 = vrot.slane %v95, %v99
  %v103 = vsel %vm74, %v58, 0
  %v106 = vsel %vm74, %v59, 0
  %v109 = vsel %vm74, %v60, 0
  %v112 = vsel %vm74, %v61, 0
  %v115 = vsel %vm74, %v62, 0
  %v118 = vsel %vm74, %v63, 0
  %v121 = vsel %vm74, %v64, 0
  %v124 = vsel %vm74, %v65, 0
  %v127 = vsel %vm74, %v66, 0
  %v130 = vsel %vm74, %v67, 0
  %v133 = vsel %vm74, %v68, 0
  %v136 = vsel %vm74, %v69, 0
  %v139 = vsel %vm74, %v70, 0
  %v142 = vsel %vm74, %v71, 0
  %v145 = vsel %vm74, %v72, 0
  %v148 = vsel %vm74, %v73, 0
  %150 = vmatprep.subr.mxu0 0.0
  %151 = vmatpush1.msra.mxu0 %v91
  %152 = vmatprep.subr.mxu0 0.0
  %153 = vmatpush1.msra.mxu0 %v92
  %154 = vmatprep.subr.mxu0 0.0
  %155 = vmatpush1.msra.mxu0 %v93
  %156 = vmatprep.subr.mxu0 0.0
  %157 = vmatpush1.msra.mxu0 %v94
  %158 = vmatprep.subr.mxu0 0.0
  %159 = vmatpush1.msra.mxu0 0.0
  %160 = vmatprep.subr.mxu0 0.0
  %161 = vmatpush1.msra.mxu0 0.0
  %162 = vmatprep.subr.mxu0 0.0
  %163 = vmatpush1.msra.mxu0 0.0
  %164 = vmatprep.subr.mxu0 0.0
  %165 = vmatpush1.msra.mxu0 0.0
  %166 = vmatprep.subr.mxu0 0.0
  %167 = vmatpush1.msra.mxu0 0.0
  %168 = vmatprep.subr.mxu0 0.0
  %169 = vmatpush1.msra.mxu0 0.0
  %170 = vmatprep.subr.mxu0 0.0
  %171 = vmatpush1.msra.mxu0 0.0
  %172 = vmatprep.subr.mxu0 0.0
  %173 = vmatpush1.msra.mxu0 0.0
  %174 = vmatprep.subr.mxu0 0.0
  %175 = vmatpush1.msra.mxu0 0.0
  %176 = vmatprep.subr.mxu0 0.0
  %177 = vmatpush1.msra.mxu0 0.0
  %178 = vmatprep.subr.mxu0 0.0
  %179 = vmatpush1.msra.mxu0 0.0
  %180 = vmatprep.subr.mxu0 0.0
  %181 = vmatpush1.msra.mxu0 0.0
  %182 = vmatprep.subr.mxu0 0.0
  %183 = vmatpush1.msra.mxu0 0.0
  %184 = vmatprep.subr.mxu0 0.0
  %185 = vmatpush1.msra.mxu0 0.0
  %186 = vmatprep.subr.mxu0 0.0
  %187 = vmatpush1.msra.mxu0 0.0
  %188 = vmatprep.subr.mxu0 0.0
  %189 = vmatpush1.msra.mxu0 0.0
  %190 = vmatprep.subr.mxu0 0.0
  %191 = vmatpush1.msra.mxu0 0.0
  %192 = vmatprep.subr.mxu0 0.0
  %193 = vmatpush1.msra.mxu0 0.0
  %194 = vmatprep.subr.mxu0 0.0
  %195 = vmatpush1.msra.mxu0 0.0
  %196 = vmatprep.subr.mxu0 0.0
  %197 = vmatpush1.msra.mxu0 0.0
  %198 = vmatprep.subr.mxu0 0.0
  %199 = vmatpush1.msra.mxu0 0.0
  %200 = vmatprep.subr.mxu0 0.0
  %201 = vmatpush1.msra.mxu0 0.0
  %202 = vmatprep.subr.mxu0 0.0
  %203 = vmatpush1.msra.mxu0 0.0
  %204 = vmatprep.subr.mxu0 0.0
  %205 = vmatpush1.msra.mxu0 0.0
  %206 = vmatprep.subr.mxu0 0.0
  %207 = vmatpush1.msra.mxu0 0.0
  %208 = vmatprep.subr.mxu0 0.0
  %209 = vmatpush1.msra.mxu0 0.0
  %210 = vmatprep.subr.mxu0 0.0
  %211 = vmatpush1.msra.mxu0 0.0
  %212 = vmatprep.subr.mxu0 0.0
  %213 = vmatpush1.msra.mxu0 0.0
  %214 = vmatprep.mubr.f32.mxu0 0.0
  %215 = vmatmul.mubr.f32.gmra.mrb[0].mxu0 %v103
  %v216 = vpop.f32.mrb[0].mxu0
  %v217 = vadd.f32 %v100, %v216
  %v218 = vpop.f32.mrb[0].mxu0
  %219 = vmatprep.mubr.f32.mxu0 0.0
  %220 = vmatmul.mubr.f32.gmra.mrb[0].mxu0 %v106
  %v221 = vpop.f32.mrb[0].mxu0
  %v222 = vadd.f32 %v100, %v221
  %v223 = vpop.f32.mrb[0].mxu0
  %224 = vmatprep.mubr.f32.mxu0 0.0
  %225 = vmatmul.mubr.f32.gmra.mrb[0].mxu0 %v109
  %v226 = vpop.f32.mrb[0].mxu0
  %v227 = vadd.f32 %v100, %v226
  %v228 = vpop.f32.mrb[0].mxu0
  %229 = vmatprep.mubr.f32.mxu0 0.0
  %230 = vmatmul.mubr.f32.gmra.mrb[0].mxu0 %v112
  %v231 = vpop.f32.mrb[0].mxu0
  %v232 = vadd.f32 %v100, %v231
  %v233 = vpop.f32.mrb[0].mxu0
  %234 = vmatprep.mubr.f32.mxu0 0.0
  %235 = vmatmul.mubr.f32.gmra.mrb[0].mxu0 %v115
  %v236 = vpop.f32.mrb[0].mxu0
  %v237 = vadd.f32 %v100, %v236
  %v238 = vpop.f32.mrb[0].mxu0
  %239 = vmatprep.mubr.f32.mxu0 0.0
  %240 = vmatmul.mubr.f32.gmra.mrb[0].mxu0 %v118
  %v241 = vpop.f32.mrb[0].mxu0
  %v242 = vadd.f32 %v100, %v241
  %v243 = vpop.f32.mrb[0].mxu0
  %244 = vmatprep.mubr.f32.mxu0 0.0
  %245 = vmatmul.mubr.f32.gmra.mrb[0].mxu0 %v121
  %v246 = vpop.f32.mrb[0].mxu0
  %v247 = vadd.f32 %v100, %v246
  %v248 = vpop.f32.mrb[0].mxu0
  %249 = vmatprep.mubr.f32.mxu0 0.0
  %250 = vmatmul.mubr.f32.gmra.mrb[0].mxu0 %v124
  %v251 = vpop.f32.mrb[0].mxu0
  %v252 = vadd.f32 %v100, %v251
  %v253 = vpop.f32.mrb[0].mxu0
  %254 = vmatprep.mubr.f32.mxu0 0.0
  %255 = vmatmul.mubr.f32.gmra.mrb[0].mxu0 %v127
  %v256 = vpop.f32.mrb[0].mxu0
  %v257 = vadd.f32 %v100, %v256
  %v258 = vpop.f32.mrb[0].mxu0
  %259 = vmatprep.mubr.f32.mxu0 0.0
  %260 = vmatmul.mubr.f32.gmra.mrb[0].mxu0 %v130
  %v261 = vpop.f32.mrb[0].mxu0
  %v262 = vadd.f32 %v100, %v261
  %v263 = vpop.f32.mrb[0].mxu0
  %264 = vmatprep.mubr.f32.mxu0 0.0
  %265 = vmatmul.mubr.f32.gmra.mrb[0].mxu0 %v133
  %v266 = vpop.f32.mrb[0].mxu0
  %v267 = vadd.f32 %v100, %v266
  %v268 = vpop.f32.mrb[0].mxu0
  %269 = vmatprep.mubr.f32.mxu0 0.0
  %270 = vmatmul.mubr.f32.gmra.mrb[0].mxu0 %v136
  %v271 = vpop.f32.mrb[0].mxu0
  %v272 = vadd.f32 %v100, %v271
  %v273 = vpop.f32.mrb[0].mxu0
  %274 = vmatprep.mubr.f32.mxu0 0.0
  %275 = vmatmul.mubr.f32.gmra.mrb[0].mxu0 %v139
  %v276 = vpop.f32.mrb[0].mxu0
  %v277 = vadd.f32 %v100, %v276
  %v278 = vpop.f32.mrb[0].mxu0
  %279 = vmatprep.mubr.f32.mxu0 0.0
  %280 = vmatmul.mubr.f32.gmra.mrb[0].mxu0 %v142
  %v281 = vpop.f32.mrb[0].mxu0
  %v282 = vadd.f32 %v100, %v281
  %v283 = vpop.f32.mrb[0].mxu0
  %284 = vmatprep.mubr.f32.mxu0 0.0
  %285 = vmatmul.mubr.f32.gmra.mrb[0].mxu0 %v145
  %v286 = vpop.f32.mrb[0].mxu0
  %v287 = vadd.f32 %v100, %v286
  %v288 = vpop.f32.mrb[0].mxu0
  %289 = vmatprep.mubr.f32.mxu0 0.0
  %290 = vmatmul.mubr.f32.gmra.mrb[0].mxu0 %v148
  %v291 = vpop.f32.mrb[0].mxu0
  %v292 = vadd.f32 %v100, %v291
  %v293 = vpop.f32.mrb[0].mxu0
  %294 = vdwg.mxu0
  %295 = vst [vmem:[%s7] sm:$0xff] %v217
  %296 = vst [vmem:[%s7 + $0x8] sm:$0xff] %v222
  %297 = vst [vmem:[%s7 + $0x10] sm:$0xff] %v227
  %298 = vst [vmem:[%s7 + $0x18] sm:$0xff] %v232
  %299 = vst [vmem:[%s7 + $0x20] sm:$0xff] %v237
  %300 = vst [vmem:[%s7 + $0x28] sm:$0xff] %v242
  %301 = vst [vmem:[%s7 + $0x30] sm:$0xff] %v247
  %302 = vst [vmem:[%s7 + $0x38] sm:$0xff] %v252
  %303 = vst [vmem:[%s7 + $0x40] sm:$0xff] %v257
  %304 = vst [vmem:[%s7 + $0x48] sm:$0xff] %v262
  %305 = vst [vmem:[%s7 + $0x50] sm:$0xff] %v267
  %306 = vst [vmem:[%s7 + $0x58] sm:$0xff] %v272
  %307 = vst [vmem:[%s7 + $0x60] sm:$0xff] %v277
  %308 = vst [vmem:[%s7 + $0x68] sm:$0xff] %v282
  %309 = vst [vmem:[%s7 + $0x70] sm:$0xff] %v287
  %310 = vst [vmem:[%s7 + $0x78] sm:$0xff] %v292
  %v311 = vld [vmem:[%s4] sm:$0xff]
  %v312 = vld [vmem:[%s4 + $0x8] sm:$0xff]
  %v313 = vld [vmem:[%s4 + $0x10] sm:$0xff]
  %v314 = vld [vmem:[%s4 + $0x18] sm:$0xff]
  %v315 = vld [vmem:[%s5] sm:$0x1]
  %v317 = vlaneseq
  %v318 = vshrl.u32 %v317, 7
  %v319 = vsub.s32 0, %v318
  %v320 = vrot.slane %v315, %v319
  %322 = vmatprep.subr.mxu0 0.0
  %323 = vmatpush1.msra.mxu0 %v311
  %324 = vmatprep.subr.mxu0 0.0
  %325 = vmatpush1.msra.mxu0 %v312
  %326 = vmatprep.subr.mxu0 0.0
  %327 = vmatpush1.msra.mxu0 %v313
  %328 = vmatprep.subr.mxu0 0.0
  %329 = vmatpush1.msra.mxu0 %v314
  %330 = vmatprep.subr.mxu0 0.0
  %331 = vmatpush1.msra.mxu0 0.0
  %332 = vmatprep.subr.mxu0 0.0
  %333 = vmatpush1.msra.mxu0 0.0
  %334 = vmatprep.subr.mxu0 0.0
  %335 = vmatpush1.msra.mxu0 0.0
  %336 = vmatprep.subr.mxu0 0.0
  %337 = vmatpush1.msra.mxu0 0.0
  %338 = vmatprep.subr.mxu0 0.0
  %339 = vmatpush1.msra.mxu0 0.0
  %340 = vmatprep.subr.mxu0 0.0
  %341 = vmatpush1.msra.mxu0 0.0
  %342 = vmatprep.subr.mxu0 0.0
  %343 = vmatpush1.msra.mxu0 0.0
  %344 = vmatprep.subr.mxu0 0.0
  %345 = vmatpush1.msra.mxu0 0.0
  %346 = vmatprep.subr.mxu0 0.0
  %347 = vmatpush1.msra.mxu0 0.0
  %348 = vmatprep.subr.mxu0 0.0
  %349 = vmatpush1.msra.mxu0 0.0
  %350 = vmatprep.subr.mxu0 0.0
  %351 = vmatpush1.msra.mxu0 0.0
  %352 = vmatprep.subr.mxu0 0.0
  %353 = vmatpush1.msra.mxu0 0.0
  %354 = vmatprep.subr.mxu0 0.0
  %355 = vmatpush1.msra.mxu0 0.0
  %356 = vmatprep.subr.mxu0 0.0
  %357 = vmatpush1.msra.mxu0 0.0
  %358 = vmatprep.subr.mxu0 0.0
  %359 = vmatpush1.msra.mxu0 0.0
  %360 = vmatprep.subr.mxu0 0.0
  %361 = vmatpush1.msra.mxu0 0.0
  %362 = vmatprep.subr.mxu0 0.0
  %363 = vmatpush1.msra.mxu0 0.0
  %364 = vmatprep.subr.mxu0 0.0
  %365 = vmatpush1.msra.mxu0 0.0
  %366 = vmatprep.subr.mxu0 0.0
  %367 = vmatpush1.msra.mxu0 0.0
  %368 = vmatprep.subr.mxu0 0.0
  %369 = vmatpush1.msra.mxu0 0.0
  %370 = vmatprep.subr.mxu0 0.0
  %371 = vmatpush1.msra.mxu0 0.0
  %372 = vmatprep.subr.mxu0 0.0
  %373 = vmatpush1.msra.mxu0 0.0
  %374 = vmatprep.subr.mxu0 0.0
  %375 = vmatpush1.msra.mxu0 0.0
  %376 = vmatprep.subr.mxu0 0.0
  %377 = vmatpush1.msra.mxu0 0.0
  %378 = vmatprep.subr.mxu0 0.0
  %379 = vmatpush1.msra.mxu0 0.0
  %380 = vmatprep.subr.mxu0 0.0
  %381 = vmatpush1.msra.mxu0 0.0
  %382 = vmatprep.subr.mxu0 0.0
  %383 = vmatpush1.msra.mxu0 0.0
  %384 = vmatprep.subr.mxu0 0.0
  %385 = vmatpush1.msra.mxu0 0.0
  %386 = vmatprep.mubr.f32.mxu0 0.0
  %387 = vmatmul.mubr.f32.gmra.mrb[0].mxu0 %v103
  %v388 = vpop.f32.mrb[0].mxu0
  %v389 = vadd.f32 %v320, %v388
  %v390 = vpop.f32.mrb[0].mxu0
  %391 = vmatprep.mubr.f32.mxu0 0.0
  %392 = vmatmul.mubr.f32.gmra.mrb[0].mxu0 %v106
  %v393 = vpop.f32.mrb[0].mxu0
  %v394 = vadd.f32 %v320, %v393
  %v395 = vpop.f32.mrb[0].mxu0
  %396 = vmatprep.mubr.f32.mxu0 0.0
  %397 = vmatmul.mubr.f32.gmra.mrb[0].mxu0 %v109
  %v398 = vpop.f32.mrb[0].mxu0
  %v399 = vadd.f32 %v320, %v398
  %v400 = vpop.f32.mrb[0].mxu0
  %401 = vmatprep.mubr.f32.mxu0 0.0
  %402 = vmatmul.mubr.f32.gmra.mrb[0].mxu0 %v112
  %v403 = vpop.f32.mrb[0].mxu0
  %v404 = vadd.f32 %v320, %v403
  %v405 = vpop.f32.mrb[0].mxu0
  %406 = vmatprep.mubr.f32.mxu0 0.0
  %407 = vmatmul.mubr.f32.gmra.mrb[0].mxu0 %v115
  %v408 = vpop.f32.mrb[0].mxu0
  %v409 = vadd.f32 %v320, %v408
  %v410 = vpop.f32.mrb[0].mxu0
  %411 = vmatprep.mubr.f32.mxu0 0.0
  %412 = vmatmul.mubr.f32.gmra.mrb[0].mxu0 %v118
  %v413 = vpop.f32.mrb[0].mxu0
  %v414 = vadd.f32 %v320, %v413
  %v415 = vpop.f32.mrb[0].mxu0
  %416 = vmatprep.mubr.f32.mxu0 0.0
  %417 = vmatmul.mubr.f32.gmra.mrb[0].mxu0 %v121
  %v418 = vpop.f32.mrb[0].mxu0
  %v419 = vadd.f32 %v320, %v418
  %v420 = vpop.f32.mrb[0].mxu0
  %421 = vmatprep.mubr.f32.mxu0 0.0
  %422 = vmatmul.mubr.f32.gmra.mrb[0].mxu0 %v124
  %v423 = vpop.f32.mrb[0].mxu0
  %v424 = vadd.f32 %v320, %v423
  %v425 = vpop.f32.mrb[0].mxu0
  %426 = vmatprep.mubr.f32.mxu0 0.0
  %427 = vmatmul.mubr.f32.gmra.mrb[0].mxu0 %v127
  %v428 = vpop.f32.mrb[0].mxu0
  %v429 = vadd.f32 %v320, %v428
  %v430 = vpop.f32.mrb[0].mxu0
  %431 = vmatprep.mubr.f32.mxu0 0.0
  %432 = vmatmul.mubr.f32.gmra.mrb[0].mxu0 %v130
  %v433 = vpop.f32.mrb[0].mxu0
  %v434 = vadd.f32 %v320, %v433
  %v435 = vpop.f32.mrb[0].mxu0
  %436 = vmatprep.mubr.f32.mxu0 0.0
  %437 = vmatmul.mubr.f32.gmra.mrb[0].mxu0 %v133
  %v438 = vpop.f32.mrb[0].mxu0
  %v439 = vadd.f32 %v320, %v438
  %v440 = vpop.f32.mrb[0].mxu0
  %441 = vmatprep.mubr.f32.mxu0 0.0
  %442 = vmatmul.mubr.f32.gmra.mrb[0].mxu0 %v136
  %v443 = vpop.f32.mrb[0].mxu0
  %v444 = vadd.f32 %v320, %v443
  %v445 = vpop.f32.mrb[0].mxu0
  %446 = vmatprep.mubr.f32.mxu0 0.0
  %447 = vmatmul.mubr.f32.gmra.mrb[0].mxu0 %v139
  %v448 = vpop.f32.mrb[0].mxu0
  %v449 = vadd.f32 %v320, %v448
  %v450 = vpop.f32.mrb[0].mxu0
  %451 = vmatprep.mubr.f32.mxu0 0.0
  %452 = vmatmul.mubr.f32.gmra.mrb[0].mxu0 %v142
  %v453 = vpop.f32.mrb[0].mxu0
  %v454 = vadd.f32 %v320, %v453
  %v455 = vpop.f32.mrb[0].mxu0
  %456 = vmatprep.mubr.f32.mxu0 0.0
  %457 = vmatmul.mubr.f32.gmra.mrb[0].mxu0 %v145
  %v458 = vpop.f32.mrb[0].mxu0
  %v459 = vadd.f32 %v320, %v458
  %v460 = vpop.f32.mrb[0].mxu0
  %461 = vmatprep.mubr.f32.mxu0 0.0
  %462 = vmatmul.mubr.f32.gmra.mrb[0].mxu0 %v148
  %v463 = vpop.f32.mrb[0].mxu0
  %v464 = vadd.f32 %v320, %v463
  %v465 = vpop.f32.mrb[0].mxu0
  %466 = vdwg.mxu0
  %467 = vst.msk [vmem:[%s8] sm:$0xff] %vm74, %v389
  %468 = vst.msk [vmem:[%s8 + $0x8] sm:$0xff] %vm74, %v394
  %469 = vst.msk [vmem:[%s8 + $0x10] sm:$0xff] %vm74, %v399
  %470 = vst.msk [vmem:[%s8 + $0x18] sm:$0xff] %vm74, %v404
  %471 = vst.msk [vmem:[%s8 + $0x20] sm:$0xff] %vm74, %v409
  %472 = vst.msk [vmem:[%s8 + $0x28] sm:$0xff] %vm74, %v414
  %473 = vst.msk [vmem:[%s8 + $0x30] sm:$0xff] %vm74, %v419
  %474 = vst.msk [vmem:[%s8 + $0x38] sm:$0xff] %vm74, %v424
  %475 = vst.msk [vmem:[%s8 + $0x40] sm:$0xff] %vm74, %v429
  %476 = vst.msk [vmem:[%s8 + $0x48] sm:$0xff] %vm74, %v434
  %477 = vst.msk [vmem:[%s8 + $0x50] sm:$0xff] %vm74, %v439
  %478 = vst.msk [vmem:[%s8 + $0x58] sm:$0xff] %vm74, %v444
  %479 = vst.msk [vmem:[%s8 + $0x60] sm:$0xff] %vm74, %v449
  %480 = vst.msk [vmem:[%s8 + $0x68] sm:$0xff] %vm74, %v454
  %481 = vst.msk [vmem:[%s8 + $0x70] sm:$0xff] %vm74, %v459
  %482 = vst.msk [vmem:[%s8 + $0x78] sm:$0xff] %vm74, %v464
  // Predicated region
  $region26: #{_lambda_.6} parent=0 // pred_check
    _
  $region27: #{_lambda_.6} parent=0 // pred_check_branch
    %484 = sbr.rel (0) target = $region29
  $region28: #{_lambda_.6} parent=0 // pred_region
    _
  $region29: #{_lambda_.6} parent=0 // pred_fallthru
    _
  // Predicated region
  $region30: #{_lambda_.6} parent=0 // pred_check
    _
  $region31: #{_lambda_.6} parent=0 // pred_check_branch
    %486 = sbr.rel (0) target = $region33
  $region32: #{_lambda_.6} parent=0 // pred_region
    _
  $region33: #{_lambda_.6} parent=0 // pred_fallthru
    _
  // Predicated region
  $region34: #{_lambda_.6} parent=0 // pred_check
    _
  $region35: #{_lambda_.6} parent=0 // pred_check_branch
    %488 = sbr.rel (0) target = $region37
  $region36: #{_lambda_.6} parent=0 // pred_region
    _
  $region37: #{_lambda_.6} parent=0 // pred_fallthru
    _
  // Predicated region
  $region38: #{_lambda_.6} parent=0 // pred_check
    _
  $region39: #{_lambda_.6} parent=0 // pred_check_branch
    %490 = sbr.rel (0) target = $region41
  $region40: #{_lambda_.6} parent=0 // pred_region
    _
  $region41: #{_lambda_.6} parent=0 // pred_fallthru
    _
  // Predicated region
  $region42: #{_lambda_.6} parent=0 // pred_check
    _
  $region43: #{_lambda_.6} parent=0 // pred_check_branch
    %492 = sbr.rel (0) target = $region45
  $region44: #{_lambda_.6} parent=0 // pred_region
    _
  $region45: #{_lambda_.6} parent=0 // pred_fallthru
    _
  // Predicated region
  $region46: #{_lambda_.6} parent=0 // pred_check
    _
  $region47: #{_lambda_.6} parent=0 // pred_check_branch
    %494 = sbr.rel (0) target = $region49
  $region48: #{_lambda_.6} parent=0 // pred_region
    _
  $region49: #{_lambda_.6} parent=0 // pred_fallthru
    _

// kernel: _lambda_.7
$region0: #{_lambda_.7}
  #allocation0 [shape = 'u32[]', space=smem, size = 0x4, offset = 0x4, fixed_abs, tag = 'smem constant byte address 0x4 - core index']
  #allocation1 [shape = 'u32[144,128]{1,0:T(1,128)}', space=vmem, size = 0x12000, scoped, tag = 'internal scratch']
  %s0 = inlined_call_operand.vmem [shape: f32[16,4,8,32], index: 0, kind: input, shape index: {}]
  %s1 = inlined_call_operand.vmem [shape: f32[16,32,8], index: 1, kind: input, shape index: {}]
  %s2 = inlined_call_operand.vmem [shape: f32[16,4,8,8], index: 2, kind: input, shape index: {}]
  %s3 = inlined_call_operand.vmem [shape: f32[16,4,8,8], index: 3, kind: output, shape index: {}]
  %s4 = sld [smem:[#allocation0]]
  $region45: #{_lambda_.7} parent=0
    _
  %s6 = ssub.s32 1, %s4
  %s7 = scalar_select 0, %s6, %s4
  loop: start=0, step=1, limit=18
  $region2: #{_lambda_.7} parent=0 // loop_pre_header
    _
  $region3: #{_lambda_.7} parent=0 // loop_header
    %s9 = sphi 0, %s13
    %p10 = scmp.ge.s32.totalorder %s9, 18
    %s19 = sphi 0, %s21
    %s22 = sphi 0, %s19
    %s23 = sphi 0, %s22
    %s39 = sphi 0, %s23
    %s45 = sphi 0, %s47
    %s48 = sphi 0, %s45
    %s49 = sphi 0, %s48
    %s65 = sphi 0, %s49
    %s71 = sphi 0, %s73
    %s74 = sphi 0, %s71
    %s75 = sphi 0, %s74
    %s91 = sphi 0, %s75
    %s97 = sphi 0, %s99
    %s100 = sphi 0, %s97
    %s101 = sphi 0, %s100
    %s117 = sphi 0, %s101
  $region4: #{_lambda_.7} parent=0 // loop_header_branch
    %12 = sbr.rel (%p10) target = $region8
  $region5: #{_lambda_.7} parent=0 // loop_body
    %s14 = ssub.s32 %s9, 1
    %s15 = ssub.s32 %s9, 2
    %s16 = sadd.s32 %s9, 1
    %s17 = ssub.s32 %s9, %s16
    %p18 = scmp.eq.s32.totalorder %s17, 0
    %s20 = sadd.s32 %s19, 1
    %s21 = scalar_select %p18, %s19, %s20
    %p24 = pneg %p18
    %p25 = scmp.eq.s32.totalorder %s9, 15
    %p26 = por %p24, %p25
    %p27 = scmp.ne.s32.totalorder %s19, %s22
    %p28 = scmp.eq.s32.totalorder %s9, 0
    %p29 = por %p27, %p28
    %p30 = scmp.ne.s32.totalorder %s19, %s22
    %p31 = scmp.eq.s32.totalorder %s14, 15
    %p32 = por %p30, %p31
    %p33 = scmp.ne.s32.totalorder %s22, %s23
    %p34 = scmp.eq.s32.totalorder %s14, 0
    %p35 = por %p33, %p34
    %p36 = scmp.ne.s32.totalorder %s22, %s23
    %p37 = scmp.eq.s32.totalorder %s15, 15
    %p38 = por %p36, %p37
    %p40 = scmp.ne.s32.totalorder %s23, %s39
    %p41 = scmp.eq.s32.totalorder %s15, 0
    %p42 = por %p40, %p41
    %s43 = ssub.s32 %s9, %s16
    %p44 = scmp.eq.s32.totalorder %s43, 0
    %s46 = sadd.s32 %s45, 1
    %s47 = scalar_select %p44, %s45, %s46
    %p50 = pneg %p44
    %p51 = scmp.eq.s32.totalorder %s9, 15
    %p52 = por %p50, %p51
    %p53 = scmp.ne.s32.totalorder %s45, %s48
    %p54 = scmp.eq.s32.totalorder %s9, 0
    %p55 = por %p53, %p54
    %p56 = scmp.ne.s32.totalorder %s45, %s48
    %p57 = scmp.eq.s32.totalorder %s14, 15
    %p58 = por %p56, %p57
    %p59 = scmp.ne.s32.totalorder %s48, %s49
    %p60 = scmp.eq.s32.totalorder %s14, 0
    %p61 = por %p59, %p60
    %p62 = scmp.ne.s32.totalorder %s48, %s49
    %p63 = scmp.eq.s32.totalorder %s15, 15
    %p64 = por %p62, %p63
    %p66 = scmp.ne.s32.totalorder %s49, %s65
    %p67 = scmp.eq.s32.totalorder %s15, 0
    %p68 = por %p66, %p67
    %s69 = ssub.s32 %s9, %s16
    %p70 = scmp.eq.s32.totalorder %s69, 0
    %s72 = sadd.s32 %s71, 1
    %s73 = scalar_select %p70, %s71, %s72
    %p76 = pneg %p70
    %p77 = scmp.eq.s32.totalorder %s9, 15
    %p78 = por %p76, %p77
    %p79 = scmp.ne.s32.totalorder %s71, %s74
    %p80 = scmp.eq.s32.totalorder %s9, 0
    %p81 = por %p79, %p80
    %p82 = scmp.ne.s32.totalorder %s71, %s74
    %p83 = scmp.eq.s32.totalorder %s14, 15
    %p84 = por %p82, %p83
    %p85 = scmp.ne.s32.totalorder %s74, %s75
    %p86 = scmp.eq.s32.totalorder %s14, 0
    %p87 = por %p85, %p86
    %p88 = scmp.ne.s32.totalorder %s74, %s75
    %p89 = scmp.eq.s32.totalorder %s15, 15
    %p90 = por %p88, %p89
    %p92 = scmp.ne.s32.totalorder %s75, %s91
    %p93 = scmp.eq.s32.totalorder %s15, 0
    %p94 = por %p92, %p93
    %s95 = ssub.s32 %s9, %s16
    %p96 = scmp.eq.s32.totalorder %s95, 0
    %s98 = sadd.s32 %s97, 1
    %s99 = scalar_select %p96, %s97, %s98
    %p102 = pneg %p96
    %p103 = scmp.eq.s32.totalorder %s9, 15
    %p104 = por %p102, %p103
    %p105 = scmp.ne.s32.totalorder %s97, %s100
    %p106 = scmp.eq.s32.totalorder %s9, 0
    %p107 = por %p105, %p106
    %p108 = scmp.ne.s32.totalorder %s97, %s100
    %p109 = scmp.eq.s32.totalorder %s14, 15
    %p110 = por %p108, %p109
    %p111 = scmp.ne.s32.totalorder %s100, %s101
    %p112 = scmp.eq.s32.totalorder %s14, 0
    %p113 = por %p111, %p112
    %p114 = scmp.ne.s32.totalorder %s100, %s101
    %p115 = scmp.eq.s32.totalorder %s15, 15
    %p116 = por %p114, %p115
    %p118 = scmp.ne.s32.totalorder %s101, %s117
    %p119 = scmp.eq.s32.totalorder %s15, 0
    %p120 = por %p118, %p119
    %p121 = scmp.le.s32.totalorder 1, %s9
    %p122 = scmp.lt.s32.totalorder %s9, 17
    %p123 = pnand %p121, %p122
    %p124 = pneg %p123
    // Predicated region
    $region9: #{_lambda_.7} parent=5 // pred_check
      _
    $region10: #{_lambda_.7} parent=5 // pred_check_branch
      %126 = sbr.rel (%p123) target = $region12
    $region11: #{_lambda_.7} parent=5 // pred_region
      %s127 = ssub.s32 %s9, 1
    $region12: #{_lambda_.7} parent=5 // pred_fallthru
      _
    %p128 = scmp.lt.s32.totalorder %s9, 16
    // Predicated region
    $region13: #{_lambda_.7} parent=5 // pred_check
      %p129 = pneg %p128
    $region14: #{_lambda_.7} parent=5 // pred_check_branch
      %131 = sbr.rel (%p129) target = $region16
    $region15: #{_lambda_.7} parent=5 // pred_region
      // Predicated region
      $region17: #{_lambda_.7} parent=15 // pred_check
        %p132 = pneg %p29
      $region18: #{_lambda_.7} parent=15 // pred_check_branch
        %134 = sbr.rel (%p132) target = $region20
      $region19: #{_lambda_.7} parent=15 // pred_region
        %p135 = scmp.lt.s32.totalorder %s9, 15
        %s136 = scalar_select %p135, %s9, 15
        %s137 = smul.addr %s136, 4
        %s138 = smul.addr %s137, 8
        %s139 = scalar_lea.vmem %s0, %s138
      $region20: #{_lambda_.7} parent=15 // pred_fallthru
        _
      // Predicated region
      $region21: #{_lambda_.7} parent=15 // pred_check
        %p140 = pneg %p55
      $region22: #{_lambda_.7} parent=15 // pred_check_branch
        %142 = sbr.rel (%p140) target = $region24
      $region23: #{_lambda_.7} parent=15 // pred_region
        %p143 = scmp.lt.s32.totalorder %s9, 15
        %s144 = scalar_select %p143, %s9, 15
        %s145 = smul.addr %s144, 4
        %s146 = smul.addr %s145, 8
        %s147 = scalar_lea.vmem %s1, %s146
      $region24: #{_lambda_.7} parent=15 // pred_fallthru
        _
      // Predicated region
      $region25: #{_lambda_.7} parent=15 // pred_check
        %p148 = pneg %p81
      $region26: #{_lambda_.7} parent=15 // pred_check_branch
        %150 = sbr.rel (%p148) target = $region28
      $region27: #{_lambda_.7} parent=15 // pred_region
        %p151 = scmp.lt.s32.totalorder %s9, 15
        %s152 = scalar_select %p151, %s9, 15
        %s153 = smul.addr %s152, 4
        %s154 = smul.addr %s153, 8
        %s155 = scalar_lea.vmem %s2, %s154
      $region28: #{_lambda_.7} parent=15 // pred_fallthru
        _
    $region16: #{_lambda_.7} parent=5 // pred_fallthru
      _
    %p156 = scmp.le.s32.totalorder 1, %s9
    %p157 = scmp.lt.s32.totalorder %s9, 17
    %p158 = pnand %p156, %p157
    %p159 = pneg %p158
    // Predicated region
    $region29: #{_lambda_.7} parent=5 // pred_check
      _
    $region30: #{_lambda_.7} parent=5 // pred_check_branch
      %161 = sbr.rel (%p158) target = $region32
    $region31: #{_lambda_.7} parent=5 // pred_region
      %s162 = ssub.s32 %s9, 1
      %p163 = scmp.lt.s32.totalorder %s14, 15
      %s164 = scalar_select %p163, %s14, 15
      %s165 = smul.addr %s164, 4
      %s166 = smul.addr %s165, 8
      %s167 = scalar_lea.vmem %s0, %s166
      %p168 = pneg %p35
      %p169 = pneg %p32
      %p170 = scmp.lt.s32.totalorder %s14, 15
      %s171 = scalar_select %p170, %s14, 15
      %s172 = smul.addr %s171, 4
      %s173 = smul.addr %s172, 8
      %s174 = scalar_lea.vmem %s1, %s173
      %p175 = pneg %p61
      %p176 = pneg %p58
      %p177 = scmp.lt.s32.totalorder %s14, 15
      %s178 = scalar_select %p177, %s14, 15
      %s179 = smul.addr %s178, 4
      %s180 = smul.addr %s179, 8
      %s181 = scalar_lea.vmem %s2, %s180
      %p182 = pneg %p87
      %p183 = pneg %p84
      %p184 = pneg %p113
      %p185 = pneg %p110
      %p186 = scmp.lt.s32.totalorder %s14, 15
      %s187 = scalar_select %p186, %s14, 15
      %s188 = smul.addr %s187, 4
      %s189 = smul.addr %s188, 8
      %s190 = scalar_lea.vmem %s3, %s189
      %p191 = scmp.lt.s32.totalorder %s14, 15
      %s192 = scalar_select %p191, %s14, 15
      %s193 = smul.addr %s192, 4
      %s194 = smul.addr %s193, 8
      %s195 = scalar_lea.vmem %s0, %s194
      %p196 = scmp.lt.s32.totalorder %s14, 15
      %s197 = scalar_select %p196, %s14, 15
      %s198 = smul.addr %s197, 4
      %s199 = smul.addr %s198, 8
      %s200 = scalar_lea.vmem %s1, %s199
      %p201 = scmp.lt.s32.totalorder %s14, 15
      %s202 = scalar_select %p201, %s14, 15
      %s203 = smul.addr %s202, 4
      %s204 = smul.addr %s203, 8
      %s205 = scalar_lea.vmem %s2, %s204
      %p206 = scmp.lt.s32.totalorder %s14, 15
      %s207 = scalar_select %p206, %s14, 15
      %s208 = smul.addr %s207, 4
      %s209 = smul.addr %s208, 8
      %s210 = scalar_lea.vmem %s3, %s209
      %v211 = vld [vmem:[%s195] sm:$0xff]
      %v212 = vld [vmem:[%s195 + $0x8] sm:$0xff]
      %v213 = vld [vmem:[%s195 + $0x10] sm:$0xff]
      %v214 = vld [vmem:[%s195 + $0x18] sm:$0xff]
      %v215 = vld [vmem:[%s205] sm:$0xff]
      %v216 = vld [vmem:[%s205 + $0x8] sm:$0xff]
      %v217 = vld [vmem:[%s205 + $0x10] sm:$0xff]
      %v218 = vld [vmem:[%s205 + $0x18] sm:$0xff]
      %v219 = vld [vmem:[%s200] sm:$0xff]
      %v220 = vld [vmem:[%s200 + $0x8] sm:$0xff]
      %v221 = vld [vmem:[%s200 + $0x10] sm:$0xff]
      %v222 = vld [vmem:[%s200 + $0x18] sm:$0xff]
      %vm223 = vcmask 261120
      %v225 = vsel %vm223, %v211, 0
      %227 = vmatprep.subr.mxu0 0.0
      %228 = vmatpush1.msra.mxu0 %v219
      %229 = vmatprep.subr.mxu0 0.0
      %230 = vmatpush1.msra.mxu0 %v220
      %231 = vmatprep.subr.mxu0 0.0
      %232 = vmatpush1.msra.mxu0 %v221
      %233 = vmatprep.subr.mxu0 0.0
      %234 = vmatpush1.msra.mxu0 %v222
      %235 = vmatprep.subr.mxu0 0.0
      %236 = vmatpush1.msra.mxu0 0.0
      %237 = vmatprep.subr.mxu0 0.0
      %238 = vmatpush1.msra.mxu0 0.0
      %239 = vmatprep.subr.mxu0 0.0
      %240 = vmatpush1.msra.mxu0 0.0
      %241 = vmatprep.subr.mxu0 0.0
      %242 = vmatpush1.msra.mxu0 0.0
      %243 = vmatprep.subr.mxu0 0.0
      %244 = vmatpush1.msra.mxu0 0.0
      %245 = vmatprep.subr.mxu0 0.0
      %246 = vmatpush1.msra.mxu0 0.0
      %247 = vmatprep.subr.mxu0 0.0
      %248 = vmatpush1.msra.mxu0 0.0
      %249 = vmatprep.subr.mxu0 0.0
      %250 = vmatpush1.msra.mxu0 0.0
      %251 = vmatprep.subr.mxu0 0.0
      %252 = vmatpush1.msra.mxu0 0.0
      %253 = vmatprep.subr.mxu0 0.0
      %254 = vmatpush1.msra.mxu0 0.0
      %255 = vmatprep.subr.mxu0 0.0
      %256 = vmatpush1.msra.mxu0 0.0
      %257 = vmatprep.subr.mxu0 0.0
      %258 = vmatpush1.msra.mxu0 0.0
      %259 = vmatprep.subr.mxu0 0.0
      %260 = vmatpush1.msra.mxu0 0.0
      %261 = vmatprep.subr.mxu0 0.0
      %262 = vmatpush1.msra.mxu0 0.0
      %263 = vmatprep.subr.mxu0 0.0
      %264 = vmatpush1.msra.mxu0 0.0
      %265 = vmatprep.subr.mxu0 0.0
      %266 = vmatpush1.msra.mxu0 0.0
      %267 = vmatprep.subr.mxu0 0.0
      %268 = vmatpush1.msra.mxu0 0.0
      %269 = vmatprep.subr.mxu0 0.0
      %270 = vmatpush1.msra.mxu0 0.0
      %271 = vmatprep.subr.mxu0 0.0
      %272 = vmatpush1.msra.mxu0 0.0
      %273 = vmatprep.subr.mxu0 0.0
      %274 = vmatpush1.msra.mxu0 0.0
      %275 = vmatprep.subr.mxu0 0.0
      %276 = vmatpush1.msra.mxu0 0.0
      %277 = vmatprep.subr.mxu0 0.0
      %278 = vmatpush1.msra.mxu0 0.0
      %279 = vmatprep.subr.mxu0 0.0
      %280 = vmatpush1.msra.mxu0 0.0
      %281 = vmatprep.subr.mxu0 0.0
      %282 = vmatpush1.msra.mxu0 0.0
      %283 = vmatprep.subr.mxu0 0.0
      %284 = vmatpush1.msra.mxu0 0.0
      %285 = vmatprep.subr.mxu0 0.0
      %286 = vmatpush1.msra.mxu0 0.0
      %287 = vmatprep.subr.mxu0 0.0
      %288 = vmatpush1.msra.mxu0 0.0
      %289 = vmatprep.subr.mxu0 0.0
      %290 = vmatpush1.msra.mxu0 0.0
      %291 = vmatprep.mubr.f32.mxu0 0.0
      %292 = vmatmul.mubr.f32.gmra.mrb[0].mxu0 %v225
      %v293 = vpop.f32.mrb[0].mxu0
      %v294 = vadd.f32 0.0, %v293
      %v295 = vpop.f32.mrb[0].mxu0
      %296 = vdwg.mxu0
      %v298 = vsel %vm223, %v212, 0
      %300 = vmatprep.subr.mxu0 0.0
      %301 = vmatpush1.msra.mxu0 %v219
      %302 = vmatprep.subr.mxu0 0.0
      %303 = vmatpush1.msra.mxu0 %v220
      %304 = vmatprep.subr.mxu0 0.0
      %305 = vmatpush1.msra.mxu0 %v221
      %306 = vmatprep.subr.mxu0 0.0
      %307 = vmatpush1.msra.mxu0 %v222
      %308 = vmatprep.subr.mxu0 0.0
      %309 = vmatpush1.msra.mxu0 0.0
      %310 = vmatprep.subr.mxu0 0.0
      %311 = vmatpush1.msra.mxu0 0.0
      %312 = vmatprep.subr.mxu0 0.0
      %313 = vmatpush1.msra.mxu0 0.0
      %314 = vmatprep.subr.mxu0 0.0
      %315 = vmatpush1.msra.mxu0 0.0
      %316 = vmatprep.subr.mxu0 0.0
      %317 = vmatpush1.msra.mxu0 0.0
      %318 = vmatprep.subr.mxu0 0.0
      %319 = vmatpush1.msra.mxu0 0.0
      %320 = vmatprep.subr.mxu0 0.0
      %321 = vmatpush1.msra.mxu0 0.0
      %322 = vmatprep.subr.mxu0 0.0
      %323 = vmatpush1.msra.mxu0 0.0
      %324 = vmatprep.subr.mxu0 0.0
      %325 = vmatpush1.msra.mxu0 0.0
      %326 = vmatprep.subr.mxu0 0.0
      %327 = vmatpush1.msra.mxu0 0.0
      %328 = vmatprep.subr.mxu0 0.0
      %329 = vmatpush1.msra.mxu0 0.0
      %330 = vmatprep.subr.mxu0 0.0
      %331 = vmatpush1.msra.mxu0 0.0
      %332 = vmatprep.subr.mxu0 0.0
      %333 = vmatpush1.msra.mxu0 0.0
      %334 = vmatprep.subr.mxu0 0.0
      %335 = vmatpush1.msra.mxu0 0.0
      %336 = vmatprep.subr.mxu0 0.0
      %337 = vmatpush1.msra.mxu0 0.0
      %338 = vmatprep.subr.mxu0 0.0
      %339 = vmatpush1.msra.mxu0 0.0
      %340 = vmatprep.subr.mxu0 0.0
      %341 = vmatpush1.msra.mxu0 0.0
      %342 = vmatprep.subr.mxu0 0.0
      %343 = vmatpush1.msra.mxu0 0.0
      %344 = vmatprep.subr.mxu0 0.0
      %345 = vmatpush1.msra.mxu0 0.0
      %346 = vmatprep.subr.mxu0 0.0
      %347 = vmatpush1.msra.mxu0 0.0
      %348 = vmatprep.subr.mxu0 0.0
      %349 = vmatpush1.msra.mxu0 0.0
      %350 = vmatprep.subr.mxu0 0.0
      %351 = vmatpush1.msra.mxu0 0.0
      %352 = vmatprep.subr.mxu0 0.0
      %353 = vmatpush1.msra.mxu0 0.0
      %354 = vmatprep.subr.mxu0 0.0
      %355 = vmatpush1.msra.mxu0 0.0
      %356 = vmatprep.subr.mxu0 0.0
      %357 = vmatpush1.msra.mxu0 0.0
      %358 = vmatprep.subr.mxu0 0.0
      %359 = vmatpush1.msra.mxu0 0.0
      %360 = vmatprep.subr.mxu0 0.0
      %361 = vmatpush1.msra.mxu0 0.0
      %362 = vmatprep.subr.mxu0 0.0
      %363 = vmatpush1.msra.mxu0 0.0
      %364 = vmatprep.mubr.f32.mxu0 0.0
      %365 = vmatmul.mubr.f32.gmra.mrb[0].mxu0 %v298
      %v366 = vpop.f32.mrb[0].mxu0
      %v367 = vadd.f32 0.0, %v366
      %v368 = vpop.f32.mrb[0].mxu0
      %369 = vdwg.mxu0
      %v371 = vsel %vm223, %v213, 0
      %373 = vmatprep.subr.mxu0 0.0
      %374 = vmatpush1.msra.mxu0 %v219
      %375 = vmatprep.subr.mxu0 0.0
      %376 = vmatpush1.msra.mxu0 %v220
      %377 = vmatprep.subr.mxu0 0.0
      %378 = vmatpush1.msra.mxu0 %v221
      %379 = vmatprep.subr.mxu0 0.0
      %380 = vmatpush1.msra.mxu0 %v222
      %381 = vmatprep.subr.mxu0 0.0
      %382 = vmatpush1.msra.mxu0 0.0
      %383 = vmatprep.subr.mxu0 0.0
      %384 = vmatpush1.msra.mxu0 0.0
      %385 = vmatprep.subr.mxu0 0.0
      %386 = vmatpush1.msra.mxu0 0.0
      %387 = vmatprep.subr.mxu0 0.0
      %388 = vmatpush1.msra.mxu0 0.0
      %389 = vmatprep.subr.mxu0 0.0
      %390 = vmatpush1.msra.mxu0 0.0
      %391 = vmatprep.subr.mxu0 0.0
      %392 = vmatpush1.msra.mxu0 0.0
      %393 = vmatprep.subr.mxu0 0.0
      %394 = vmatpush1.msra.mxu0 0.0
      %395 = vmatprep.subr.mxu0 0.0
      %396 = vmatpush1.msra.mxu0 0.0
      %397 = vmatprep.subr.mxu0 0.0
      %398 = vmatpush1.msra.mxu0 0.0
      %399 = vmatprep.subr.mxu0 0.0
      %400 = vmatpush1.msra.mxu0 0.0
      %401 = vmatprep.subr.mxu0 0.0
      %402 = vmatpush1.msra.mxu0 0.0
      %403 = vmatprep.subr.mxu0 0.0
      %404 = vmatpush1.msra.mxu0 0.0
      %405 = vmatprep.subr.mxu0 0.0
      %406 = vmatpush1.msra.mxu0 0.0
      %407 = vmatprep.subr.mxu0 0.0
      %408 = vmatpush1.msra.mxu0 0.0
      %409 = vmatprep.subr.mxu0 0.0
      %410 = vmatpush1.msra.mxu0 0.0
      %411 = vmatprep.subr.mxu0 0.0
      %412 = vmatpush1.msra.mxu0 0.0
      %413 = vmatprep.subr.mxu0 0.0
      %414 = vmatpush1.msra.mxu0 0.0
      %415 = vmatprep.subr.mxu0 0.0
      %416 = vmatpush1.msra.mxu0 0.0
      %417 = vmatprep.subr.mxu0 0.0
      %418 = vmatpush1.msra.mxu0 0.0
      %419 = vmatprep.subr.mxu0 0.0
      %420 = vmatpush1.msra.mxu0 0.0
      %421 = vmatprep.subr.mxu0 0.0
      %422 = vmatpush1.msra.mxu0 0.0
      %423 = vmatprep.subr.mxu0 0.0
      %424 = vmatpush1.msra.mxu0 0.0
      %425 = vmatprep.subr.mxu0 0.0
      %426 = vmatpush1.msra.mxu0 0.0
      %427 = vmatprep.subr.mxu0 0.0
      %428 = vmatpush1.msra.mxu0 0.0
      %429 = vmatprep.subr.mxu0 0.0
      %430 = vmatpush1.msra.mxu0 0.0
      %431 = vmatprep.subr.mxu0 0.0
      %432 = vmatpush1.msra.mxu0 0.0
      %433 = vmatprep.subr.mxu0 0.0
      %434 = vmatpush1.msra.mxu0 0.0
      %435 = vmatprep.subr.mxu0 0.0
      %436 = vmatpush1.msra.mxu0 0.0
      %437 = vmatprep.mubr.f32.mxu0 0.0
      %438 = vmatmul.mubr.f32.gmra.mrb[0].mxu0 %v371
      %v439 = vpop.f32.mrb[0].mxu0
      %v440 = vadd.f32 0.0, %v439
      %v441 = vpop.f32.mrb[0].mxu0
      %442 = vdwg.mxu0
      %v444 = vsel %vm223, %v214, 0
      %446 = vmatprep.subr.mxu0 0.0
      %447 = vmatpush1.msra.mxu0 %v219
      %448 = vmatprep.subr.mxu0 0.0
      %449 = vmatpush1.msra.mxu0 %v220
      %450 = vmatprep.subr.mxu0 0.0
      %451 = vmatpush1.msra.mxu0 %v221
      %452 = vmatprep.subr.mxu0 0.0
      %453 = vmatpush1.msra.mxu0 %v222
      %454 = vmatprep.subr.mxu0 0.0
      %455 = vmatpush1.msra.mxu0 0.0
      %456 = vmatprep.subr.mxu0 0.0
      %457 = vmatpush1.msra.mxu0 0.0
      %458 = vmatprep.subr.mxu0 0.0
      %459 = vmatpush1.msra.mxu0 0.0
      %460 = vmatprep.subr.mxu0 0.0
      %461 = vmatpush1.msra.mxu0 0.0
      %462 = vmatprep.subr.mxu0 0.0
      %463 = vmatpush1.msra.mxu0 0.0
      %464 = vmatprep.subr.mxu0 0.0
      %465 = vmatpush1.msra.mxu0 0.0
      %466 = vmatprep.subr.mxu0 0.0
      %467 = vmatpush1.msra.mxu0 0.0
      %468 = vmatprep.subr.mxu0 0.0
      %469 = vmatpush1.msra.mxu0 0.0
      %470 = vmatprep.subr.mxu0 0.0
      %471 = vmatpush1.msra.mxu0 0.0
      %472 = vmatprep.subr.mxu0 0.0
      %473 = vmatpush1.msra.mxu0 0.0
      %474 = vmatprep.subr.mxu0 0.0
      %475 = vmatpush1.msra.mxu0 0.0
      %476 = vmatprep.subr.mxu0 0.0
      %477 = vmatpush1.msra.mxu0 0.0
      %478 = vmatprep.subr.mxu0 0.0
      %479 = vmatpush1.msra.mxu0 0.0
      %480 = vmatprep.subr.mxu0 0.0
      %481 = vmatpush1.msra.mxu0 0.0
      %482 = vmatprep.subr.mxu0 0.0
      %483 = vmatpush1.msra.mxu0 0.0
      %484 = vmatprep.subr.mxu0 0.0
      %485 = vmatpush1.msra.mxu0 0.0
      %486 = vmatprep.subr.mxu0 0.0
      %487 = vmatpush1.msra.mxu0 0.0
      %488 = vmatprep.subr.mxu0 0.0
      %489 = vmatpush1.msra.mxu0 0.0
      %490 = vmatprep.subr.mxu0 0.0
      %491 = vmatpush1.msra.mxu0 0.0
      %492 = vmatprep.subr.mxu0 0.0
      %493 = vmatpush1.msra.mxu0 0.0
      %494 = vmatprep.subr.mxu0 0.0
      %495 = vmatpush1.msra.mxu0 0.0
      %496 = vmatprep.subr.mxu0 0.0
      %497 = vmatpush1.msra.mxu0 0.0
      %498 = vmatprep.subr.mxu0 0.0
      %499 = vmatpush1.msra.mxu0 0.0
      %500 = vmatprep.subr.mxu0 0.0
      %501 = vmatpush1.msra.mxu0 0.0
      %502 = vmatprep.subr.mxu0 0.0
      %503 = vmatpush1.msra.mxu0 0.0
      %504 = vmatprep.subr.mxu0 0.0
      %505 = vmatpush1.msra.mxu0 0.0
      %506 = vmatprep.subr.mxu0 0.0
      %507 = vmatpush1.msra.mxu0 0.0
      %508 = vmatprep.subr.mxu0 0.0
      %509 = vmatpush1.msra.mxu0 0.0
      %510 = vmatprep.mubr.f32.mxu0 0.0
      %511 = vmatmul.mubr.f32.gmra.mrb[0].mxu0 %v444
      %v512 = vpop.f32.mrb[0].mxu0
      %v513 = vadd.f32 0.0, %v512
      %v514 = vpop.f32.mrb[0].mxu0
      %515 = vdwg.mxu0
      %vm516 = vcmask 64512
      %v517 = vsel %vm516, %v294, -inf
      %v518 = vrot.slane %v517, 4
      %v519 = vmax.f32 %v517, %v518
      %v520 = vrot.slane %v519, 2
      %v521 = vmax.f32 %v519, %v520
      %v522 = vrot.slane %v521, 1
      %v523 = vmax.f32 %v521, %v522
      %v524 = vsel %vm516, %v367, -inf
      %v525 = vrot.slane %v524, 4
      %v526 = vmax.f32 %v524, %v525
      %v527 = vrot.slane %v526, 2
      %v528 = vmax.f32 %v526, %v527
      %v529 = vrot.slane %v528, 1
      %v530 = vmax.f32 %v528, %v529
      %v531 = vsel %vm516, %v440, -inf
      %v532 = vrot.slane %v531, 4
      %v533 = vmax.f32 %v531, %v532
      %v534 = vrot.slane %v533, 2
      %v535 = vmax.f32 %v533, %v534
      %v536 = vrot.slane %v535, 1
      %v537 = vmax.f32 %v535, %v536
      %v538 = vsel %vm516, %v513, -inf
      %v539 = vrot.slane %v538, 4
      %v540 = vmax.f32 %v538, %v539
      %v541 = vrot.slane %v540, 2
      %v542 = vmax.f32 %v540, %v541
      %v543 = vrot.slane %v542, 1
      %v544 = vmax.f32 %v542, %v543
      %v545 = vsub.f32 %v294, %v523
      %v546 = vsub.f32 %v367, %v530
      %v547 = vsub.f32 %v440, %v537
      %v548 = vsub.f32 %v513, %v544
      %v549 = vmul.f32 %v545, 1.442695
      %v550 = vpow.pop %v549
      %v551 = vmul.f32 %v546, 1.442695
      %v552 = vpow.pop %v551
      %v553 = vmul.f32 %v547, 1.442695
      %v554 = vpow.pop %v553
      %v555 = vmul.f32 %v548, 1.442695
      %v556 = vpow.pop %v555
      %v557 = vsel %vm516, %v550, 0.0
      %v558 = vrot.slane %v557, 4
      %v559 = vadd.f32 %v557, %v558
      %v560 = vrot.slane %v559, 2
      %v561 = vadd.f32 %v559, %v560
      %v562 = vrot.slane %v561, 1
      %v563 = vadd.f32 %v561, %v562
      %v564 = vsel %vm516, %v552, 0.0
      %v565 = vrot.slane %v564, 4
      %v566 = vadd.f32 %v564, %v565
      %v567 = vrot.slane %v566, 2
      %v568 = vadd.f32 %v566, %v567
      %v569 = vrot.slane %v568, 1
      %v570 = vadd.f32 %v568, %v569
      %v571 = vsel %vm516, %v554, 0.0
      %v572 = vrot.slane %v571, 4
      %v573 = vadd.f32 %v571, %v572
      %v574 = vrot.slane %v573, 2
      %v575 = vadd.f32 %v573, %v574
      %v576 = vrot.slane %v575, 1
      %v577 = vadd.f32 %v575, %v576
      %v578 = vsel %vm516, %v556, 0.0
      %v579 = vrot.slane %v578, 4
      %v580 = vadd.f32 %v578, %v579
      %v581 = vrot.slane %v580, 2
      %v582 = vadd.f32 %v580, %v581
      %v583 = vrot.slane %v582, 1
      %v584 = vadd.f32 %v582, %v583
      %v585 = vrcp.pop %v563
      %v586 = vrcp.pop %v570
      %v587 = vrcp.pop %v577
      %v588 = vrcp.pop %v584
      %v589 = vmul.f32 %v550, %v585
      %v590 = vmul.f32 %v552, %v586
      %v591 = vmul.f32 %v554, %v587
      %v592 = vmul.f32 %v556, %v588
      %v594 = vsel %vm516, %v589, 0
      %596 = vmatprep.subr.mxu0 0.0
      %597 = vmatpush1.msra.mxu0 %v215
      %598 = vmatprep.subr.mxu0 0.0
      %599 = vmatpush1.msra.mxu0 0.0
      %600 = vmatprep.subr.mxu0 0.0
      %601 = vmatpush1.msra.mxu0 0.0
      %602 = vmatprep.subr.mxu0 0.0
      %603 = vmatpush1.msra.mxu0 0.0
      %604 = vmatprep.subr.mxu0 0.0
      %605 = vmatpush1.msra.mxu0 0.0
      %606 = vmatprep.subr.mxu0 0.0
      %607 = vmatpush1.msra.mxu0 0.0
      %608 = vmatprep.subr.mxu0 0.0
      %609 = vmatpush1.msra.mxu0 0.0
      %610 = vmatprep.subr.mxu0 0.0
      %611 = vmatpush1.msra.mxu0 0.0
      %612 = vmatprep.subr.mxu0 0.0
      %613 = vmatpush1.msra.mxu0 0.0
      %614 = vmatprep.subr.mxu0 0.0
      %615 = vmatpush1.msra.mxu0 0.0
      %616 = vmatprep.subr.mxu0 0.0
      %617 = vmatpush1.msra.mxu0 0.0
      %618 = vmatprep.subr.mxu0 0.0
      %619 = vmatpush1.msra.mxu0 0.0
      %620 = vmatprep.subr.mxu0 0.0
      %621 = vmatpush1.msra.mxu0 0.0
      %622 = vmatprep.subr.mxu0 0.0
      %623 = vmatpush1.msra.mxu0 0.0
      %624 = vmatprep.subr.mxu0 0.0
      %625 = vmatpush1.msra.mxu0 0.0
      %626 = vmatprep.subr.mxu0 0.0
      %627 = vmatpush1.msra.mxu0 0.0
      %628 = vmatprep.subr.mxu0 0.0
      %629 = vmatpush1.msra.mxu0 0.0
      %630 = vmatprep.subr.mxu0 0.0
      %631 = vmatpush1.msra.mxu0 0.0
      %632 = vmatprep.subr.mxu0 0.0
      %633 = vmatpush1.msra.mxu0 0.0
      %634 = vmatprep.subr.mxu0 0.0
      %635 = vmatpush1.msra.mxu0 0.0
      %636 = vmatprep.subr.mxu0 0.0
      %637 = vmatpush1.msra.mxu0 0.0
      %638 = vmatprep.subr.mxu0 0.0
      %639 = vmatpush1.msra.mxu0 0.0
      %640 = vmatprep.subr.mxu0 0.0
      %641 = vmatpush1.msra.mxu0 0.0
      %642 = vmatprep.subr.mxu0 0.0
      %643 = vmatpush1.msra.mxu0 0.0
      %644 = vmatprep.subr.mxu0 0.0
      %645 = vmatpush1.msra.mxu0 0.0
      %646 = vmatprep.subr.mxu0 0.0
      %647 = vmatpush1.msra.mxu0 0.0
      %648 = vmatprep.subr.mxu0 0.0
      %649 = vmatpush1.msra.mxu0 0.0
      %650 = vmatprep.subr.mxu0 0.0
      %651 = vmatpush1.msra.mxu0 0.0
      %652 = vmatprep.subr.mxu0 0.0
      %653 = vmatpush1.msra.mxu0 0.0
      %654 = vmatprep.subr.mxu0 0.0
      %655 = vmatpush1.msra.mxu0 0.0
      %656 = vmatprep.subr.mxu0 0.0
      %657 = vmatpush1.msra.mxu0 0.0
      %658 = vmatprep.subr.mxu0 0.0
      %659 = vmatpush1.msra.mxu0 0.0
      %660 = vmatprep.mubr.f32.mxu0 0.0
      %661 = vmatmul.mubr.f32.gmra.mrb[0].mxu0 %v594
      %v662 = vpop.f32.mrb[0].mxu0
      %v663 = vadd.f32 0.0, %v662
      %v664 = vpop.f32.mrb[0].mxu0
      %665 = vdwg.mxu0
      %v667 = vsel %vm516, %v590, 0
      %669 = vmatprep.subr.mxu0 0.0
      %670 = vmatpush1.msra.mxu0 %v216
      %671 = vmatprep.subr.mxu0 0.0
      %672 = vmatpush1.msra.mxu0 0.0
      %673 = vmatprep.subr.mxu0 0.0
      %674 = vmatpush1.msra.mxu0 0.0
      %675 = vmatprep.subr.mxu0 0.0
      %676 = vmatpush1.msra.mxu0 0.0
      %677 = vmatprep.subr.mxu0 0.0
      %678 = vmatpush1.msra.mxu0 0.0
      %679 = vmatprep.subr.mxu0 0.0
      %680 = vmatpush1.msra.mxu0 0.0
      %681 = vmatprep.subr.mxu0 0.0
      %682 = vmatpush1.msra.mxu0 0.0
      %683 = vmatprep.subr.mxu0 0.0
      %684 = vmatpush1.msra.mxu0 0.0
      %685 = vmatprep.subr.mxu0 0.0
      %686 = vmatpush1.msra.mxu0 0.0
      %687 = vmatprep.subr.mxu0 0.0
      %688 = vmatpush1.msra.mxu0 0.0
      %689 = vmatprep.subr.mxu0 0.0
      %690 = vmatpush1.msra.mxu0 0.0
      %691 = vmatprep.subr.mxu0 0.0
      %692 = vmatpush1.msra.mxu0 0.0
      %693 = vmatprep.subr.mxu0 0.0
      %694 = vmatpush1.msra.mxu0 0.0
      %695 = vmatprep.subr.mxu0 0.0
      %696 = vmatpush1.msra.mxu0 0.0
      %697 = vmatprep.subr.mxu0 0.0
      %698 = vmatpush1.msra.mxu0 0.0
      %699 = vmatprep.subr.mxu0 0.0
      %700 = vmatpush1.msra.mxu0 0.0
      %701 = vmatprep.subr.mxu0 0.0
      %702 = vmatpush1.msra.mxu0 0.0
      %703 = vmatprep.subr.mxu0 0.0
      %704 = vmatpush1.msra.mxu0 0.0
      %705 = vmatprep.subr.mxu0 0.0
      %706 = vmatpush1.msra.mxu0 0.0
      %707 = vmatprep.subr.mxu0 0.0
      %708 = vmatpush1.msra.mxu0 0.0
      %709 = vmatprep.subr.mxu0 0.0
      %710 = vmatpush1.msra.mxu0 0.0
      %711 = vmatprep.subr.mxu0 0.0
      %712 = vmatpush1.msra.mxu0 0.0
      %713 = vmatprep.subr.mxu0 0.0
      %714 = vmatpush1.msra.mxu0 0.0
      %715 = vmatprep.subr.mxu0 0.0
      %716 = vmatpush1.msra.mxu0 0.0
      %717 = vmatprep.subr.mxu0 0.0
      %718 = vmatpush1.msra.mxu0 0.0
      %719 = vmatprep.subr.mxu0 0.0
      %720 = vmatpush1.msra.mxu0 0.0
      %721 = vmatprep.subr.mxu0 0.0
      %722 = vmatpush1.msra.mxu0 0.0
      %723 = vmatprep.subr.mxu0 0.0
      %724 = vmatpush1.msra.mxu0 0.0
      %725 = vmatprep.subr.mxu0 0.0
      %726 = vmatpush1.msra.mxu0 0.0
      %727 = vmatprep.subr.mxu0 0.0
      %728 = vmatpush1.msra.mxu0 0.0
      %729 = vmatprep.subr.mxu0 0.0
      %730 = vmatpush1.msra.mxu0 0.0
      %731 = vmatprep.subr.mxu0 0.0
      %732 = vmatpush1.msra.mxu0 0.0
      %733 = vmatprep.mubr.f32.mxu0 0.0
      %734 = vmatmul.mubr.f32.gmra.mrb[0].mxu0 %v667
      %v735 = vpop.f32.mrb[0].mxu0
      %v736 = vadd.f32 0.0, %v735
      %v737 = vpop.f32.mrb[0].mxu0
      %738 = vdwg.mxu0
      %v740 = vsel %vm516, %v591, 0
      %742 = vmatprep.subr.mxu0 0.0
      %743 = vmatpush1.msra.mxu0 %v217
      %744 = vmatprep.subr.mxu0 0.0
      %745 = vmatpush1.msra.mxu0 0.0
      %746 = vmatprep.subr.mxu0 0.0
      %747 = vmatpush1.msra.mxu0 0.0
      %748 = vmatprep.subr.mxu0 0.0
      %749 = vmatpush1.msra.mxu0 0.0
      %750 = vmatprep.subr.mxu0 0.0
      %751 = vmatpush1.msra.mxu0 0.0
      %752 = vmatprep.subr.mxu0 0.0
      %753 = vmatpush1.msra.mxu0 0.0
      %754 = vmatprep.subr.mxu0 0.0
      %755 = vmatpush1.msra.mxu0 0.0
      %756 = vmatprep.subr.mxu0 0.0
      %757 = vmatpush1.msra.mxu0 0.0
      %758 = vmatprep.subr.mxu0 0.0
      %759 = vmatpush1.msra.mxu0 0.0
      %760 = vmatprep.subr.mxu0 0.0
      %761 = vmatpush1.msra.mxu0 0.0
      %762 = vmatprep.subr.mxu0 0.0
      %763 = vmatpush1.msra.mxu0 0.0
      %764 = vmatprep.subr.mxu0 0.0
      %765 = vmatpush1.msra.mxu0 0.0
      %766 = vmatprep.subr.mxu0 0.0
      %767 = vmatpush1.msra.mxu0 0.0
      %768 = vmatprep.subr.mxu0 0.0
      %769 = vmatpush1.msra.mxu0 0.0
      %770 = vmatprep.subr.mxu0 0.0
      %771 = vmatpush1.msra.mxu0 0.0
      %772 = vmatprep.subr.mxu0 0.0
      %773 = vmatpush1.msra.mxu0 0.0
      %774 = vmatprep.subr.mxu0 0.0
      %775 = vmatpush1.msra.mxu0 0.0
      %776 = vmatprep.subr.mxu0 0.0
      %777 = vmatpush1.msra.mxu0 0.0
      %778 = vmatprep.subr.mxu0 0.0
      %779 = vmatpush1.msra.mxu0 0.0
      %780 = vmatprep.subr.mxu0 0.0
      %781 = vmatpush1.msra.mxu0 0.0
      %782 = vmatprep.subr.mxu0 0.0
      %783 = vmatpush1.msra.mxu0 0.0
      %784 = vmatprep.subr.mxu0 0.0
      %785 = vmatpush1.msra.mxu0 0.0
      %786 = vmatprep.subr.mxu0 0.0
      %787 = vmatpush1.msra.mxu0 0.0
      %788 = vmatprep.subr.mxu0 0.0
      %789 = vmatpush1.msra.mxu0 0.0
      %790 = vmatprep.subr.mxu0 0.0
      %791 = vmatpush1.msra.mxu0 0.0
      %792 = vmatprep.subr.mxu0 0.0
      %793 = vmatpush1.msra.mxu0 0.0
      %794 = vmatprep.subr.mxu0 0.0
      %795 = vmatpush1.msra.mxu0 0.0
      %796 = vmatprep.subr.mxu0 0.0
      %797 = vmatpush1.msra.mxu0 0.0
      %798 = vmatprep.subr.mxu0 0.0
      %799 = vmatpush1.msra.mxu0 0.0
      %800 = vmatprep.subr.mxu0 0.0
      %801 = vmatpush1.msra.mxu0 0.0
      %802 = vmatprep.subr.mxu0 0.0
      %803 = vmatpush1.msra.mxu0 0.0
      %804 = vmatprep.subr.mxu0 0.0
      %805 = vmatpush1.msra.mxu0 0.0
      %806 = vmatprep.mubr.f32.mxu0 0.0
      %807 = vmatmul.mubr.f32.gmra.mrb[0].mxu0 %v740
      %v808 = vpop.f32.mrb[0].mxu0
      %v809 = vadd.f32 0.0, %v808
      %v810 = vpop.f32.mrb[0].mxu0
      %811 = vdwg.mxu0
      %v813 = vsel %vm516, %v592, 0
      %815 = vmatprep.subr.mxu0 0.0
      %816 = vmatpush1.msra.mxu0 %v218
      %817 = vmatprep.subr.mxu0 0.0
      %818 = vmatpush1.msra.mxu0 0.0
      %819 = vmatprep.subr.mxu0 0.0
      %820 = vmatpush1.msra.mxu0 0.0
      %821 = vmatprep.subr.mxu0 0.0
      %822 = vmatpush1.msra.mxu0 0.0
      %823 = vmatprep.subr.mxu0 0.0
      %824 = vmatpush1.msra.mxu0 0.0
      %825 = vmatprep.subr.mxu0 0.0
      %826 = vmatpush1.msra.mxu0 0.0
      %827 = vmatprep.subr.mxu0 0.0
      %828 = vmatpush1.msra.mxu0 0.0
      %829 = vmatprep.subr.mxu0 0.0
      %830 = vmatpush1.msra.mxu0 0.0
      %831 = vmatprep.subr.mxu0 0.0
      %832 = vmatpush1.msra.mxu0 0.0
      %833 = vmatprep.subr.mxu0 0.0
      %834 = vmatpush1.msra.mxu0 0.0
      %835 = vmatprep.subr.mxu0 0.0
      %836 = vmatpush1.msra.mxu0 0.0
      %837 = vmatprep.subr.mxu0 0.0
      %838 = vmatpush1.msra.mxu0 0.0
      %839 = vmatprep.subr.mxu0 0.0
      %840 = vmatpush1.msra.mxu0 0.0
      %841 = vmatprep.subr.mxu0 0.0
      %842 = vmatpush1.msra.mxu0 0.0
      %843 = vmatprep.subr.mxu0 0.0
      %844 = vmatpush1.msra.mxu0 0.0
      %845 = vmatprep.subr.mxu0 0.0
      %846 = vmatpush1.msra.mxu0 0.0
      %847 = vmatprep.subr.mxu0 0.0
      %848 = vmatpush1.msra.mxu0 0.0
      %849 = vmatprep.subr.mxu0 0.0
      %850 = vmatpush1.msra.mxu0 0.0
      %851 = vmatprep.subr.mxu0 0.0
      %852 = vmatpush1.msra.mxu0 0.0
      %853 = vmatprep.subr.mxu0 0.0
      %854 = vmatpush1.msra.mxu0 0.0
      %855 = vmatprep.subr.mxu0 0.0
      %856 = vmatpush1.msra.mxu0 0.0
      %857 = vmatprep.subr.mxu0 0.0
      %858 = vmatpush1.msra.mxu0 0.0
      %859 = vmatprep.subr.mxu0 0.0
      %860 = vmatpush1.msra.mxu0 0.0
      %861 = vmatprep.subr.mxu0 0.0
      %862 = vmatpush1.msra.mxu0 0.0
      %863 = vmatprep.subr.mxu0 0.0
      %864 = vmatpush1.msra.mxu0 0.0
      %865 = vmatprep.subr.mxu0 0.0
      %866 = vmatpush1.msra.mxu0 0.0
      %867 = vmatprep.subr.mxu0 0.0
      %868 = vmatpush1.msra.mxu0 0.0
      %869 = vmatprep.subr.mxu0 0.0
      %870 = vmatpush1.msra.mxu0 0.0
      %871 = vmatprep.subr.mxu0 0.0
      %872 = vmatpush1.msra.mxu0 0.0
      %873 = vmatprep.subr.mxu0 0.0
      %874 = vmatpush1.msra.mxu0 0.0
      %875 = vmatprep.subr.mxu0 0.0
      %876 = vmatpush1.msra.mxu0 0.0
      %877 = vmatprep.subr.mxu0 0.0
      %878 = vmatpush1.msra.mxu0 0.0
      %879 = vmatprep.mubr.f32.mxu0 0.0
      %880 = vmatmul.mubr.f32.gmra.mrb[0].mxu0 %v813
      %v881 = vpop.f32.mrb[0].mxu0
      %v882 = vadd.f32 0.0, %v881
      %v883 = vpop.f32.mrb[0].mxu0
      %884 = vdwg.mxu0
      %885 = vst.msk [vmem:[%s210] sm:$0xff] %vm516, %v663
      %886 = vst.msk [vmem:[%s210 + $0x8] sm:$0xff] %vm516, %v736
      %887 = vst.msk [vmem:[%s210 + $0x10] sm:$0xff] %vm516, %v809
      %888 = vst.msk [vmem:[%s210 + $0x18] sm:$0xff] %vm516, %v882
      %p889 = scmp.lt.s32.totalorder %s14, 15
      %s890 = scalar_select %p889, %s14, 15
      %s891 = smul.addr %s890, 4
      %s892 = smul.addr %s891, 8
      %s893 = scalar_lea.vmem %s3, %s892
      // Predicated region
      $region33: #{_lambda_.7} parent=31 // pred_check
        %p894 = pneg %p110
      $region34: #{_lambda_.7} parent=31 // pred_check_branch
        %896 = sbr.rel (%p894) target = $region36
      $region35: #{_lambda_.7} parent=31 // pred_region
        _
      $region36: #{_lambda_.7} parent=31 // pred_fallthru
        _
    $region32: #{_lambda_.7} parent=5 // pred_fallthru
      _
    %p897 = scmp.le.s32.totalorder 2, %s9
    // Predicated region
    $region37: #{_lambda_.7} parent=5 // pred_check
      %p898 = pneg %p897
    $region38: #{_lambda_.7} parent=5 // pred_check_branch
      %900 = sbr.rel (%p898) target = $region40
    $region39: #{_lambda_.7} parent=5 // pred_region
      %s901 = ssub.s32 %s9, 2
      // Predicated region
      $region41: #{_lambda_.7} parent=39 // pred_check
        %p902 = pneg %p116
      $region42: #{_lambda_.7} parent=39 // pred_check_branch
        %904 = sbr.rel (%p902) target = $region44
      $region43: #{_lambda_.7} parent=39 // pred_region
        %p905 = scmp.lt.s32.totalorder %s15, 15
        %s906 = scalar_select %p905, %s15, 15
        %s907 = smul.addr %s906, 4
        %s908 = smul.addr %s907, 8
        %s909 = scalar_lea.vmem %s3, %s908
      $region44: #{_lambda_.7} parent=39 // pred_fallthru
        _
    $region40: #{_lambda_.7} parent=5 // pred_fallthru
      _
  $region6: #{_lambda_.7} parent=0 // loop_footer
    %s13 = sadd.s32 1, %s9
  $region7: #{_lambda_.7} parent=0 // loop_footer_branch
    %8 = sbr.rel target = $region3
  $region8: #{_lambda_.7} parent=0 // loop_exit
    _

// kernel: _lambda_.8
$region0: #{_lambda_.8}
  #allocation0 [shape = 'u32[]', space=smem, size = 0x4, offset = 0x4, fixed_abs, tag = 'smem constant byte address 0x4 - core index']
  #allocation1 [shape = 'u32[144,128]{1,0:T(1,128)}', space=vmem, size = 0x12000, scoped, tag = 'internal scratch']
  #allocation2 [shape = 'f32[1,1]{1,0:T(1,128)S(1)}', space=vmem, size = 0x200, scoped, tag = 'scoped memory for _lambda_.8']
  %s0 = inlined_call_operand.vmem [shape: f32[16,8,32], index: 0, kind: input, shape index: {}]
  %s1 = inlined_call_operand.vmem [shape: f32[32,16], index: 1, kind: input, shape index: {}]
  %s2 = inlined_call_operand.vmem [shape: f32[1,16], index: 2, kind: input, shape index: {}]
  %s3 = inlined_call_operand.vmem [shape: f32[16,1], index: 3, kind: input, shape index: {}]
  %s4 = inlined_call_operand.<no memory space> [shape: f32[1,1], index: 4, kind: input, shape index: {}]
  %s5 = inlined_call_operand.vmem [shape: f32[16,1,32], index: 5, kind: output, shape index: {}]
  %s6 = sld [smem:[#allocation0]]
  $region53: #{_lambda_.8} parent=0
    _
  %s8 = ssub.s32 1, %s6
  %s9 = scalar_select 0, %s8, %s6
  %v10 = vstv %s4
  %11 = vst [vmem:[#allocation2] sm:$0x1] %v10
  loop: start=0, step=1, limit=18
  $region2: #{_lambda_.8} parent=0 // loop_pre_header
    _
  $region3: #{_lambda_.8} parent=0 // loop_header
    %s13 = sphi 0, %s17
    %p14 = scmp.ge.s32.totalorder %s13, 18
    %s23 = sphi 0, %s25
    %s26 = sphi 0, %s23
    %s27 = sphi 0, %s26
    %s43 = sphi 0, %s27
    %s47 = sphi 0, %s47
    %s49 = sphi 0, %s47
    %s50 = sphi 0, %s49
    %s64 = sphi 0, %s50
    %s68 = sphi 0, %s68
    %s70 = sphi 0, %s68
    %s71 = sphi 0, %s70
    %s85 = sphi 0, %s71
    %s89 = sphi 0, %s89
    %s91 = sphi 0, %s89
    %s92 = sphi 0, %s91
    %s106 = sphi 0, %s92
    %s110 = sphi 0, %s110
    %s112 = sphi 0, %s110
    %s113 = sphi 0, %s112
    %s127 = sphi 0, %s113
    %s133 = sphi 0, %s135
    %s136 = sphi 0, %s133
    %s137 = sphi 0, %s136
    %s153 = sphi 0, %s137
  $region4: #{_lambda_.8} parent=0 // loop_header_branch
    %16 = sbr.rel (%p14) target = $region8
  $region5: #{_lambda_.8} parent=0 // loop_body
    %s18 = ssub.s32 %s13, 1
    %s19 = ssub.s32 %s13, 2
    %s20 = sadd.s32 %s13, 1
    %s21 = ssub.s32 %s13, %s20
    %p22 = scmp.eq.s32.totalorder %s21, 0
    %s24 = sadd.s32 %s23, 1
    %s25 = scalar_select %p22, %s23, %s24
    %p28 = pneg %p22
    %p29 = scmp.eq.s32.totalorder %s13, 15
    %p30 = por %p28, %p29
    %p31 = scmp.ne.s32.totalorder %s23, %s26
    %p32 = scmp.eq.s32.totalorder %s13, 0
    %p33 = por %p31, %p32
    %p34 = scmp.ne.s32.totalorder %s23, %s26
    %p35 = scmp.eq.s32.totalorder %s18, 15
    %p36 = por %p34, %p35
    %p37 = scmp.ne.s32.totalorder %s26, %s27
    %p38 = scmp.eq.s32.totalorder %s18, 0
    %p39 = por %p37, %p38
    %p40 = scmp.ne.s32.totalorder %s26, %s27
    %p41 = scmp.eq.s32.totalorder %s19, 15
    %p42 = por %p40, %p41
    %p44 = scmp.ne.s32.totalorder %s27, %s43
    %p45 = scmp.eq.s32.totalorder %s19, 0
    %p46 = por %p44, %p45
    %s48 = sadd.s32 %s47, 1
    %p51 = scmp.eq.s32.totalorder %s13, 15
    %p52 = scmp.ne.s32.totalorder %s47, %s49
    %p53 = scmp.eq.s32.totalorder %s13, 0
    %p54 = por %p52, %p53
    %p55 = scmp.ne.s32.totalorder %s47, %s49
    %p56 = scmp.eq.s32.totalorder %s18, 15
    %p57 = por %p55, %p56
    %p58 = scmp.ne.s32.totalorder %s49, %s50
    %p59 = scmp.eq.s32.totalorder %s18, 0
    %p60 = por %p58, %p59
    %p61 = scmp.ne.s32.totalorder %s49, %s50
    %p62 = scmp.eq.s32.totalorder %s19, 15
    %p63 = por %p61, %p62
    %p65 = scmp.ne.s32.totalorder %s50, %s64
    %p66 = scmp.eq.s32.totalorder %s19, 0
    %p67 = por %p65, %p66
    %s69 = sadd.s32 %s68, 1
    %p72 = scmp.eq.s32.totalorder %s13, 15
    %p73 = scmp.ne.s32.totalorder %s68, %s70
    %p74 = scmp.eq.s32.totalorder %s13, 0
    %p75 = por %p73, %p74
    %p76 = scmp.ne.s32.totalorder %s68, %s70
    %p77 = scmp.eq.s32.totalorder %s18, 15
    %p78 = por %p76, %p77
    %p79 = scmp.ne.s32.totalorder %s70, %s71
    %p80 = scmp.eq.s32.totalorder %s18, 0
    %p81 = por %p79, %p80
    %p82 = scmp.ne.s32.totalorder %s70, %s71
    %p83 = scmp.eq.s32.totalorder %s19, 15
    %p84 = por %p82, %p83
    %p86 = scmp.ne.s32.totalorder %s71, %s85
    %p87 = scmp.eq.s32.totalorder %s19, 0
    %p88 = por %p86, %p87
    %s90 = sadd.s32 %s89, 1
    %p93 = scmp.eq.s32.totalorder %s13, 15
    %p94 = scmp.ne.s32.totalorder %s89, %s91
    %p95 = scmp.eq.s32.totalorder %s13, 0
    %p96 = por %p94, %p95
    %p97 = scmp.ne.s32.totalorder %s89, %s91
    %p98 = scmp.eq.s32.totalorder %s18, 15
    %p99 = por %p97, %p98
    %p100 = scmp.ne.s32.totalorder %s91, %s92
    %p101 = scmp.eq.s32.totalorder %s18, 0
    %p102 = por %p100, %p101
    %p103 = scmp.ne.s32.totalorder %s91, %s92
    %p104 = scmp.eq.s32.totalorder %s19, 15
    %p105 = por %p103, %p104
    %p107 = scmp.ne.s32.totalorder %s92, %s106
    %p108 = scmp.eq.s32.totalorder %s19, 0
    %p109 = por %p107, %p108
    %s111 = sadd.s32 %s110, 1
    %p114 = scmp.eq.s32.totalorder %s13, 15
    %p115 = scmp.ne.s32.totalorder %s110, %s112
    %p116 = scmp.eq.s32.totalorder %s13, 0
    %p117 = por %p115, %p116
    %p118 = scmp.ne.s32.totalorder %s110, %s112
    %p119 = scmp.eq.s32.totalorder %s18, 15
    %p120 = por %p118, %p119
    %p121 = scmp.ne.s32.totalorder %s112, %s113
    %p122 = scmp.eq.s32.totalorder %s18, 0
    %p123 = por %p121, %p122
    %p124 = scmp.ne.s32.totalorder %s112, %s113
    %p125 = scmp.eq.s32.totalorder %s19, 15
    %p126 = por %p124, %p125
    %p128 = scmp.ne.s32.totalorder %s113, %s127
    %p129 = scmp.eq.s32.totalorder %s19, 0
    %p130 = por %p128, %p129
    %s131 = ssub.s32 %s13, %s20
    %p132 = scmp.eq.s32.totalorder %s131, 0
    %s134 = sadd.s32 %s133, 1
    %s135 = scalar_select %p132, %s133, %s134
    %p138 = pneg %p132
    %p139 = scmp.eq.s32.totalorder %s13, 15
    %p140 = por %p138, %p139
    %p141 = scmp.ne.s32.totalorder %s133, %s136
    %p142 = scmp.eq.s32.totalorder %s13, 0
    %p143 = por %p141, %p142
    %p144 = scmp.ne.s32.totalorder %s133, %s136
    %p145 = scmp.eq.s32.totalorder %s18, 15
    %p146 = por %p144, %p145
    %p147 = scmp.ne.s32.totalorder %s136, %s137
    %p148 = scmp.eq.s32.totalorder %s18, 0
    %p149 = por %p147, %p148
    %p150 = scmp.ne.s32.totalorder %s136, %s137
    %p151 = scmp.eq.s32.totalorder %s19, 15
    %p152 = por %p150, %p151
    %p154 = scmp.ne.s32.totalorder %s137, %s153
    %p155 = scmp.eq.s32.totalorder %s19, 0
    %p156 = por %p154, %p155
    %p157 = scmp.le.s32.totalorder 1, %s13
    %p158 = scmp.lt.s32.totalorder %s13, 17
    %p159 = pnand %p157, %p158
    %p160 = pneg %p159
    // Predicated region
    $region9: #{_lambda_.8} parent=5 // pred_check
      _
    $region10: #{_lambda_.8} parent=5 // pred_check_branch
      %162 = sbr.rel (%p159) target = $region12
    $region11: #{_lambda_.8} parent=5 // pred_region
      %s163 = ssub.s32 %s13, 1
      // Predicated region
      $region13: #{_lambda_.8} parent=11 // pred_check
        %p164 = pneg %p60
      $region14: #{_lambda_.8} parent=11 // pred_check_branch
        %166 = sbr.rel (%p164) target = $region16
      $region15: #{_lambda_.8} parent=11 // pred_region
        _
      $region16: #{_lambda_.8} parent=11 // pred_fallthru
        _
      // Predicated region
      $region17: #{_lambda_.8} parent=11 // pred_check
        %p167 = pneg %p81
      $region18: #{_lambda_.8} parent=11 // pred_check_branch
        %169 = sbr.rel (%p167) target = $region20
      $region19: #{_lambda_.8} parent=11 // pred_region
        _
      $region20: #{_lambda_.8} parent=11 // pred_fallthru
        _
      // Predicated region
      $region21: #{_lambda_.8} parent=11 // pred_check
        %p170 = pneg %p102
      $region22: #{_lambda_.8} parent=11 // pred_check_branch
        %172 = sbr.rel (%p170) target = $region24
      $region23: #{_lambda_.8} parent=11 // pred_region
        _
      $region24: #{_lambda_.8} parent=11 // pred_fallthru
        _
      // Predicated region
      $region25: #{_lambda_.8} parent=11 // pred_check
        %p173 = pneg %p123
      $region26: #{_lambda_.8} parent=11 // pred_check_branch
        %175 = sbr.rel (%p173) target = $region28
      $region27: #{_lambda_.8} parent=11 // pred_region
        _
      $region28: #{_lambda_.8} parent=11 // pred_fallthru
        _
    $region12: #{_lambda_.8} parent=5 // pred_fallthru
      _
    %p176 = scmp.lt.s32.totalorder %s13, 16
    // Predicated region
    $region29: #{_lambda_.8} parent=5 // pred_check
      %p177 = pneg %p176
    $region30: #{_lambda_.8} parent=5 // pred_check_branch
      %179 = sbr.rel (%p177) target = $region32
    $region31: #{_lambda_.8} parent=5 // pred_region
      // Predicated region
      $region33: #{_lambda_.8} parent=31 // pred_check
        %p180 = pneg %p33
      $region34: #{_lambda_.8} parent=31 // pred_check_branch
        %182 = sbr.rel (%p180) target = $region36
      $region35: #{_lambda_.8} parent=31 // pred_region
        %p183 = scmp.lt.s32.totalorder %s13, 15
        %s184 = scalar_select %p183, %s13, 15
        %s185 = smul.addr %s184, 8
        %s186 = scalar_lea.vmem %s0, %s185
      $region36: #{_lambda_.8} parent=31 // pred_fallthru
        _
    $region32: #{_lambda_.8} parent=5 // pred_fallthru
      _
    %p187 = scmp.le.s32.totalorder 1, %s13
    %p188 = scmp.lt.s32.totalorder %s13, 17
    %p189 = pnand %p187, %p188
    %p190 = pneg %p189
    // Predicated region
    $region37: #{_lambda_.8} parent=5 // pred_check
      _
    $region38: #{_lambda_.8} parent=5 // pred_check_branch
      %192 = sbr.rel (%p189) target = $region40
    $region39: #{_lambda_.8} parent=5 // pred_region
      %s193 = ssub.s32 %s13, 1
      %p194 = scmp.lt.s32.totalorder %s18, 15
      %s195 = scalar_select %p194, %s18, 15
      %s196 = smul.addr %s195, 8
      %s197 = scalar_lea.vmem %s0, %s196
      %p198 = pneg %p39
      %p199 = pneg %p36
      %p200 = pneg %p60
      %p201 = pneg %p57
      %p202 = pneg %p81
      %p203 = pneg %p78
      %p204 = pneg %p102
      %p205 = pneg %p99
      %p206 = pneg %p123
      %p207 = pneg %p120
      %p208 = pneg %p149
      %p209 = pneg %p146
      %p210 = scmp.lt.s32.totalorder %s18, 15
      %s211 = scalar_select %p210, %s18, 15
      %s212 = scalar_lea.vmem %s5, %s211
      %p213 = scmp.lt.s32.totalorder %s18, 15
      %s214 = scalar_select %p213, %s18, 15
      %s215 = smul.addr %s214, 8
      %s216 = scalar_lea.vmem %s0, %s215
      %p217 = scmp.lt.s32.totalorder %s18, 15
      %s218 = scalar_select %p217, %s18, 15
      %s219 = scalar_lea.vmem %s5, %s218
      %v220 = vld [vmem:[%s216] sm:$0xff]
      %v221 = vld [vmem:[%s1] sm:$0xff]
      %v222 = vld [vmem:[%s1 + $0x8] sm:$0xff]
      %v223 = vld [vmem:[%s1 + $0x10] sm:$0xff]
      %v224 = vld [vmem:[%s1 + $0x18] sm:$0xff]
      %v225 = vld [vmem:[%s2] sm:$0x1]
      %v227 = vlaneseq
      %v228 = vshrl.u32 %v227, 7
      %v229 = vsub.s32 0, %v228
      %v230 = vrot.slane %v225, %v229
      %vm232 = vcmask 261120
      %v234 = vsel %vm232, %v220, 0
      %236 = vmatprep.subr.mxu0 0.0
      %237 = vmatpush1.msra.mxu0 %v221
      %238 = vmatprep.subr.mxu0 0.0
      %239 = vmatpush1.msra.mxu0 %v222
      %240 = vmatprep.subr.mxu0 0.0
      %241 = vmatpush1.msra.mxu0 %v223
      %242 = vmatprep.subr.mxu0 0.0
      %243 = vmatpush1.msra.mxu0 %v224
      %244 = vmatprep.subr.mxu0 0.0
      %245 = vmatpush1.msra.mxu0 0.0
      %246 = vmatprep.subr.mxu0 0.0
      %247 = vmatpush1.msra.mxu0 0.0
      %248 = vmatprep.subr.mxu0 0.0
      %249 = vmatpush1.msra.mxu0 0.0
      %250 = vmatprep.subr.mxu0 0.0
      %251 = vmatpush1.msra.mxu0 0.0
      %252 = vmatprep.subr.mxu0 0.0
      %253 = vmatpush1.msra.mxu0 0.0
      %254 = vmatprep.subr.mxu0 0.0
      %255 = vmatpush1.msra.mxu0 0.0
      %256 = vmatprep.subr.mxu0 0.0
      %257 = vmatpush1.msra.mxu0 0.0
      %258 = vmatprep.subr.mxu0 0.0
      %259 = vmatpush1.msra.mxu0 0.0
      %260 = vmatprep.subr.mxu0 0.0
      %261 = vmatpush1.msra.mxu0 0.0
      %262 = vmatprep.subr.mxu0 0.0
      %263 = vmatpush1.msra.mxu0 0.0
      %264 = vmatprep.subr.mxu0 0.0
      %265 = vmatpush1.msra.mxu0 0.0
      %266 = vmatprep.subr.mxu0 0.0
      %267 = vmatpush1.msra.mxu0 0.0
      %268 = vmatprep.subr.mxu0 0.0
      %269 = vmatpush1.msra.mxu0 0.0
      %270 = vmatprep.subr.mxu0 0.0
      %271 = vmatpush1.msra.mxu0 0.0
      %272 = vmatprep.subr.mxu0 0.0
      %273 = vmatpush1.msra.mxu0 0.0
      %274 = vmatprep.subr.mxu0 0.0
      %275 = vmatpush1.msra.mxu0 0.0
      %276 = vmatprep.subr.mxu0 0.0
      %277 = vmatpush1.msra.mxu0 0.0
      %278 = vmatprep.subr.mxu0 0.0
      %279 = vmatpush1.msra.mxu0 0.0
      %280 = vmatprep.subr.mxu0 0.0
      %281 = vmatpush1.msra.mxu0 0.0
      %282 = vmatprep.subr.mxu0 0.0
      %283 = vmatpush1.msra.mxu0 0.0
      %284 = vmatprep.subr.mxu0 0.0
      %285 = vmatpush1.msra.mxu0 0.0
      %286 = vmatprep.subr.mxu0 0.0
      %287 = vmatpush1.msra.mxu0 0.0
      %288 = vmatprep.subr.mxu0 0.0
      %289 = vmatpush1.msra.mxu0 0.0
      %290 = vmatprep.subr.mxu0 0.0
      %291 = vmatpush1.msra.mxu0 0.0
      %292 = vmatprep.subr.mxu0 0.0
      %293 = vmatpush1.msra.mxu0 0.0
      %294 = vmatprep.subr.mxu0 0.0
      %295 = vmatpush1.msra.mxu0 0.0
      %296 = vmatprep.subr.mxu0 0.0
      %297 = vmatpush1.msra.mxu0 0.0
      %298 = vmatprep.subr.mxu0 0.0
      %299 = vmatpush1.msra.mxu0 0.0
      %300 = vmatprep.mubr.f32.mxu0 0.0
      %301 = vmatmul.mubr.f32.gmra.mrb[0].mxu0 %v234
      %v302 = vpop.f32.mrb[0].mxu0
      %v303 = vadd.f32 %v230, %v302
      %v304 = vpop.f32.mrb[0].mxu0
      %305 = vdwg.mxu0
      %v306 = vtanh.pop %v303
      %v307 = vld [vmem:[%s3] sm:$0xff]
      %v308 = vld [vmem:[%s3 + $0x8] sm:$0xff]
      %v309 = vld [vmem:[#allocation2] sm:$0x1]
      %v311 = vlaneseq
      %v312 = vshrl.u32 %v311, 7
      %v313 = vsub.s32 0, %v312
      %v314 = vrot.slane %v309, %v313
      %vm316 = vcmask 130048
      %v318 = vsel %vm316, %v306, 0
      %320 = vmatprep.subr.mxu0 0.0
      %321 = vmatpush1.msra.mxu0 %v307
      %322 = vmatprep.subr.mxu0 0.0
      %323 = vmatpush1.msra.mxu0 %v308
      %324 = vmatprep.subr.mxu0 0.0
      %325 = vmatpush1.msra.mxu0 0.0
      %326 = vmatprep.subr.mxu0 0.0
      %327 = vmatpush1.msra.mxu0 0.0
      %328 = vmatprep.subr.mxu0 0.0
      %329 = vmatpush1.msra.mxu0 0.0
      %330 = vmatprep.subr.mxu0 0.0
      %331 = vmatpush1.msra.mxu0 0.0
      %332 = vmatprep.subr.mxu0 0.0
      %333 = vmatpush1.msra.mxu0 0.0
      %334 = vmatprep.subr.mxu0 0.0
      %335 = vmatpush1.msra.mxu0 0.0
      %336 = vmatprep.subr.mxu0 0.0
      %337 = vmatpush1.msra.mxu0 0.0
      %338 = vmatprep.subr.mxu0 0.0
      %339 = vmatpush1.msra.mxu0 0.0
      %340 = vmatprep.subr.mxu0 0.0
      %341 = vmatpush1.msra.mxu0 0.0
      %342 = vmatprep.subr.mxu0 0.0
      %343 = vmatpush1.msra.mxu0 0.0
      %344 = vmatprep.subr.mxu0 0.0
      %345 = vmatpush1.msra.mxu0 0.0
      %346 = vmatprep.subr.mxu0 0.0
      %347 = vmatpush1.msra.mxu0 0.0
      %348 = vmatprep.subr.mxu0 0.0
      %349 = vmatpush1.msra.mxu0 0.0
      %350 = vmatprep.subr.mxu0 0.0
      %351 = vmatpush1.msra.mxu0 0.0
      %352 = vmatprep.subr.mxu0 0.0
      %353 = vmatpush1.msra.mxu0 0.0
      %354 = vmatprep.subr.mxu0 0.0
      %355 = vmatpush1.msra.mxu0 0.0
      %356 = vmatprep.subr.mxu0 0.0
      %357 = vmatpush1.msra.mxu0 0.0
      %358 = vmatprep.subr.mxu0 0.0
      %359 = vmatpush1.msra.mxu0 0.0
      %360 = vmatprep.subr.mxu0 0.0
      %361 = vmatpush1.msra.mxu0 0.0
      %362 = vmatprep.subr.mxu0 0.0
      %363 = vmatpush1.msra.mxu0 0.0
      %364 = vmatprep.subr.mxu0 0.0
      %365 = vmatpush1.msra.mxu0 0.0
      %366 = vmatprep.subr.mxu0 0.0
      %367 = vmatpush1.msra.mxu0 0.0
      %368 = vmatprep.subr.mxu0 0.0
      %369 = vmatpush1.msra.mxu0 0.0
      %370 = vmatprep.subr.mxu0 0.0
      %371 = vmatpush1.msra.mxu0 0.0
      %372 = vmatprep.subr.mxu0 0.0
      %373 = vmatpush1.msra.mxu0 0.0
      %374 = vmatprep.subr.mxu0 0.0
      %375 = vmatpush1.msra.mxu0 0.0
      %376 = vmatprep.subr.mxu0 0.0
      %377 = vmatpush1.msra.mxu0 0.0
      %378 = vmatprep.subr.mxu0 0.0
      %379 = vmatpush1.msra.mxu0 0.0
      %380 = vmatprep.subr.mxu0 0.0
      %381 = vmatpush1.msra.mxu0 0.0
      %382 = vmatprep.subr.mxu0 0.0
      %383 = vmatpush1.msra.mxu0 0.0
      %384 = vmatprep.mubr.f32.mxu0 0.0
      %385 = vmatmul.mubr.f32.gmra.mrb[0].mxu0 %v318
      %v386 = vpop.f32.mrb[0].mxu0
      %v387 = vadd.f32 %v314, %v386
      %v388 = vpop.f32.mrb[0].mxu0
      %389 = vdwg.mxu0
      %vm390 = vcmask 7168
      %v391 = vsel %vm390, %v387, -inf
      %v392 = vrot.slane %v391, 4
      %v393 = vmax.f32 %v391, %v392
      %v394 = vrot.slane %v393, 2
      %v395 = vmax.f32 %v393, %v394
      %v396 = vrot.slane %v395, 1
      %v397 = vmax.f32 %v395, %v396
      %v398 = vsub.f32 %v387, %v397
      %v399 = vmul.f32 %v398, 1.442695
      %v400 = vpow.pop %v399
      %v401 = vsel %vm390, %v400, 0.0
      %v402 = vrot.slane %v401, 4
      %v403 = vadd.f32 %v401, %v402
      %v404 = vrot.slane %v403, 2
      %v405 = vadd.f32 %v403, %v404
      %v406 = vrot.slane %v405, 1
      %v407 = vadd.f32 %v405, %v406
      %v408 = vrcp.pop %v407
      %v409 = vmul.f32 %v400, %v408
      %411 = vset.pattern.permute.xlu0 0
      %412 = vperm.xlu0 %411, %v409
      %v413 = vpop.permute.xlu0 %412
      %v415 = vmul.f32 %v413, %v220
      %v416 = vsel %vm232, %v415, 0.0
      %v417 = vrot.slane %v416, 4
      %v418 = vadd.f32 %v416, %v417
      %v419 = vrot.slane %v418, 2
      %v420 = vadd.f32 %v418, %v419
      %v421 = vrot.slane %v420, 1
      %v422 = vadd.f32 %v420, %v421
      %vm423 = vcmask 253952
      %424 = vst.msk [vmem:[%s219] sm:$0x1] %vm423, %v422
      %p425 = scmp.lt.s32.totalorder %s18, 15
      %s426 = scalar_select %p425, %s18, 15
      %s427 = scalar_lea.vmem %s5, %s426
      // Predicated region
      $region41: #{_lambda_.8} parent=39 // pred_check
        %p428 = pneg %p146
      $region42: #{_lambda_.8} parent=39 // pred_check_branch
        %430 = sbr.rel (%p428) target = $region44
      $region43: #{_lambda_.8} parent=39 // pred_region
        _
      $region44: #{_lambda_.8} parent=39 // pred_fallthru
        _
    $region40: #{_lambda_.8} parent=5 // pred_fallthru
      _
    %p431 = scmp.le.s32.totalorder 2, %s13
    // Predicated region
    $region45: #{_lambda_.8} parent=5 // pred_check
      %p432 = pneg %p431
    $region46: #{_lambda_.8} parent=5 // pred_check_branch
      %434 = sbr.rel (%p432) target = $region48
    $region47: #{_lambda_.8} parent=5 // pred_region
      %s435 = ssub.s32 %s13, 2
      // Predicated region
      $region49: #{_lambda_.8} parent=47 // pred_check
        %p436 = pneg %p152
      $region50: #{_lambda_.8} parent=47 // pred_check_branch
        %438 = sbr.rel (%p436) target = $region52
      $region51: #{_lambda_.8} parent=47 // pred_region
        %p439 = scmp.lt.s32.totalorder %s19, 15
        %s440 = scalar_select %p439, %s19, 15
        %s441 = scalar_lea.vmem %s5, %s440
      $region52: #{_lambda_.8} parent=47 // pred_fallthru
        _
    $region48: #{_lambda_.8} parent=5 // pred_fallthru
      _
  $region6: #{_lambda_.8} parent=0 // loop_footer
    %s17 = sadd.s32 1, %s13
  $region7: #{_lambda_.8} parent=0 // loop_footer_branch
    %12 = sbr.rel target = $region3
  $region8: #{_lambda_.8} parent=0 // loop_exit
    _

// kernel: _lambda_.9
$region0: #{_lambda_.9}
  #allocation0 [shape = 'u32[]', space=smem, size = 0x4, offset = 0x4, fixed_abs, tag = 'smem constant byte address 0x4 - core index']
  #allocation1 [shape = 'u32[144,128]{1,0:T(1,128)}', space=vmem, size = 0x12000, scoped, tag = 'internal scratch']
  %s0 = inlined_call_operand.vmem [shape: f32[16,32], index: 0, kind: input, shape index: {}]
  %s1 = inlined_call_operand.vmem [shape: f32[16,32], index: 1, kind: input, shape index: {}]
  %s2 = inlined_call_operand.vmem [shape: f32[32,128], index: 2, kind: input, shape index: {}]
  %s3 = inlined_call_operand.vmem [shape: f32[1,128], index: 3, kind: input, shape index: {}]
  %s4 = inlined_call_operand.vmem [shape: f32[32,32], index: 4, kind: input, shape index: {}]
  %s5 = inlined_call_operand.vmem [shape: f32[1,32], index: 5, kind: input, shape index: {}]
  %s6 = inlined_call_operand.vmem [shape: f32[16,32], index: 6, kind: output, shape index: {0}]
  %s7 = inlined_call_operand.vmem [shape: f32[16,128], index: 7, kind: output, shape index: {1}]
  %s8 = inlined_call_operand.vmem [shape: f32[16,32], index: 8, kind: output, shape index: {2}]
  %9 = xla_tuple %s6, %s7, %s8
  %s10 = sld [smem:[#allocation0]]
  $region50: #{_lambda_.9} parent=0
    _
  %s12 = ssub.s32 1, %s10
  %s13 = scalar_select 0, %s12, %s10
  // Predicated region
  $region2: #{_lambda_.9} parent=0 // pred_check
    _
  $region3: #{_lambda_.9} parent=0 // pred_check_branch
    %15 = sbr.rel (0) target = $region5
  $region4: #{_lambda_.9} parent=0 // pred_region
    _
  $region5: #{_lambda_.9} parent=0 // pred_fallthru
    _
  // Predicated region
  $region6: #{_lambda_.9} parent=0 // pred_check
    _
  $region7: #{_lambda_.9} parent=0 // pred_check_branch
    %17 = sbr.rel (0) target = $region9
  $region8: #{_lambda_.9} parent=0 // pred_region
    _
  $region9: #{_lambda_.9} parent=0 // pred_fallthru
    _
  // Predicated region
  $region10: #{_lambda_.9} parent=0 // pred_check
    _
  $region11: #{_lambda_.9} parent=0 // pred_check_branch
    %19 = sbr.rel (0) target = $region13
  $region12: #{_lambda_.9} parent=0 // pred_region
    _
  $region13: #{_lambda_.9} parent=0 // pred_fallthru
    _
  // Predicated region
  $region14: #{_lambda_.9} parent=0 // pred_check
    _
  $region15: #{_lambda_.9} parent=0 // pred_check_branch
    %21 = sbr.rel (0) target = $region17
  $region16: #{_lambda_.9} parent=0 // pred_region
    _
  $region17: #{_lambda_.9} parent=0 // pred_fallthru
    _
  // Predicated region
  $region18: #{_lambda_.9} parent=0 // pred_check
    _
  $region19: #{_lambda_.9} parent=0 // pred_check_branch
    %23 = sbr.rel (0) target = $region21
  $region20: #{_lambda_.9} parent=0 // pred_region
    _
  $region21: #{_lambda_.9} parent=0 // pred_fallthru
    _
  // Predicated region
  $region22: #{_lambda_.9} parent=0 // pred_check
    _
  $region23: #{_lambda_.9} parent=0 // pred_check_branch
    %25 = sbr.rel (0) target = $region25
  $region24: #{_lambda_.9} parent=0 // pred_region
    _
  $region25: #{_lambda_.9} parent=0 // pred_fallthru
    _
  %v26 = vld [vmem:[%s0] sm:$0xff]
  %v27 = vld [vmem:[%s0 + $0x8] sm:$0xff]
  %v28 = vld [vmem:[%s1] sm:$0xff]
  %v29 = vld [vmem:[%s1 + $0x8] sm:$0xff]
  %v30 = vadd.f32 %v26, %v28
  %v31 = vadd.f32 %v27, %v29
  %vm32 = vcmask 261120
  %33 = vst.msk [vmem:[%s6] sm:$0xff] %vm32, %v30
  %34 = vst.msk [vmem:[%s6 + $0x8] sm:$0xff] %vm32, %v31
  %v35 = vld [vmem:[%s2] sm:$0xff]
  %v36 = vld [vmem:[%s2 + $0x8] sm:$0xff]
  %v37 = vld [vmem:[%s2 + $0x10] sm:$0xff]
  %v38 = vld [vmem:[%s2 + $0x18] sm:$0xff]
  %v39 = vld [vmem:[%s3] sm:$0x1]
  %v41 = vlaneseq
  %v42 = vshrl.u32 %v41, 7
  %v43 = vsub.s32 0, %v42
  %v44 = vrot.slane %v39, %v43
  %v47 = vsel %vm32, %v30, 0
  %v50 = vsel %vm32, %v31, 0
  %52 = vmatprep.subr.mxu0 0.0
  %53 = vmatpush1.msra.mxu0 %v35
  %54 = vmatprep.subr.mxu0 0.0
  %55 = vmatpush1.msra.mxu0 %v36
  %56 = vmatprep.subr.mxu0 0.0
  %57 = vmatpush1.msra.mxu0 %v37
  %58 = vmatprep.subr.mxu0 0.0
  %59 = vmatpush1.msra.mxu0 %v38
  %60 = vmatprep.subr.mxu0 0.0
  %61 = vmatpush1.msra.mxu0 0.0
  %62 = vmatprep.subr.mxu0 0.0
  %63 = vmatpush1.msra.mxu0 0.0
  %64 = vmatprep.subr.mxu0 0.0
  %65 = vmatpush1.msra.mxu0 0.0
  %66 = vmatprep.subr.mxu0 0.0
  %67 = vmatpush1.msra.mxu0 0.0
  %68 = vmatprep.subr.mxu0 0.0
  %69 = vmatpush1.msra.mxu0 0.0
  %70 = vmatprep.subr.mxu0 0.0
  %71 = vmatpush1.msra.mxu0 0.0
  %72 = vmatprep.subr.mxu0 0.0
  %73 = vmatpush1.msra.mxu0 0.0
  %74 = vmatprep.subr.mxu0 0.0
  %75 = vmatpush1.msra.mxu0 0.0
  %76 = vmatprep.subr.mxu0 0.0
  %77 = vmatpush1.msra.mxu0 0.0
  %78 = vmatprep.subr.mxu0 0.0
  %79 = vmatpush1.msra.mxu0 0.0
  %80 = vmatprep.subr.mxu0 0.0
  %81 = vmatpush1.msra.mxu0 0.0
  %82 = vmatprep.subr.mxu0 0.0
  %83 = vmatpush1.msra.mxu0 0.0
  %84 = vmatprep.subr.mxu0 0.0
  %85 = vmatpush1.msra.mxu0 0.0
  %86 = vmatprep.subr.mxu0 0.0
  %87 = vmatpush1.msra.mxu0 0.0
  %88 = vmatprep.subr.mxu0 0.0
  %89 = vmatpush1.msra.mxu0 0.0
  %90 = vmatprep.subr.mxu0 0.0
  %91 = vmatpush1.msra.mxu0 0.0
  %92 = vmatprep.subr.mxu0 0.0
  %93 = vmatpush1.msra.mxu0 0.0
  %94 = vmatprep.subr.mxu0 0.0
  %95 = vmatpush1.msra.mxu0 0.0
  %96 = vmatprep.subr.mxu0 0.0
  %97 = vmatpush1.msra.mxu0 0.0
  %98 = vmatprep.subr.mxu0 0.0
  %99 = vmatpush1.msra.mxu0 0.0
  %100 = vmatprep.subr.mxu0 0.0
  %101 = vmatpush1.msra.mxu0 0.0
  %102 = vmatprep.subr.mxu0 0.0
  %103 = vmatpush1.msra.mxu0 0.0
  %104 = vmatprep.subr.mxu0 0.0
  %105 = vmatpush1.msra.mxu0 0.0
  %106 = vmatprep.subr.mxu0 0.0
  %107 = vmatpush1.msra.mxu0 0.0
  %108 = vmatprep.subr.mxu0 0.0
  %109 = vmatpush1.msra.mxu0 0.0
  %110 = vmatprep.subr.mxu0 0.0
  %111 = vmatpush1.msra.mxu0 0.0
  %112 = vmatprep.subr.mxu0 0.0
  %113 = vmatpush1.msra.mxu0 0.0
  %114 = vmatprep.subr.mxu0 0.0
  %115 = vmatpush1.msra.mxu0 0.0
  %116 = vmatprep.mubr.f32.mxu0 0.0
  %117 = vmatmul.mubr.f32.gmra.mrb[0].mxu0 %v47
  %v118 = vpop.f32.mrb[0].mxu0
  %v119 = vadd.f32 %v44, %v118
  %v120 = vpop.f32.mrb[0].mxu0
  %121 = vmatprep.mubr.f32.mxu0 0.0
  %122 = vmatmul.mubr.f32.gmra.mrb[0].mxu0 %v50
  %v123 = vpop.f32.mrb[0].mxu0
  %v124 = vadd.f32 %v44, %v123
  %v125 = vpop.f32.mrb[0].mxu0
  %126 = vdwg.mxu0
  %127 = vst [vmem:[%s7] sm:$0xff] %v119
  %128 = vst [vmem:[%s7 + $0x8] sm:$0xff] %v124
  %v129 = vld [vmem:[%s4] sm:$0xff]
  %v130 = vld [vmem:[%s4 + $0x8] sm:$0xff]
  %v131 = vld [vmem:[%s4 + $0x10] sm:$0xff]
  %v132 = vld [vmem:[%s4 + $0x18] sm:$0xff]
  %v133 = vld [vmem:[%s5] sm:$0x1]
  %v135 = vlaneseq
  %v136 = vshrl.u32 %v135, 7
  %v137 = vsub.s32 0, %v136
  %v138 = vrot.slane %v133, %v137
  %140 = vmatprep.subr.mxu0 0.0
  %141 = vmatpush1.msra.mxu0 %v129
  %142 = vmatprep.subr.mxu0 0.0
  %143 = vmatpush1.msra.mxu0 %v130
  %144 = vmatprep.subr.mxu0 0.0
  %145 = vmatpush1.msra.mxu0 %v131
  %146 = vmatprep.subr.mxu0 0.0
  %147 = vmatpush1.msra.mxu0 %v132
  %148 = vmatprep.subr.mxu0 0.0
  %149 = vmatpush1.msra.mxu0 0.0
  %150 = vmatprep.subr.mxu0 0.0
  %151 = vmatpush1.msra.mxu0 0.0
  %152 = vmatprep.subr.mxu0 0.0
  %153 = vmatpush1.msra.mxu0 0.0
  %154 = vmatprep.subr.mxu0 0.0
  %155 = vmatpush1.msra.mxu0 0.0
  %156 = vmatprep.subr.mxu0 0.0
  %157 = vmatpush1.msra.mxu0 0.0
  %158 = vmatprep.subr.mxu0 0.0
  %159 = vmatpush1.msra.mxu0 0.0
  %160 = vmatprep.subr.mxu0 0.0
  %161 = vmatpush1.msra.mxu0 0.0
  %162 = vmatprep.subr.mxu0 0.0
  %163 = vmatpush1.msra.mxu0 0.0
  %164 = vmatprep.subr.mxu0 0.0
  %165 = vmatpush1.msra.mxu0 0.0
  %166 = vmatprep.subr.mxu0 0.0
  %167 = vmatpush1.msra.mxu0 0.0
  %168 = vmatprep.subr.mxu0 0.0
  %169 = vmatpush1.msra.mxu0 0.0
  %170 = vmatprep.subr.mxu0 0.0
  %171 = vmatpush1.msra.mxu0 0.0
  %172 = vmatprep.subr.mxu0 0.0
  %173 = vmatpush1.msra.mxu0 0.0
  %174 = vmatprep.subr.mxu0 0.0
  %175 = vmatpush1.msra.mxu0 0.0
  %176 = vmatprep.subr.mxu0 0.0
  %177 = vmatpush1.msra.mxu0 0.0
  %178 = vmatprep.subr.mxu0 0.0
  %179 = vmatpush1.msra.mxu0 0.0
  %180 = vmatprep.subr.mxu0 0.0
  %181 = vmatpush1.msra.mxu0 0.0
  %182 = vmatprep.subr.mxu0 0.0
  %183 = vmatpush1.msra.mxu0 0.0
  %184 = vmatprep.subr.mxu0 0.0
  %185 = vmatpush1.msra.mxu0 0.0
  %186 = vmatprep.subr.mxu0 0.0
  %187 = vmatpush1.msra.mxu0 0.0
  %188 = vmatprep.subr.mxu0 0.0
  %189 = vmatpush1.msra.mxu0 0.0
  %190 = vmatprep.subr.mxu0 0.0
  %191 = vmatpush1.msra.mxu0 0.0
  %192 = vmatprep.subr.mxu0 0.0
  %193 = vmatpush1.msra.mxu0 0.0
  %194 = vmatprep.subr.mxu0 0.0
  %195 = vmatpush1.msra.mxu0 0.0
  %196 = vmatprep.subr.mxu0 0.0
  %197 = vmatpush1.msra.mxu0 0.0
  %198 = vmatprep.subr.mxu0 0.0
  %199 = vmatpush1.msra.mxu0 0.0
  %200 = vmatprep.subr.mxu0 0.0
  %201 = vmatpush1.msra.mxu0 0.0
  %202 = vmatprep.subr.mxu0 0.0
  %203 = vmatpush1.msra.mxu0 0.0
  %204 = vmatprep.mubr.f32.mxu0 0.0
  %205 = vmatmul.mubr.f32.gmra.mrb[0].mxu0 %v47
  %v206 = vpop.f32.mrb[0].mxu0
  %v207 = vadd.f32 %v138, %v206
  %v208 = vpop.f32.mrb[0].mxu0
  %209 = vmatprep.mubr.f32.mxu0 0.0
  %210 = vmatmul.mubr.f32.gmra.mrb[0].mxu0 %v50
  %v211 = vpop.f32.mrb[0].mxu0
  %v212 = vadd.f32 %v138, %v211
  %v213 = vpop.f32.mrb[0].mxu0
  %214 = vdwg.mxu0
  %215 = vst.msk [vmem:[%s8] sm:$0xff] %vm32, %v207
  %216 = vst.msk [vmem:[%s8 + $0x8] sm:$0xff] %vm32, %v212
  // Predicated region
  $region26: #{_lambda_.9} parent=0 // pred_check
    _
  $region27: #{_lambda_.9} parent=0 // pred_check_branch
    %218 = sbr.rel (0) target = $region29
  $region28: #{_lambda_.9} parent=0 // pred_region
    _
  $region29: #{_lambda_.9} parent=0 // pred_fallthru
    _
  // Predicated region
  $region30: #{_lambda_.9} parent=0 // pred_check
    _
  $region31: #{_lambda_.9} parent=0 // pred_check_branch
    %220 = sbr.rel (0) target = $region33
  $region32: #{_lambda_.9} parent=0 // pred_region
    _
  $region33: #{_lambda_.9} parent=0 // pred_fallthru
    _
  // Predicated region
  $region34: #{_lambda_.9} parent=0 // pred_check
    _
  $region35: #{_lambda_.9} parent=0 // pred_check_branch
    %222 = sbr.rel (0) target = $region37
  $region36: #{_lambda_.9} parent=0 // pred_region
    _
  $region37: #{_lambda_.9} parent=0 // pred_fallthru
    _
  // Predicated region
  $region38: #{_lambda_.9} parent=0 // pred_check
    _
  $region39: #{_lambda_.9} parent=0 // pred_check_branch
    %224 = sbr.rel (0) target = $region41
  $region40: #{_lambda_.9} parent=0 // pred_region
    _
  $region41: #{_lambda_.9} parent=0 // pred_fallthru
    _
  // Predicated region
  $region42: #{_lambda_.9} parent=0 // pred_check
    _
  $region43: #{_lambda_.9} parent=0 // pred_check_branch
    %226 = sbr.rel (0) target = $region45
  $region44: #{_lambda_.9} parent=0 // pred_region
    _
  $region45: #{_lambda_.9} parent=0 // pred_fallthru
    _
  // Predicated region
  $region46: #{_lambda_.9} parent=0 // pred_check
    _
  $region47: #{_lambda_.9} parent=0 // pred_check_branch
    %228 = sbr.rel (0) target = $region49
  $region48: #{_lambda_.9} parent=0 // pred_region
    _
  $region49: #{_lambda_.9} parent=0 // pred_fallthru
    _

// kernel: _lambda_.11
$region0: #{_lambda_.11}
  #allocation0 [shape = 'u32[]', space=smem, size = 0x4, offset = 0x4, fixed_abs, tag = 'smem constant byte address 0x4 - core index']
  #allocation1 [shape = 'u32[144,128]{1,0:T(1,128)}', space=vmem, size = 0x12000, scoped, tag = 'internal scratch']
  #allocation2 [shape = 'f32[1,1]{1,0:T(1,128)S(1)}', space=vmem, size = 0x200, scoped, tag = 'scoped memory for _lambda_.11']
  %s0 = inlined_call_operand.vmem [shape: f32[2,8,32], index: 0, kind: input, shape index: {}]
  %s1 = inlined_call_operand.vmem [shape: f32[32,16], index: 1, kind: input, shape index: {}]
  %s2 = inlined_call_operand.vmem [shape: f32[1,16], index: 2, kind: input, shape index: {}]
  %s3 = inlined_call_operand.vmem [shape: f32[16,1], index: 3, kind: input, shape index: {}]
  %s4 = inlined_call_operand.<no memory space> [shape: f32[1,1], index: 4, kind: input, shape index: {}]
  %s5 = inlined_call_operand.hbm [shape: f32[2,1,32], index: 5, kind: output, shape index: {}]
  %s6 = sld [smem:[#allocation0]]
  $region53: #{_lambda_.11} parent=0
    _
  %s8 = ssub.s32 1, %s6
  %s9 = scalar_select 0, %s8, %s6
  %v10 = vstv %s4
  %11 = vst [vmem:[#allocation2] sm:$0x1] %v10
  $region1: #{_lambda_.11} parent=0
    #allocation3 [shape = 'u8[1024]{0}', space=vmem, size = 0x400, scoped, tag = 'output window, operand 0']
    #allocation4 [shape = 's32[2]{0}', space=sflag, size = 0x8, scoped, tag = 'scoped memory for _lambda_.11']
    %12 = vsyncpa [#allocation4], 0
    %s13 = scalar_lea.sflag [#allocation4], 1
    %14 = vsyncpa %s13, 0
    loop: start=0, step=1, limit=4
    $region2: #{_lambda_.11} parent=1 // loop_pre_header
      _
    $region3: #{_lambda_.11} parent=1 // loop_header
      %s16 = sphi 0, %s20
      %p17 = scmp.ge.s32.totalorder %s16, 4
      %s26 = sphi 0, %s28
      %s29 = sphi 0, %s26
      %s30 = sphi 0, %s29
      %s46 = sphi 0, %s30
      %s50 = sphi 0, %s50
      %s52 = sphi 0, %s50
      %s53 = sphi 0, %s52
      %s67 = sphi 0, %s53
      %s71 = sphi 0, %s71
      %s73 = sphi 0, %s71
      %s74 = sphi 0, %s73
      %s88 = sphi 0, %s74
      %s92 = sphi 0, %s92
      %s94 = sphi 0, %s92
      %s95 = sphi 0, %s94
      %s109 = sphi 0, %s95
      %s113 = sphi 0, %s113
      %s115 = sphi 0, %s113
      %s116 = sphi 0, %s115
      %s130 = sphi 0, %s116
      %s136 = sphi 0, %s138
      %s139 = sphi 0, %s136
      %s140 = sphi 0, %s139
      %s156 = sphi 0, %s140
    $region4: #{_lambda_.11} parent=1 // loop_header_branch
      %19 = sbr.rel (%p17) target = $region8
    $region5: #{_lambda_.11} parent=1 // loop_body
      %s21 = ssub.s32 %s16, 1
      %s22 = ssub.s32 %s16, 2
      %s23 = sadd.s32 %s16, 1
      %s24 = ssub.s32 %s16, %s23
      %p25 = scmp.eq.s32.totalorder %s24, 0
      %s27 = sadd.s32 %s26, 1
      %s28 = scalar_select %p25, %s26, %s27
      %p31 = pneg %p25
      %p32 = scmp.eq.s32.totalorder %s16, 1
      %p33 = por %p31, %p32
      %p34 = scmp.ne.s32.totalorder %s26, %s29
      %p35 = scmp.eq.s32.totalorder %s16, 0
      %p36 = por %p34, %p35
      %p37 = scmp.ne.s32.totalorder %s26, %s29
      %p38 = scmp.eq.s32.totalorder %s21, 1
      %p39 = por %p37, %p38
      %p40 = scmp.ne.s32.totalorder %s29, %s30
      %p41 = scmp.eq.s32.totalorder %s21, 0
      %p42 = por %p40, %p41
      %p43 = scmp.ne.s32.totalorder %s29, %s30
      %p44 = scmp.eq.s32.totalorder %s22, 1
      %p45 = por %p43, %p44
      %p47 = scmp.ne.s32.totalorder %s30, %s46
      %p48 = scmp.eq.s32.totalorder %s22, 0
      %p49 = por %p47, %p48
      %s51 = sadd.s32 %s50, 1
      %p54 = scmp.eq.s32.totalorder %s16, 1
      %p55 = scmp.ne.s32.totalorder %s50, %s52
      %p56 = scmp.eq.s32.totalorder %s16, 0
      %p57 = por %p55, %p56
      %p58 = scmp.ne.s32.totalorder %s50, %s52
      %p59 = scmp.eq.s32.totalorder %s21, 1
      %p60 = por %p58, %p59
      %p61 = scmp.ne.s32.totalorder %s52, %s53
      %p62 = scmp.eq.s32.totalorder %s21, 0
      %p63 = por %p61, %p62
      %p64 = scmp.ne.s32.totalorder %s52, %s53
      %p65 = scmp.eq.s32.totalorder %s22, 1
      %p66 = por %p64, %p65
      %p68 = scmp.ne.s32.totalorder %s53, %s67
      %p69 = scmp.eq.s32.totalorder %s22, 0
      %p70 = por %p68, %p69
      %s72 = sadd.s32 %s71, 1
      %p75 = scmp.eq.s32.totalorder %s16, 1
      %p76 = scmp.ne.s32.totalorder %s71, %s73
      %p77 = scmp.eq.s32.totalorder %s16, 0
      %p78 = por %p76, %p77
      %p79 = scmp.ne.s32.totalorder %s71, %s73
      %p80 = scmp.eq.s32.totalorder %s21, 1
      %p81 = por %p79, %p80
      %p82 = scmp.ne.s32.totalorder %s73, %s74
      %p83 = scmp.eq.s32.totalorder %s21, 0
      %p84 = por %p82, %p83
      %p85 = scmp.ne.s32.totalorder %s73, %s74
      %p86 = scmp.eq.s32.totalorder %s22, 1
      %p87 = por %p85, %p86
      %p89 = scmp.ne.s32.totalorder %s74, %s88
      %p90 = scmp.eq.s32.totalorder %s22, 0
      %p91 = por %p89, %p90
      %s93 = sadd.s32 %s92, 1
      %p96 = scmp.eq.s32.totalorder %s16, 1
      %p97 = scmp.ne.s32.totalorder %s92, %s94
      %p98 = scmp.eq.s32.totalorder %s16, 0
      %p99 = por %p97, %p98
      %p100 = scmp.ne.s32.totalorder %s92, %s94
      %p101 = scmp.eq.s32.totalorder %s21, 1
      %p102 = por %p100, %p101
      %p103 = scmp.ne.s32.totalorder %s94, %s95
      %p104 = scmp.eq.s32.totalorder %s21, 0
      %p105 = por %p103, %p104
      %p106 = scmp.ne.s32.totalorder %s94, %s95
      %p107 = scmp.eq.s32.totalorder %s22, 1
      %p108 = por %p106, %p107
      %p110 = scmp.ne.s32.totalorder %s95, %s109
      %p111 = scmp.eq.s32.totalorder %s22, 0
      %p112 = por %p110, %p111
      %s114 = sadd.s32 %s113, 1
      %p117 = scmp.eq.s32.totalorder %s16, 1
      %p118 = scmp.ne.s32.totalorder %s113, %s115
      %p119 = scmp.eq.s32.totalorder %s16, 0
      %p120 = por %p118, %p119
      %p121 = scmp.ne.s32.totalorder %s113, %s115
      %p122 = scmp.eq.s32.totalorder %s21, 1
      %p123 = por %p121, %p122
      %p124 = scmp.ne.s32.totalorder %s115, %s116
      %p125 = scmp.eq.s32.totalorder %s21, 0
      %p126 = por %p124, %p125
      %p127 = scmp.ne.s32.totalorder %s115, %s116
      %p128 = scmp.eq.s32.totalorder %s22, 1
      %p129 = por %p127, %p128
      %p131 = scmp.ne.s32.totalorder %s116, %s130
      %p132 = scmp.eq.s32.totalorder %s22, 0
      %p133 = por %p131, %p132
      %s134 = ssub.s32 %s16, %s23
      %p135 = scmp.eq.s32.totalorder %s134, 0
      %s137 = sadd.s32 %s136, 1
      %s138 = scalar_select %p135, %s136, %s137
      %p141 = pneg %p135
      %p142 = scmp.eq.s32.totalorder %s16, 1
      %p143 = por %p141, %p142
      %p144 = scmp.ne.s32.totalorder %s136, %s139
      %p145 = scmp.eq.s32.totalorder %s16, 0
      %p146 = por %p144, %p145
      %p147 = scmp.ne.s32.totalorder %s136, %s139
      %p148 = scmp.eq.s32.totalorder %s21, 1
      %p149 = por %p147, %p148
      %p150 = scmp.ne.s32.totalorder %s139, %s140
      %p151 = scmp.eq.s32.totalorder %s21, 0
      %p152 = por %p150, %p151
      %p153 = scmp.ne.s32.totalorder %s139, %s140
      %p154 = scmp.eq.s32.totalorder %s22, 1
      %p155 = por %p153, %p154
      %p157 = scmp.ne.s32.totalorder %s140, %s156
      %p158 = scmp.eq.s32.totalorder %s22, 0
      %p159 = por %p157, %p158
      %p160 = scmp.le.s32.totalorder 1, %s16
      %p161 = scmp.lt.s32.totalorder %s16, 3
      %p162 = pnand %p160, %p161
      %p163 = pneg %p162
      // Predicated region
      $region9: #{_lambda_.11} parent=5 // pred_check
        _
      $region10: #{_lambda_.11} parent=5 // pred_check_branch
        %165 = sbr.rel (%p162) target = $region12
      $region11: #{_lambda_.11} parent=5 // pred_region
        %s166 = ssub.s32 %s16, 1
        // Predicated region
        $region13: #{_lambda_.11} parent=11 // pred_check
          %p167 = pneg %p63
        $region14: #{_lambda_.11} parent=11 // pred_check_branch
          %169 = sbr.rel (%p167) target = $region16
        $region15: #{_lambda_.11} parent=11 // pred_region
          _
        $region16: #{_lambda_.11} parent=11 // pred_fallthru
          _
        // Predicated region
        $region17: #{_lambda_.11} parent=11 // pred_check
          %p170 = pneg %p84
        $region18: #{_lambda_.11} parent=11 // pred_check_branch
          %172 = sbr.rel (%p170) target = $region20
        $region19: #{_lambda_.11} parent=11 // pred_region
          _
        $region20: #{_lambda_.11} parent=11 // pred_fallthru
          _
        // Predicated region
        $region21: #{_lambda_.11} parent=11 // pred_check
          %p173 = pneg %p105
        $region22: #{_lambda_.11} parent=11 // pred_check_branch
          %175 = sbr.rel (%p173) target = $region24
        $region23: #{_lambda_.11} parent=11 // pred_region
          _
        $region24: #{_lambda_.11} parent=11 // pred_fallthru
          _
        // Predicated region
        $region25: #{_lambda_.11} parent=11 // pred_check
          %p176 = pneg %p126
        $region26: #{_lambda_.11} parent=11 // pred_check_branch
          %178 = sbr.rel (%p176) target = $region28
        $region27: #{_lambda_.11} parent=11 // pred_region
          _
        $region28: #{_lambda_.11} parent=11 // pred_fallthru
          _
      $region12: #{_lambda_.11} parent=5 // pred_fallthru
        _
      %p179 = scmp.lt.s32.totalorder %s16, 2
      // Predicated region
      $region29: #{_lambda_.11} parent=5 // pred_check
        %p180 = pneg %p179
      $region30: #{_lambda_.11} parent=5 // pred_check_branch
        %182 = sbr.rel (%p180) target = $region32
      $region31: #{_lambda_.11} parent=5 // pred_region
        // Predicated region
        $region33: #{_lambda_.11} parent=31 // pred_check
          %p183 = pneg %p36
        $region34: #{_lambda_.11} parent=31 // pred_check_branch
          %185 = sbr.rel (%p183) target = $region36
        $region35: #{_lambda_.11} parent=31 // pred_region
          %p186 = scmp.lt.s32.totalorder %s16, 1
          %s187 = scalar_select %p186, %s16, 1
          %s188 = smul.addr %s187, 8
          %s189 = scalar_lea.vmem %s0, %s188
        $region36: #{_lambda_.11} parent=31 // pred_fallthru
          _
      $region32: #{_lambda_.11} parent=5 // pred_fallthru
        _
      %p190 = scmp.le.s32.totalorder 1, %s16
      %p191 = scmp.lt.s32.totalorder %s16, 3
      %p192 = pnand %p190, %p191
      %p193 = pneg %p192
      // Predicated region
      $region37: #{_lambda_.11} parent=5 // pred_check
        _
      $region38: #{_lambda_.11} parent=5 // pred_check_branch
        %195 = sbr.rel (%p192) target = $region40
      $region39: #{_lambda_.11} parent=5 // pred_region
        %s196 = ssub.s32 %s16, 1
        %p197 = scmp.lt.s32.totalorder %s21, 1
        %s198 = scalar_select %p197, %s21, 1
        %s199 = smul.addr %s198, 8
        %s200 = scalar_lea.vmem %s0, %s199
        %p201 = pneg %p42
        %p202 = pneg %p39
        %p203 = pneg %p63
        %p204 = pneg %p60
        %p205 = pneg %p84
        %p206 = pneg %p81
        %p207 = pneg %p105
        %p208 = pneg %p102
        %p209 = pneg %p126
        %p210 = pneg %p123
        %p211 = pneg %p152
        %p212 = pneg %p149
        %s213 = sand.u32 %s139, 1
        %s214 = scalar_lea.sflag [#allocation4], %s213
        %s215 = sand.u32 %s139, 1
        %s216 = scalar_lea.vmem [#allocation3], %s215
        %p217 = scmp.lt.s32.totalorder %s21, 1
        %s218 = scalar_select %p217, %s21, 1
        %s219 = smul.addr %s218, 8
        %s220 = scalar_lea.vmem %s0, %s219
        %v221 = vld [vmem:[%s220] sm:$0xff]
        %v222 = vld [vmem:[%s1] sm:$0xff]
        %v223 = vld [vmem:[%s1 + $0x8] sm:$0xff]
        %v224 = vld [vmem:[%s1 + $0x10] sm:$0xff]
        %v225 = vld [vmem:[%s1 + $0x18] sm:$0xff]
        %v226 = vld [vmem:[%s2] sm:$0x1]
        %v228 = vlaneseq
        %v229 = vshrl.u32 %v228, 7
        %v230 = vsub.s32 0, %v229
        %v231 = vrot.slane %v226, %v230
        %vm233 = vcmask 261120
        %v235 = vsel %vm233, %v221, 0
        %237 = vmatprep.subr.mxu0 0.0
        %238 = vmatpush1.msra.mxu0 %v222
        %239 = vmatprep.subr.mxu0 0.0
        %240 = vmatpush1.msra.mxu0 %v223
        %241 = vmatprep.subr.mxu0 0.0
        %242 = vmatpush1.msra.mxu0 %v224
        %243 = vmatprep.subr.mxu0 0.0
        %244 = vmatpush1.msra.mxu0 %v225
        %245 = vmatprep.subr.mxu0 0.0
        %246 = vmatpush1.msra.mxu0 0.0
        %247 = vmatprep.subr.mxu0 0.0
        %248 = vmatpush1.msra.mxu0 0.0
        %249 = vmatprep.subr.mxu0 0.0
        %250 = vmatpush1.msra.mxu0 0.0
        %251 = vmatprep.subr.mxu0 0.0
        %252 = vmatpush1.msra.mxu0 0.0
        %253 = vmatprep.subr.mxu0 0.0
        %254 = vmatpush1.msra.mxu0 0.0
        %255 = vmatprep.subr.mxu0 0.0
        %256 = vmatpush1.msra.mxu0 0.0
        %257 = vmatprep.subr.mxu0 0.0
        %258 = vmatpush1.msra.mxu0 0.0
        %259 = vmatprep.subr.mxu0 0.0
        %260 = vmatpush1.msra.mxu0 0.0
        %261 = vmatprep.subr.mxu0 0.0
        %262 = vmatpush1.msra.mxu0 0.0
        %263 = vmatprep.subr.mxu0 0.0
        %264 = vmatpush1.msra.mxu0 0.0
        %265 = vmatprep.subr.mxu0 0.0
        %266 = vmatpush1.msra.mxu0 0.0
        %267 = vmatprep.subr.mxu0 0.0
        %268 = vmatpush1.msra.mxu0 0.0
        %269 = vmatprep.subr.mxu0 0.0
        %270 = vmatpush1.msra.mxu0 0.0
        %271 = vmatprep.subr.mxu0 0.0
        %272 = vmatpush1.msra.mxu0 0.0
        %273 = vmatprep.subr.mxu0 0.0
        %274 = vmatpush1.msra.mxu0 0.0
        %275 = vmatprep.subr.mxu0 0.0
        %276 = vmatpush1.msra.mxu0 0.0
        %277 = vmatprep.subr.mxu0 0.0
        %278 = vmatpush1.msra.mxu0 0.0
        %279 = vmatprep.subr.mxu0 0.0
        %280 = vmatpush1.msra.mxu0 0.0
        %281 = vmatprep.subr.mxu0 0.0
        %282 = vmatpush1.msra.mxu0 0.0
        %283 = vmatprep.subr.mxu0 0.0
        %284 = vmatpush1.msra.mxu0 0.0
        %285 = vmatprep.subr.mxu0 0.0
        %286 = vmatpush1.msra.mxu0 0.0
        %287 = vmatprep.subr.mxu0 0.0
        %288 = vmatpush1.msra.mxu0 0.0
        %289 = vmatprep.subr.mxu0 0.0
        %290 = vmatpush1.msra.mxu0 0.0
        %291 = vmatprep.subr.mxu0 0.0
        %292 = vmatpush1.msra.mxu0 0.0
        %293 = vmatprep.subr.mxu0 0.0
        %294 = vmatpush1.msra.mxu0 0.0
        %295 = vmatprep.subr.mxu0 0.0
        %296 = vmatpush1.msra.mxu0 0.0
        %297 = vmatprep.subr.mxu0 0.0
        %298 = vmatpush1.msra.mxu0 0.0
        %299 = vmatprep.subr.mxu0 0.0
        %300 = vmatpush1.msra.mxu0 0.0
        %301 = vmatprep.mubr.f32.mxu0 0.0
        %302 = vmatmul.mubr.f32.gmra.mrb[0].mxu0 %v235
        %v303 = vpop.f32.mrb[0].mxu0
        %v304 = vadd.f32 %v231, %v303
        %v305 = vpop.f32.mrb[0].mxu0
        %306 = vdwg.mxu0
        %v307 = vtanh.pop %v304
        %v308 = vld [vmem:[%s3] sm:$0xff]
        %v309 = vld [vmem:[%s3 + $0x8] sm:$0xff]
        %v310 = vld [vmem:[#allocation2] sm:$0x1]
        %v312 = vlaneseq
        %v313 = vshrl.u32 %v312, 7
        %v314 = vsub.s32 0, %v313
        %v315 = vrot.slane %v310, %v314
        %vm317 = vcmask 130048
        %v319 = vsel %vm317, %v307, 0
        %321 = vmatprep.subr.mxu0 0.0
        %322 = vmatpush1.msra.mxu0 %v308
        %323 = vmatprep.subr.mxu0 0.0
        %324 = vmatpush1.msra.mxu0 %v309
        %325 = vmatprep.subr.mxu0 0.0
        %326 = vmatpush1.msra.mxu0 0.0
        %327 = vmatprep.subr.mxu0 0.0
        %328 = vmatpush1.msra.mxu0 0.0
        %329 = vmatprep.subr.mxu0 0.0
        %330 = vmatpush1.msra.mxu0 0.0
        %331 = vmatprep.subr.mxu0 0.0
        %332 = vmatpush1.msra.mxu0 0.0
        %333 = vmatprep.subr.mxu0 0.0
        %334 = vmatpush1.msra.mxu0 0.0
        %335 = vmatprep.subr.mxu0 0.0
        %336 = vmatpush1.msra.mxu0 0.0
        %337 = vmatprep.subr.mxu0 0.0
        %338 = vmatpush1.msra.mxu0 0.0
        %339 = vmatprep.subr.mxu0 0.0
        %340 = vmatpush1.msra.mxu0 0.0
        %341 = vmatprep.subr.mxu0 0.0
        %342 = vmatpush1.msra.mxu0 0.0
        %343 = vmatprep.subr.mxu0 0.0
        %344 = vmatpush1.msra.mxu0 0.0
        %345 = vmatprep.subr.mxu0 0.0
        %346 = vmatpush1.msra.mxu0 0.0
        %347 = vmatprep.subr.mxu0 0.0
        %348 = vmatpush1.msra.mxu0 0.0
        %349 = vmatprep.subr.mxu0 0.0
        %350 = vmatpush1.msra.mxu0 0.0
        %351 = vmatprep.subr.mxu0 0.0
        %352 = vmatpush1.msra.mxu0 0.0
        %353 = vmatprep.subr.mxu0 0.0
        %354 = vmatpush1.msra.mxu0 0.0
        %355 = vmatprep.subr.mxu0 0.0
        %356 = vmatpush1.msra.mxu0 0.0
        %357 = vmatprep.subr.mxu0 0.0
        %358 = vmatpush1.msra.mxu0 0.0
        %359 = vmatprep.subr.mxu0 0.0
        %360 = vmatpush1.msra.mxu0 0.0
        %361 = vmatprep.subr.mxu0 0.0
        %362 = vmatpush1.msra.mxu0 0.0
        %363 = vmatprep.subr.mxu0 0.0
        %364 = vmatpush1.msra.mxu0 0.0
        %365 = vmatprep.subr.mxu0 0.0
        %366 = vmatpush1.msra.mxu0 0.0
        %367 = vmatprep.subr.mxu0 0.0
        %368 = vmatpush1.msra.mxu0 0.0
        %369 = vmatprep.subr.mxu0 0.0
        %370 = vmatpush1.msra.mxu0 0.0
        %371 = vmatprep.subr.mxu0 0.0
        %372 = vmatpush1.msra.mxu0 0.0
        %373 = vmatprep.subr.mxu0 0.0
        %374 = vmatpush1.msra.mxu0 0.0
        %375 = vmatprep.subr.mxu0 0.0
        %376 = vmatpush1.msra.mxu0 0.0
        %377 = vmatprep.subr.mxu0 0.0
        %378 = vmatpush1.msra.mxu0 0.0
        %379 = vmatprep.subr.mxu0 0.0
        %380 = vmatpush1.msra.mxu0 0.0
        %381 = vmatprep.subr.mxu0 0.0
        %382 = vmatpush1.msra.mxu0 0.0
        %383 = vmatprep.subr.mxu0 0.0
        %384 = vmatpush1.msra.mxu0 0.0
        %385 = vmatprep.mubr.f32.mxu0 0.0
        %386 = vmatmul.mubr.f32.gmra.mrb[0].mxu0 %v319
        %v387 = vpop.f32.mrb[0].mxu0
        %v388 = vadd.f32 %v315, %v387
        %v389 = vpop.f32.mrb[0].mxu0
        %390 = vdwg.mxu0
        %vm391 = vcmask 7168
        %v392 = vsel %vm391, %v388, -inf
        %v393 = vrot.slane %v392, 4
        %v394 = vmax.f32 %v392, %v393
        %v395 = vrot.slane %v394, 2
        %v396 = vmax.f32 %v394, %v395
        %v397 = vrot.slane %v396, 1
        %v398 = vmax.f32 %v396, %v397
        %v399 = vsub.f32 %v388, %v398
        %v400 = vmul.f32 %v399, 1.442695
        %v401 = vpow.pop %v400
        %v402 = vsel %vm391, %v401, 0.0
        %v403 = vrot.slane %v402, 4
        %v404 = vadd.f32 %v402, %v403
        %v405 = vrot.slane %v404, 2
        %v406 = vadd.f32 %v404, %v405
        %v407 = vrot.slane %v406, 1
        %v408 = vadd.f32 %v406, %v407
        %v409 = vrcp.pop %v408
        %v410 = vmul.f32 %v401, %v409
        %412 = vset.pattern.permute.xlu0 0
        %413 = vperm.xlu0 %412, %v410
        %v414 = vpop.permute.xlu0 %413
        %v416 = vmul.f32 %v414, %v221
        %v417 = vsel %vm233, %v416, 0.0
        %v418 = vrot.slane %v417, 4
        %v419 = vadd.f32 %v417, %v418
        %v420 = vrot.slane %v419, 2
        %v421 = vadd.f32 %v419, %v420
        %v422 = vrot.slane %v421, 1
        %v423 = vadd.f32 %v421, %v422
        %vm424 = vcmask 253952
        %425 = vst.msk [vmem:[%s216] sm:$0x1] %vm424, %v423
        %s426 = sand.u32 %s139, 1
        %s427 = scalar_lea.sflag [#allocation4], %s426
        %s428 = sand.u32 %s139, 1
        %s429 = scalar_lea.vmem [#allocation3], %s428
        // Predicated region
        $region41: #{_lambda_.11} parent=39 // pred_check
          %p430 = pneg %p149
        $region42: #{_lambda_.11} parent=39 // pred_check_branch
          %432 = sbr.rel (%p430) target = $region44
        $region43: #{_lambda_.11} parent=39 // pred_region
          %s434 = ssub.s32 16, 16
          %435 = vsyncadd %s427, %s434
          %s436 = smul.addr %s21, 16
          %s437 = scalar_lea.hbm %s5, %s436
          %s439 = sshll.u32 %s429, 4
          %s440 = int_to_ptr.vmem [resolvable:$true] %s439
          %442 = dma.vmem_to_hbm [thread:$0]  %s440, 16, %s437, %s427
        $region44: #{_lambda_.11} parent=39 // pred_fallthru
          _
      $region40: #{_lambda_.11} parent=5 // pred_fallthru
        _
      %p443 = scmp.le.s32.totalorder 2, %s16
      // Predicated region
      $region45: #{_lambda_.11} parent=5 // pred_check
        %p444 = pneg %p443
      $region46: #{_lambda_.11} parent=5 // pred_check_branch
        %446 = sbr.rel (%p444) target = $region48
      $region47: #{_lambda_.11} parent=5 // pred_region
        %s447 = ssub.s32 %s16, 2
        // Predicated region
        $region49: #{_lambda_.11} parent=47 // pred_check
          %p448 = pneg %p155
        $region50: #{_lambda_.11} parent=47 // pred_check_branch
          %450 = sbr.rel (%p448) target = $region52
        $region51: #{_lambda_.11} parent=47 // pred_region
          %s451 = sand.u32 %s140, 1
          %s452 = scalar_lea.sflag [#allocation4], %s451
          %s453 = sand.u32 %s140, 1
          %s454 = scalar_lea.vmem [#allocation3], %s453
          %455 = dma.done %s452, 16
        $region52: #{_lambda_.11} parent=47 // pred_fallthru
          _
      $region48: #{_lambda_.11} parent=5 // pred_fallthru
        _
    $region6: #{_lambda_.11} parent=1 // loop_footer
      %s20 = sadd.s32 1, %s16
    $region7: #{_lambda_.11} parent=1 // loop_footer_branch
      %15 = sbr.rel target = $region3
    $region8: #{_lambda_.11} parent=1 // loop_exit
      _
    %456 = vsyncpa [#allocation4], 1
    %s457 = scalar_lea.sflag [#allocation4], 1
    %458 = vsyncpa %s457, 1

// kernel: _lambda_.10
$region0: #{_lambda_.10}
  #allocation0 [shape = 'u32[]', space=smem, size = 0x4, offset = 0x4, fixed_abs, tag = 'smem constant byte address 0x4 - core index']
  #allocation1 [shape = 'u32[144,128]{1,0:T(1,128)}', space=vmem, size = 0x12000, scoped, tag = 'internal scratch']
  %s0 = inlined_call_operand.vmem [shape: f32[2,4,8,32], index: 0, kind: input, shape index: {}]
  %s1 = inlined_call_operand.vmem [shape: f32[2,32,8], index: 1, kind: input, shape index: {}]
  %s2 = inlined_call_operand.vmem [shape: f32[2,4,8,8], index: 2, kind: input, shape index: {}]
  %s3 = inlined_call_operand.vmem [shape: f32[2,4,8,8], index: 3, kind: output, shape index: {}]
  %s4 = sld [smem:[#allocation0]]
  $region45: #{_lambda_.10} parent=0
    _
  %s6 = ssub.s32 1, %s4
  %s7 = scalar_select 0, %s6, %s4
  loop: start=0, step=1, limit=4
  $region2: #{_lambda_.10} parent=0 // loop_pre_header
    _
  $region3: #{_lambda_.10} parent=0 // loop_header
    %s9 = sphi 0, %s13
    %p10 = scmp.ge.s32.totalorder %s9, 4
    %s19 = sphi 0, %s21
    %s22 = sphi 0, %s19
    %s23 = sphi 0, %s22
    %s39 = sphi 0, %s23
    %s45 = sphi 0, %s47
    %s48 = sphi 0, %s45
    %s49 = sphi 0, %s48
    %s65 = sphi 0, %s49
    %s71 = sphi 0, %s73
    %s74 = sphi 0, %s71
    %s75 = sphi 0, %s74
    %s91 = sphi 0, %s75
    %s97 = sphi 0, %s99
    %s100 = sphi 0, %s97
    %s101 = sphi 0, %s100
    %s117 = sphi 0, %s101
  $region4: #{_lambda_.10} parent=0 // loop_header_branch
    %12 = sbr.rel (%p10) target = $region8
  $region5: #{_lambda_.10} parent=0 // loop_body
    %s14 = ssub.s32 %s9, 1
    %s15 = ssub.s32 %s9, 2
    %s16 = sadd.s32 %s9, 1
    %s17 = ssub.s32 %s9, %s16
    %p18 = scmp.eq.s32.totalorder %s17, 0
    %s20 = sadd.s32 %s19, 1
    %s21 = scalar_select %p18, %s19, %s20
    %p24 = pneg %p18
    %p25 = scmp.eq.s32.totalorder %s9, 1
    %p26 = por %p24, %p25
    %p27 = scmp.ne.s32.totalorder %s19, %s22
    %p28 = scmp.eq.s32.totalorder %s9, 0
    %p29 = por %p27, %p28
    %p30 = scmp.ne.s32.totalorder %s19, %s22
    %p31 = scmp.eq.s32.totalorder %s14, 1
    %p32 = por %p30, %p31
    %p33 = scmp.ne.s32.totalorder %s22, %s23
    %p34 = scmp.eq.s32.totalorder %s14, 0
    %p35 = por %p33, %p34
    %p36 = scmp.ne.s32.totalorder %s22, %s23
    %p37 = scmp.eq.s32.totalorder %s15, 1
    %p38 = por %p36, %p37
    %p40 = scmp.ne.s32.totalorder %s23, %s39
    %p41 = scmp.eq.s32.totalorder %s15, 0
    %p42 = por %p40, %p41
    %s43 = ssub.s32 %s9, %s16
    %p44 = scmp.eq.s32.totalorder %s43, 0
    %s46 = sadd.s32 %s45, 1
    %s47 = scalar_select %p44, %s45, %s46
    %p50 = pneg %p44
    %p51 = scmp.eq.s32.totalorder %s9, 1
    %p52 = por %p50, %p51
    %p53 = scmp.ne.s32.totalorder %s45, %s48
    %p54 = scmp.eq.s32.totalorder %s9, 0
    %p55 = por %p53, %p54
    %p56 = scmp.ne.s32.totalorder %s45, %s48
    %p57 = scmp.eq.s32.totalorder %s14, 1
    %p58 = por %p56, %p57
    %p59 = scmp.ne.s32.totalorder %s48, %s49
    %p60 = scmp.eq.s32.totalorder %s14, 0
    %p61 = por %p59, %p60
    %p62 = scmp.ne.s32.totalorder %s48, %s49
    %p63 = scmp.eq.s32.totalorder %s15, 1
    %p64 = por %p62, %p63
    %p66 = scmp.ne.s32.totalorder %s49, %s65
    %p67 = scmp.eq.s32.totalorder %s15, 0
    %p68 = por %p66, %p67
    %s69 = ssub.s32 %s9, %s16
    %p70 = scmp.eq.s32.totalorder %s69, 0
    %s72 = sadd.s32 %s71, 1
    %s73 = scalar_select %p70, %s71, %s72
    %p76 = pneg %p70
    %p77 = scmp.eq.s32.totalorder %s9, 1
    %p78 = por %p76, %p77
    %p79 = scmp.ne.s32.totalorder %s71, %s74
    %p80 = scmp.eq.s32.totalorder %s9, 0
    %p81 = por %p79, %p80
    %p82 = scmp.ne.s32.totalorder %s71, %s74
    %p83 = scmp.eq.s32.totalorder %s14, 1
    %p84 = por %p82, %p83
    %p85 = scmp.ne.s32.totalorder %s74, %s75
    %p86 = scmp.eq.s32.totalorder %s14, 0
    %p87 = por %p85, %p86
    %p88 = scmp.ne.s32.totalorder %s74, %s75
    %p89 = scmp.eq.s32.totalorder %s15, 1
    %p90 = por %p88, %p89
    %p92 = scmp.ne.s32.totalorder %s75, %s91
    %p93 = scmp.eq.s32.totalorder %s15, 0
    %p94 = por %p92, %p93
    %s95 = ssub.s32 %s9, %s16
    %p96 = scmp.eq.s32.totalorder %s95, 0
    %s98 = sadd.s32 %s97, 1
    %s99 = scalar_select %p96, %s97, %s98
    %p102 = pneg %p96
    %p103 = scmp.eq.s32.totalorder %s9, 1
    %p104 = por %p102, %p103
    %p105 = scmp.ne.s32.totalorder %s97, %s100
    %p106 = scmp.eq.s32.totalorder %s9, 0
    %p107 = por %p105, %p106
    %p108 = scmp.ne.s32.totalorder %s97, %s100
    %p109 = scmp.eq.s32.totalorder %s14, 1
    %p110 = por %p108, %p109
    %p111 = scmp.ne.s32.totalorder %s100, %s101
    %p112 = scmp.eq.s32.totalorder %s14, 0
    %p113 = por %p111, %p112
    %p114 = scmp.ne.s32.totalorder %s100, %s101
    %p115 = scmp.eq.s32.totalorder %s15, 1
    %p116 = por %p114, %p115
    %p118 = scmp.ne.s32.totalorder %s101, %s117
    %p119 = scmp.eq.s32.totalorder %s15, 0
    %p120 = por %p118, %p119
    %p121 = scmp.le.s32.totalorder 1, %s9
    %p122 = scmp.lt.s32.totalorder %s9, 3
    %p123 = pnand %p121, %p122
    %p124 = pneg %p123
    // Predicated region
    $region9: #{_lambda_.10} parent=5 // pred_check
      _
    $region10: #{_lambda_.10} parent=5 // pred_check_branch
      %126 = sbr.rel (%p123) target = $region12
    $region11: #{_lambda_.10} parent=5 // pred_region
      %s127 = ssub.s32 %s9, 1
    $region12: #{_lambda_.10} parent=5 // pred_fallthru
      _
    %p128 = scmp.lt.s32.totalorder %s9, 2
    // Predicated region
    $region13: #{_lambda_.10} parent=5 // pred_check
      %p129 = pneg %p128
    $region14: #{_lambda_.10} parent=5 // pred_check_branch
      %131 = sbr.rel (%p129) target = $region16
    $region15: #{_lambda_.10} parent=5 // pred_region
      // Predicated region
      $region17: #{_lambda_.10} parent=15 // pred_check
        %p132 = pneg %p29
      $region18: #{_lambda_.10} parent=15 // pred_check_branch
        %134 = sbr.rel (%p132) target = $region20
      $region19: #{_lambda_.10} parent=15 // pred_region
        %p135 = scmp.lt.s32.totalorder %s9, 1
        %s136 = scalar_select %p135, %s9, 1
        %s137 = smul.addr %s136, 4
        %s138 = smul.addr %s137, 8
        %s139 = scalar_lea.vmem %s0, %s138
      $region20: #{_lambda_.10} parent=15 // pred_fallthru
        _
      // Predicated region
      $region21: #{_lambda_.10} parent=15 // pred_check
        %p140 = pneg %p55
      $region22: #{_lambda_.10} parent=15 // pred_check_branch
        %142 = sbr.rel (%p140) target = $region24
      $region23: #{_lambda_.10} parent=15 // pred_region
        %p143 = scmp.lt.s32.totalorder %s9, 1
        %s144 = scalar_select %p143, %s9, 1
        %s145 = smul.addr %s144, 4
        %s146 = smul.addr %s145, 8
        %s147 = scalar_lea.vmem %s1, %s146
      $region24: #{_lambda_.10} parent=15 // pred_fallthru
        _
      // Predicated region
      $region25: #{_lambda_.10} parent=15 // pred_check
        %p148 = pneg %p81
      $region26: #{_lambda_.10} parent=15 // pred_check_branch
        %150 = sbr.rel (%p148) target = $region28
      $region27: #{_lambda_.10} parent=15 // pred_region
        %p151 = scmp.lt.s32.totalorder %s9, 1
        %s152 = scalar_select %p151, %s9, 1
        %s153 = smul.addr %s152, 4
        %s154 = smul.addr %s153, 8
        %s155 = scalar_lea.vmem %s2, %s154
      $region28: #{_lambda_.10} parent=15 // pred_fallthru
        _
    $region16: #{_lambda_.10} parent=5 // pred_fallthru
      _
    %p156 = scmp.le.s32.totalorder 1, %s9
    %p157 = scmp.lt.s32.totalorder %s9, 3
    %p158 = pnand %p156, %p157
    %p159 = pneg %p158
    // Predicated region
    $region29: #{_lambda_.10} parent=5 // pred_check
      _
    $region30: #{_lambda_.10} parent=5 // pred_check_branch
      %161 = sbr.rel (%p158) target = $region32
    $region31: #{_lambda_.10} parent=5 // pred_region
      %s162 = ssub.s32 %s9, 1
      %p163 = scmp.lt.s32.totalorder %s14, 1
      %s164 = scalar_select %p163, %s14, 1
      %s165 = smul.addr %s164, 4
      %s166 = smul.addr %s165, 8
      %s167 = scalar_lea.vmem %s0, %s166
      %p168 = pneg %p35
      %p169 = pneg %p32
      %p170 = scmp.lt.s32.totalorder %s14, 1
      %s171 = scalar_select %p170, %s14, 1
      %s172 = smul.addr %s171, 4
      %s173 = smul.addr %s172, 8
      %s174 = scalar_lea.vmem %s1, %s173
      %p175 = pneg %p61
      %p176 = pneg %p58
      %p177 = scmp.lt.s32.totalorder %s14, 1
      %s178 = scalar_select %p177, %s14, 1
      %s179 = smul.addr %s178, 4
      %s180 = smul.addr %s179, 8
      %s181 = scalar_lea.vmem %s2, %s180
      %p182 = pneg %p87
      %p183 = pneg %p84
      %p184 = pneg %p113
      %p185 = pneg %p110
      %p186 = scmp.lt.s32.totalorder %s14, 1
      %s187 = scalar_select %p186, %s14, 1
      %s188 = smul.addr %s187, 4
      %s189 = smul.addr %s188, 8
      %s190 = scalar_lea.vmem %s3, %s189
      %p191 = scmp.lt.s32.totalorder %s14, 1
      %s192 = scalar_select %p191, %s14, 1
      %s193 = smul.addr %s192, 4
      %s194 = smul.addr %s193, 8
      %s195 = scalar_lea.vmem %s0, %s194
      %p196 = scmp.lt.s32.totalorder %s14, 1
      %s197 = scalar_select %p196, %s14, 1
      %s198 = smul.addr %s197, 4
      %s199 = smul.addr %s198, 8
      %s200 = scalar_lea.vmem %s1, %s199
      %p201 = scmp.lt.s32.totalorder %s14, 1
      %s202 = scalar_select %p201, %s14, 1
      %s203 = smul.addr %s202, 4
      %s204 = smul.addr %s203, 8
      %s205 = scalar_lea.vmem %s2, %s204
      %p206 = scmp.lt.s32.totalorder %s14, 1
      %s207 = scalar_select %p206, %s14, 1
      %s208 = smul.addr %s207, 4
      %s209 = smul.addr %s208, 8
      %s210 = scalar_lea.vmem %s3, %s209
      %v211 = vld [vmem:[%s195] sm:$0xff]
      %v212 = vld [vmem:[%s195 + $0x8] sm:$0xff]
      %v213 = vld [vmem:[%s195 + $0x10] sm:$0xff]
      %v214 = vld [vmem:[%s195 + $0x18] sm:$0xff]
      %v215 = vld [vmem:[%s205] sm:$0xff]
      %v216 = vld [vmem:[%s205 + $0x8] sm:$0xff]
      %v217 = vld [vmem:[%s205 + $0x10] sm:$0xff]
      %v218 = vld [vmem:[%s205 + $0x18] sm:$0xff]
      %v219 = vld [vmem:[%s200] sm:$0xff]
      %v220 = vld [vmem:[%s200 + $0x8] sm:$0xff]
      %v221 = vld [vmem:[%s200 + $0x10] sm:$0xff]
      %v222 = vld [vmem:[%s200 + $0x18] sm:$0xff]
      %vm223 = vcmask 261120
      %v225 = vsel %vm223, %v211, 0
      %227 = vmatprep.subr.mxu0 0.0
      %228 = vmatpush1.msra.mxu0 %v219
      %229 = vmatprep.subr.mxu0 0.0
      %230 = vmatpush1.msra.mxu0 %v220
      %231 = vmatprep.subr.mxu0 0.0
      %232 = vmatpush1.msra.mxu0 %v221
      %233 = vmatprep.subr.mxu0 0.0
      %234 = vmatpush1.msra.mxu0 %v222
      %235 = vmatprep.subr.mxu0 0.0
      %236 = vmatpush1.msra.mxu0 0.0
      %237 = vmatprep.subr.mxu0 0.0
      %238 = vmatpush1.msra.mxu0 0.0
      %239 = vmatprep.subr.mxu0 0.0
      %240 = vmatpush1.msra.mxu0 0.0
      %241 = vmatprep.subr.mxu0 0.0
      %242 = vmatpush1.msra.mxu0 0.0
      %243 = vmatprep.subr.mxu0 0.0
      %244 = vmatpush1.msra.mxu0 0.0
      %245 = vmatprep.subr.mxu0 0.0
      %246 = vmatpush1.msra.mxu0 0.0
      %247 = vmatprep.subr.mxu0 0.0
      %248 = vmatpush1.msra.mxu0 0.0
      %249 = vmatprep.subr.mxu0 0.0
      %250 = vmatpush1.msra.mxu0 0.0
      %251 = vmatprep.subr.mxu0 0.0
      %252 = vmatpush1.msra.mxu0 0.0
      %253 = vmatprep.subr.mxu0 0.0
      %254 = vmatpush1.msra.mxu0 0.0
      %255 = vmatprep.subr.mxu0 0.0
      %256 = vmatpush1.msra.mxu0 0.0
      %257 = vmatprep.subr.mxu0 0.0
      %258 = vmatpush1.msra.mxu0 0.0
      %259 = vmatprep.subr.mxu0 0.0
      %260 = vmatpush1.msra.mxu0 0.0
      %261 = vmatprep.subr.mxu0 0.0
      %262 = vmatpush1.msra.mxu0 0.0
      %263 = vmatprep.subr.mxu0 0.0
      %264 = vmatpush1.msra.mxu0 0.0
      %265 = vmatprep.subr.mxu0 0.0
      %266 = vmatpush1.msra.mxu0 0.0
      %267 = vmatprep.subr.mxu0 0.0
      %268 = vmatpush1.msra.mxu0 0.0
      %269 = vmatprep.subr.mxu0 0.0
      %270 = vmatpush1.msra.mxu0 0.0
      %271 = vmatprep.subr.mxu0 0.0
      %272 = vmatpush1.msra.mxu0 0.0
      %273 = vmatprep.subr.mxu0 0.0
      %274 = vmatpush1.msra.mxu0 0.0
      %275 = vmatprep.subr.mxu0 0.0
      %276 = vmatpush1.msra.mxu0 0.0
      %277 = vmatprep.subr.mxu0 0.0
      %278 = vmatpush1.msra.mxu0 0.0
      %279 = vmatprep.subr.mxu0 0.0
      %280 = vmatpush1.msra.mxu0 0.0
      %281 = vmatprep.subr.mxu0 0.0
      %282 = vmatpush1.msra.mxu0 0.0
      %283 = vmatprep.subr.mxu0 0.0
      %284 = vmatpush1.msra.mxu0 0.0
      %285 = vmatprep.subr.mxu0 0.0
      %286 = vmatpush1.msra.mxu0 0.0
      %287 = vmatprep.subr.mxu0 0.0
      %288 = vmatpush1.msra.mxu0 0.0
      %289 = vmatprep.subr.mxu0 0.0
      %290 = vmatpush1.msra.mxu0 0.0
      %291 = vmatprep.mubr.f32.mxu0 0.0
      %292 = vmatmul.mubr.f32.gmra.mrb[0].mxu0 %v225
      %v293 = vpop.f32.mrb[0].mxu0
      %v294 = vadd.f32 0.0, %v293
      %v295 = vpop.f32.mrb[0].mxu0
      %296 = vdwg.mxu0
      %v298 = vsel %vm223, %v212, 0
      %300 = vmatprep.subr.mxu0 0.0
      %301 = vmatpush1.msra.mxu0 %v219
      %302 = vmatprep.subr.mxu0 0.0
      %303 = vmatpush1.msra.mxu0 %v220
      %304 = vmatprep.subr.mxu0 0.0
      %305 = vmatpush1.msra.mxu0 %v221
      %306 = vmatprep.subr.mxu0 0.0
      %307 = vmatpush1.msra.mxu0 %v222
      %308 = vmatprep.subr.mxu0 0.0
      %309 = vmatpush1.msra.mxu0 0.0
      %310 = vmatprep.subr.mxu0 0.0
      %311 = vmatpush1.msra.mxu0 0.0
      %312 = vmatprep.subr.mxu0 0.0
      %313 = vmatpush1.msra.mxu0 0.0
      %314 = vmatprep.subr.mxu0 0.0
      %315 = vmatpush1.msra.mxu0 0.0
      %316 = vmatprep.subr.mxu0 0.0
      %317 = vmatpush1.msra.mxu0 0.0
      %318 = vmatprep.subr.mxu0 0.0
      %319 = vmatpush1.msra.mxu0 0.0
      %320 = vmatprep.subr.mxu0 0.0
      %321 = vmatpush1.msra.mxu0 0.0
      %322 = vmatprep.subr.mxu0 0.0
      %323 = vmatpush1.msra.mxu0 0.0
      %324 = vmatprep.subr.mxu0 0.0
      %325 = vmatpush1.msra.mxu0 0.0
      %326 = vmatprep.subr.mxu0 0.0
      %327 = vmatpush1.msra.mxu0 0.0
      %328 = vmatprep.subr.mxu0 0.0
      %329 = vmatpush1.msra.mxu0 0.0
      %330 = vmatprep.subr.mxu0 0.0
      %331 = vmatpush1.msra.mxu0 0.0
      %332 = vmatprep.subr.mxu0 0.0
      %333 = vmatpush1.msra.mxu0 0.0
      %334 = vmatprep.subr.mxu0 0.0
      %335 = vmatpush1.msra.mxu0 0.0
      %336 = vmatprep.subr.mxu0 0.0
      %337 = vmatpush1.msra.mxu0 0.0
      %338 = vmatprep.subr.mxu0 0.0
      %339 = vmatpush1.msra.mxu0 0.0
      %340 = vmatprep.subr.mxu0 0.0
      %341 = vmatpush1.msra.mxu0 0.0
      %342 = vmatprep.subr.mxu0 0.0
      %343 = vmatpush1.msra.mxu0 0.0
      %344 = vmatprep.subr.mxu0 0.0
      %345 = vmatpush1.msra.mxu0 0.0
      %346 = vmatprep.subr.mxu0 0.0
      %347 = vmatpush1.msra.mxu0 0.0
      %348 = vmatprep.subr.mxu0 0.0
      %349 = vmatpush1.msra.mxu0 0.0
      %350 = vmatprep.subr.mxu0 0.0
      %351 = vmatpush1.msra.mxu0 0.0
      %352 = vmatprep.subr.mxu0 0.0
      %353 = vmatpush1.msra.mxu0 0.0
      %354 = vmatprep.subr.mxu0 0.0
      %355 = vmatpush1.msra.mxu0 0.0
      %356 = vmatprep.subr.mxu0 0.0
      %357 = vmatpush1.msra.mxu0 0.0
      %358 = vmatprep.subr.mxu0 0.0
      %359 = vmatpush1.msra.mxu0 0.0
      %360 = vmatprep.subr.mxu0 0.0
      %361 = vmatpush1.msra.mxu0 0.0
      %362 = vmatprep.subr.mxu0 0.0
      %363 = vmatpush1.msra.mxu0 0.0
      %364 = vmatprep.mubr.f32.mxu0 0.0
      %365 = vmatmul.mubr.f32.gmra.mrb[0].mxu0 %v298
      %v366 = vpop.f32.mrb[0].mxu0
      %v367 = vadd.f32 0.0, %v366
      %v368 = vpop.f32.mrb[0].mxu0
      %369 = vdwg.mxu0
      %v371 = vsel %vm223, %v213, 0
      %373 = vmatprep.subr.mxu0 0.0
      %374 = vmatpush1.msra.mxu0 %v219
      %375 = vmatprep.subr.mxu0 0.0
      %376 = vmatpush1.msra.mxu0 %v220
      %377 = vmatprep.subr.mxu0 0.0
      %378 = vmatpush1.msra.mxu0 %v221
      %379 = vmatprep.subr.mxu0 0.0
      %380 = vmatpush1.msra.mxu0 %v222
      %381 = vmatprep.subr.mxu0 0.0
      %382 = vmatpush1.msra.mxu0 0.0
      %383 = vmatprep.subr.mxu0 0.0
      %384 = vmatpush1.msra.mxu0 0.0
      %385 = vmatprep.subr.mxu0 0.0
      %386 = vmatpush1.msra.mxu0 0.0
      %387 = vmatprep.subr.mxu0 0.0
      %388 = vmatpush1.msra.mxu0 0.0
      %389 = vmatprep.subr.mxu0 0.0
      %390 = vmatpush1.msra.mxu0 0.0
      %391 = vmatprep.subr.mxu0 0.0
      %392 = vmatpush1.msra.mxu0 0.0
      %393 = vmatprep.subr.mxu0 0.0
      %394 = vmatpush1.msra.mxu0 0.0
      %395 = vmatprep.subr.mxu0 0.0
      %396 = vmatpush1.msra.mxu0 0.0
      %397 = vmatprep.subr.mxu0 0.0
      %398 = vmatpush1.msra.mxu0 0.0
      %399 = vmatprep.subr.mxu0 0.0
      %400 = vmatpush1.msra.mxu0 0.0
      %401 = vmatprep.subr.mxu0 0.0
      %402 = vmatpush1.msra.mxu0 0.0
      %403 = vmatprep.subr.mxu0 0.0
      %404 = vmatpush1.msra.mxu0 0.0
      %405 = vmatprep.subr.mxu0 0.0
      %406 = vmatpush1.msra.mxu0 0.0
      %407 = vmatprep.subr.mxu0 0.0
      %408 = vmatpush1.msra.mxu0 0.0
      %409 = vmatprep.subr.mxu0 0.0
      %410 = vmatpush1.msra.mxu0 0.0
      %411 = vmatprep.subr.mxu0 0.0
      %412 = vmatpush1.msra.mxu0 0.0
      %413 = vmatprep.subr.mxu0 0.0
      %414 = vmatpush1.msra.mxu0 0.0
      %415 = vmatprep.subr.mxu0 0.0
      %416 = vmatpush1.msra.mxu0 0.0
      %417 = vmatprep.subr.mxu0 0.0
      %418 = vmatpush1.msra.mxu0 0.0
      %419 = vmatprep.subr.mxu0 0.0
      %420 = vmatpush1.msra.mxu0 0.0
      %421 = vmatprep.subr.mxu0 0.0
      %422 = vmatpush1.msra.mxu0 0.0
      %423 = vmatprep.subr.mxu0 0.0
      %424 = vmatpush1.msra.mxu0 0.0
      %425 = vmatprep.subr.mxu0 0.0
      %426 = vmatpush1.msra.mxu0 0.0
      %427 = vmatprep.subr.mxu0 0.0
      %428 = vmatpush1.msra.mxu0 0.0
      %429 = vmatprep.subr.mxu0 0.0
      %430 = vmatpush1.msra.mxu0 0.0
      %431 = vmatprep.subr.mxu0 0.0
      %432 = vmatpush1.msra.mxu0 0.0
      %433 = vmatprep.subr.mxu0 0.0
      %434 = vmatpush1.msra.mxu0 0.0
      %435 = vmatprep.subr.mxu0 0.0
      %436 = vmatpush1.msra.mxu0 0.0
      %437 = vmatprep.mubr.f32.mxu0 0.0
      %438 = vmatmul.mubr.f32.gmra.mrb[0].mxu0 %v371
      %v439 = vpop.f32.mrb[0].mxu0
      %v440 = vadd.f32 0.0, %v439
      %v441 = vpop.f32.mrb[0].mxu0
      %442 = vdwg.mxu0
      %v444 = vsel %vm223, %v214, 0
      %446 = vmatprep.subr.mxu0 0.0
      %447 = vmatpush1.msra.mxu0 %v219
      %448 = vmatprep.subr.mxu0 0.0
      %449 = vmatpush1.msra.mxu0 %v220
      %450 = vmatprep.subr.mxu0 0.0
      %451 = vmatpush1.msra.mxu0 %v221
      %452 = vmatprep.subr.mxu0 0.0
      %453 = vmatpush1.msra.mxu0 %v222
      %454 = vmatprep.subr.mxu0 0.0
      %455 = vmatpush1.msra.mxu0 0.0
      %456 = vmatprep.subr.mxu0 0.0
      %457 = vmatpush1.msra.mxu0 0.0
      %458 = vmatprep.subr.mxu0 0.0
      %459 = vmatpush1.msra.mxu0 0.0
      %460 = vmatprep.subr.mxu0 0.0
      %461 = vmatpush1.msra.mxu0 0.0
      %462 = vmatprep.subr.mxu0 0.0
      %463 = vmatpush1.msra.mxu0 0.0
      %464 = vmatprep.subr.mxu0 0.0
      %465 = vmatpush1.msra.mxu0 0.0
      %466 = vmatprep.subr.mxu0 0.0
      %467 = vmatpush1.msra.mxu0 0.0
      %468 = vmatprep.subr.mxu0 0.0
      %469 = vmatpush1.msra.mxu0 0.0
      %470 = vmatprep.subr.mxu0 0.0
      %471 = vmatpush1.msra.mxu0 0.0
      %472 = vmatprep.subr.mxu0 0.0
      %473 = vmatpush1.msra.mxu0 0.0
      %474 = vmatprep.subr.mxu0 0.0
      %475 = vmatpush1.msra.mxu0 0.0
      %476 = vmatprep.subr.mxu0 0.0
      %477 = vmatpush1.msra.mxu0 0.0
      %478 = vmatprep.subr.mxu0 0.0
      %479 = vmatpush1.msra.mxu0 0.0
      %480 = vmatprep.subr.mxu0 0.0
      %481 = vmatpush1.msra.mxu0 0.0
      %482 = vmatprep.subr.mxu0 0.0
      %483 = vmatpush1.msra.mxu0 0.0
      %484 = vmatprep.subr.mxu0 0.0
      %485 = vmatpush1.msra.mxu0 0.0
      %486 = vmatprep.subr.mxu0 0.0
      %487 = vmatpush1.msra.mxu0 0.0
      %488 = vmatprep.subr.mxu0 0.0
      %489 = vmatpush1.msra.mxu0 0.0
      %490 = vmatprep.subr.mxu0 0.0
      %491 = vmatpush1.msra.mxu0 0.0
      %492 = vmatprep.subr.mxu0 0.0
      %493 = vmatpush1.msra.mxu0 0.0
      %494 = vmatprep.subr.mxu0 0.0
      %495 = vmatpush1.msra.mxu0 0.0
      %496 = vmatprep.subr.mxu0 0.0
      %497 = vmatpush1.msra.mxu0 0.0
      %498 = vmatprep.subr.mxu0 0.0
      %499 = vmatpush1.msra.mxu0 0.0
      %500 = vmatprep.subr.mxu0 0.0
      %501 = vmatpush1.msra.mxu0 0.0
      %502 = vmatprep.subr.mxu0 0.0
      %503 = vmatpush1.msra.mxu0 0.0
      %504 = vmatprep.subr.mxu0 0.0
      %505 = vmatpush1.msra.mxu0 0.0
      %506 = vmatprep.subr.mxu0 0.0
      %507 = vmatpush1.msra.mxu0 0.0
      %508 = vmatprep.subr.mxu0 0.0
      %509 = vmatpush1.msra.mxu0 0.0
      %510 = vmatprep.mubr.f32.mxu0 0.0
      %511 = vmatmul.mubr.f32.gmra.mrb[0].mxu0 %v444
      %v512 = vpop.f32.mrb[0].mxu0
      %v513 = vadd.f32 0.0, %v512
      %v514 = vpop.f32.mrb[0].mxu0
      %515 = vdwg.mxu0
      %vm516 = vcmask 64512
      %v517 = vsel %vm516, %v294, -inf
      %v518 = vrot.slane %v517, 4
      %v519 = vmax.f32 %v517, %v518
      %v520 = vrot.slane %v519, 2
      %v521 = vmax.f32 %v519, %v520
      %v522 = vrot.slane %v521, 1
      %v523 = vmax.f32 %v521, %v522
      %v524 = vsel %vm516, %v367, -inf
      %v525 = vrot.slane %v524, 4
      %v526 = vmax.f32 %v524, %v525
      %v527 = vrot.slane %v526, 2
      %v528 = vmax.f32 %v526, %v527
      %v529 = vrot.slane %v528, 1
      %v530 = vmax.f32 %v528, %v529
      %v531 = vsel %vm516, %v440, -inf
      %v532 = vrot.slane %v531, 4
      %v533 = vmax.f32 %v531, %v532
      %v534 = vrot.slane %v533, 2
      %v535 = vmax.f32 %v533, %v534
      %v536 = vrot.slane %v535, 1
      %v537 = vmax.f32 %v535, %v536
      %v538 = vsel %vm516, %v513, -inf
      %v539 = vrot.slane %v538, 4
      %v540 = vmax.f32 %v538, %v539
      %v541 = vrot.slane %v540, 2
      %v542 = vmax.f32 %v540, %v541
      %v543 = vrot.slane %v542, 1
      %v544 = vmax.f32 %v542, %v543
      %v545 = vsub.f32 %v294, %v523
      %v546 = vsub.f32 %v367, %v530
      %v547 = vsub.f32 %v440, %v537
      %v548 = vsub.f32 %v513, %v544
      %v549 = vmul.f32 %v545, 1.442695
      %v550 = vpow.pop %v549
      %v551 = vmul.f32 %v546, 1.442695
      %v552 = vpow.pop %v551
      %v553 = vmul.f32 %v547, 1.442695
      %v554 = vpow.pop %v553
      %v555 = vmul.f32 %v548, 1.442695
      %v556 = vpow.pop %v555
      %v557 = vsel %vm516, %v550, 0.0
      %v558 = vrot.slane %v557, 4
      %v559 = vadd.f32 %v557, %v558
      %v560 = vrot.slane %v559, 2
      %v561 = vadd.f32 %v559, %v560
      %v562 = vrot.slane %v561, 1
      %v563 = vadd.f32 %v561, %v562
      %v564 = vsel %vm516, %v552, 0.0
      %v565 = vrot.slane %v564, 4
      %v566 = vadd.f32 %v564, %v565
      %v567 = vrot.slane %v566, 2
      %v568 = vadd.f32 %v566, %v567
      %v569 = vrot.slane %v568, 1
      %v570 = vadd.f32 %v568, %v569
      %v571 = vsel %vm516, %v554, 0.0
      %v572 = vrot.slane %v571, 4
      %v573 = vadd.f32 %v571, %v572
      %v574 = vrot.slane %v573, 2
      %v575 = vadd.f32 %v573, %v574
      %v576 = vrot.slane %v575, 1
      %v577 = vadd.f32 %v575, %v576
      %v578 = vsel %vm516, %v556, 0.0
      %v579 = vrot.slane %v578, 4
      %v580 = vadd.f32 %v578, %v579
      %v581 = vrot.slane %v580, 2
      %v582 = vadd.f32 %v580, %v581
      %v583 = vrot.slane %v582, 1
      %v584 = vadd.f32 %v582, %v583
      %v585 = vrcp.pop %v563
      %v586 = vrcp.pop %v570
      %v587 = vrcp.pop %v577
      %v588 = vrcp.pop %v584
      %v589 = vmul.f32 %v550, %v585
      %v590 = vmul.f32 %v552, %v586
      %v591 = vmul.f32 %v554, %v587
      %v592 = vmul.f32 %v556, %v588
      %v594 = vsel %vm516, %v589, 0
      %596 = vmatprep.subr.mxu0 0.0
      %597 = vmatpush1.msra.mxu0 %v215
      %598 = vmatprep.subr.mxu0 0.0
      %599 = vmatpush1.msra.mxu0 0.0
      %600 = vmatprep.subr.mxu0 0.0
      %601 = vmatpush1.msra.mxu0 0.0
      %602 = vmatprep.subr.mxu0 0.0
      %603 = vmatpush1.msra.mxu0 0.0
      %604 = vmatprep.subr.mxu0 0.0
      %605 = vmatpush1.msra.mxu0 0.0
      %606 = vmatprep.subr.mxu0 0.0
      %607 = vmatpush1.msra.mxu0 0.0
      %608 = vmatprep.subr.mxu0 0.0
      %609 = vmatpush1.msra.mxu0 0.0
      %610 = vmatprep.subr.mxu0 0.0
      %611 = vmatpush1.msra.mxu0 0.0
      %612 = vmatprep.subr.mxu0 0.0
      %613 = vmatpush1.msra.mxu0 0.0
      %614 = vmatprep.subr.mxu0 0.0
      %615 = vmatpush1.msra.mxu0 0.0
      %616 = vmatprep.subr.mxu0 0.0
      %617 = vmatpush1.msra.mxu0 0.0
      %618 = vmatprep.subr.mxu0 0.0
      %619 = vmatpush1.msra.mxu0 0.0
      %620 = vmatprep.subr.mxu0 0.0
      %621 = vmatpush1.msra.mxu0 0.0
      %622 = vmatprep.subr.mxu0 0.0
      %623 = vmatpush1.msra.mxu0 0.0
      %624 = vmatprep.subr.mxu0 0.0
      %625 = vmatpush1.msra.mxu0 0.0
      %626 = vmatprep.subr.mxu0 0.0
      %627 = vmatpush1.msra.mxu0 0.0
      %628 = vmatprep.subr.mxu0 0.0
      %629 = vmatpush1.msra.mxu0 0.0
      %630 = vmatprep.subr.mxu0 0.0
      %631 = vmatpush1.msra.mxu0 0.0
      %632 = vmatprep.subr.mxu0 0.0
      %633 = vmatpush1.msra.mxu0 0.0
      %634 = vmatprep.subr.mxu0 0.0
      %635 = vmatpush1.msra.mxu0 0.0
      %636 = vmatprep.subr.mxu0 0.0
      %637 = vmatpush1.msra.mxu0 0.0
      %638 = vmatprep.subr.mxu0 0.0
      %639 = vmatpush1.msra.mxu0 0.0
      %640 = vmatprep.subr.mxu0 0.0
      %641 = vmatpush1.msra.mxu0 0.0
      %642 = vmatprep.subr.mxu0 0.0
      %643 = vmatpush1.msra.mxu0 0.0
      %644 = vmatprep.subr.mxu0 0.0
      %645 = vmatpush1.msra.mxu0 0.0
      %646 = vmatprep.subr.mxu0 0.0
      %647 = vmatpush1.msra.mxu0 0.0
      %648 = vmatprep.subr.mxu0 0.0
      %649 = vmatpush1.msra.mxu0 0.0
      %650 = vmatprep.subr.mxu0 0.0
      %651 = vmatpush1.msra.mxu0 0.0
      %652 = vmatprep.subr.mxu0 0.0
      %653 = vmatpush1.msra.mxu0 0.0
      %654 = vmatprep.subr.mxu0 0.0
      %655 = vmatpush1.msra.mxu0 0.0
      %656 = vmatprep.subr.mxu0 0.0
      %657 = vmatpush1.msra.mxu0 0.0
      %658 = vmatprep.subr.mxu0 0.0
      %659 = vmatpush1.msra.mxu0 0.0
      %660 = vmatprep.mubr.f32.mxu0 0.0
      %661 = vmatmul.mubr.f32.gmra.mrb[0].mxu0 %v594
      %v662 = vpop.f32.mrb[0].mxu0
      %v663 = vadd.f32 0.0, %v662
      %v664 = vpop.f32.mrb[0].mxu0
      %665 = vdwg.mxu0
      %v667 = vsel %vm516, %v590, 0
      %669 = vmatprep.subr.mxu0 0.0
      %670 = vmatpush1.msra.mxu0 %v216
      %671 = vmatprep.subr.mxu0 0.0
      %672 = vmatpush1.msra.mxu0 0.0
      %673 = vmatprep.subr.mxu0 0.0
      %674 = vmatpush1.msra.mxu0 0.0
      %675 = vmatprep.subr.mxu0 0.0
      %676 = vmatpush1.msra.mxu0 0.0
      %677 = vmatprep.subr.mxu0 0.0
      %678 = vmatpush1.msra.mxu0 0.0
      %679 = vmatprep.subr.mxu0 0.0
      %680 = vmatpush1.msra.mxu0 0.0
      %681 = vmatprep.subr.mxu0 0.0
      %682 = vmatpush1.msra.mxu0 0.0
      %683 = vmatprep.subr.mxu0 0.0
      %684 = vmatpush1.msra.mxu0 0.0
      %685 = vmatprep.subr.mxu0 0.0
      %686 = vmatpush1.msra.mxu0 0.0
      %687 = vmatprep.subr.mxu0 0.0
      %688 = vmatpush1.msra.mxu0 0.0
      %689 = vmatprep.subr.mxu0 0.0
      %690 = vmatpush1.msra.mxu0 0.0
      %691 = vmatprep.subr.mxu0 0.0
      %692 = vmatpush1.msra.mxu0 0.0
      %693 = vmatprep.subr.mxu0 0.0
      %694 = vmatpush1.msra.mxu0 0.0
      %695 = vmatprep.subr.mxu0 0.0
      %696 = vmatpush1.msra.mxu0 0.0
      %697 = vmatprep.subr.mxu0 0.0
      %698 = vmatpush1.msra.mxu0 0.0
      %699 = vmatprep.subr.mxu0 0.0
      %700 = vmatpush1.msra.mxu0 0.0
      %701 = vmatprep.subr.mxu0 0.0
      %702 = vmatpush1.msra.mxu0 0.0
      %703 = vmatprep.subr.mxu0 0.0
      %704 = vmatpush1.msra.mxu0 0.0
      %705 = vmatprep.subr.mxu0 0.0
      %706 = vmatpush1.msra.mxu0 0.0
      %707 = vmatprep.subr.mxu0 0.0
      %708 = vmatpush1.msra.mxu0 0.0
      %709 = vmatprep.subr.mxu0 0.0
      %710 = vmatpush1.msra.mxu0 0.0
      %711 = vmatprep.subr.mxu0 0.0
      %712 = vmatpush1.msra.mxu0 0.0
      %713 = vmatprep.subr.mxu0 0.0
      %714 = vmatpush1.msra.mxu0 0.0
      %715 = vmatprep.subr.mxu0 0.0
      %716 = vmatpush1.msra.mxu0 0.0
      %717 = vmatprep.subr.mxu0 0.0
      %718 = vmatpush1.msra.mxu0 0.0
      %719 = vmatprep.subr.mxu0 0.0
      %720 = vmatpush1.msra.mxu0 0.0
      %721 = vmatprep.subr.mxu0 0.0
      %722 = vmatpush1.msra.mxu0 0.0
      %723 = vmatprep.subr.mxu0 0.0
      %724 = vmatpush1.msra.mxu0 0.0
      %725 = vmatprep.subr.mxu0 0.0
      %726 = vmatpush1.msra.mxu0 0.0
      %727 = vmatprep.subr.mxu0 0.0
      %728 = vmatpush1.msra.mxu0 0.0
      %729 = vmatprep.subr.mxu0 0.0
      %730 = vmatpush1.msra.mxu0 0.0
      %731 = vmatprep.subr.mxu0 0.0
      %732 = vmatpush1.msra.mxu0 0.0
      %733 = vmatprep.mubr.f32.mxu0 0.0
      %734 = vmatmul.mubr.f32.gmra.mrb[0].mxu0 %v667
      %v735 = vpop.f32.mrb[0].mxu0
      %v736 = vadd.f32 0.0, %v735
      %v737 = vpop.f32.mrb[0].mxu0
      %738 = vdwg.mxu0
      %v740 = vsel %vm516, %v591, 0
      %742 = vmatprep.subr.mxu0 0.0
      %743 = vmatpush1.msra.mxu0 %v217
      %744 = vmatprep.subr.mxu0 0.0
      %745 = vmatpush1.msra.mxu0 0.0
      %746 = vmatprep.subr.mxu0 0.0
      %747 = vmatpush1.msra.mxu0 0.0
      %748 = vmatprep.subr.mxu0 0.0
      %749 = vmatpush1.msra.mxu0 0.0
      %750 = vmatprep.subr.mxu0 0.0
      %751 = vmatpush1.msra.mxu0 0.0
      %752 = vmatprep.subr.mxu0 0.0
      %753 = vmatpush1.msra.mxu0 0.0
      %754 = vmatprep.subr.mxu0 0.0
      %755 = vmatpush1.msra.mxu0 0.0
      %756 = vmatprep.subr.mxu0 0.0
      %757 = vmatpush1.msra.mxu0 0.0
      %758 = vmatprep.subr.mxu0 0.0
      %759 = vmatpush1.msra.mxu0 0.0
      %760 = vmatprep.subr.mxu0 0.0
      %761 = vmatpush1.msra.mxu0 0.0
      %762 = vmatprep.subr.mxu0 0.0
      %763 = vmatpush1.msra.mxu0 0.0
      %764 = vmatprep.subr.mxu0 0.0
      %765 = vmatpush1.msra.mxu0 0.0
      %766 = vmatprep.subr.mxu0 0.0
      %767 = vmatpush1.msra.mxu0 0.0
      %768 = vmatprep.subr.mxu0 0.0
      %769 = vmatpush1.msra.mxu0 0.0
      %770 = vmatprep.subr.mxu0 0.0
      %771 = vmatpush1.msra.mxu0 0.0
      %772 = vmatprep.subr.mxu0 0.0
      %773 = vmatpush1.msra.mxu0 0.0
      %774 = vmatprep.subr.mxu0 0.0
      %775 = vmatpush1.msra.mxu0 0.0
      %776 = vmatprep.subr.mxu0 0.0
      %777 = vmatpush1.msra.mxu0 0.0
      %778 = vmatprep.subr.mxu0 0.0
      %779 = vmatpush1.msra.mxu0 0.0
      %780 = vmatprep.subr.mxu0 0.0
      %781 = vmatpush1.msra.mxu0 0.0
      %782 = vmatprep.subr.mxu0 0.0
      %783 = vmatpush1.msra.mxu0 0.0
      %784 = vmatprep.subr.mxu0 0.0
      %785 = vmatpush1.msra.mxu0 0.0
      %786 = vmatprep.subr.mxu0 0.0
      %787 = vmatpush1.msra.mxu0 0.0
      %788 = vmatprep.subr.mxu0 0.0
      %789 = vmatpush1.msra.mxu0 0.0
      %790 = vmatprep.subr.mxu0 0.0
      %791 = vmatpush1.msra.mxu0 0.0
      %792 = vmatprep.subr.mxu0 0.0
      %793 = vmatpush1.msra.mxu0 0.0
      %794 = vmatprep.subr.mxu0 0.0
      %795 = vmatpush1.msra.mxu0 0.0
      %796 = vmatprep.subr.mxu0 0.0
      %797 = vmatpush1.msra.mxu0 0.0
      %798 = vmatprep.subr.mxu0 0.0
      %799 = vmatpush1.msra.mxu0 0.0
      %800 = vmatprep.subr.mxu0 0.0
      %801 = vmatpush1.msra.mxu0 0.0
      %802 = vmatprep.subr.mxu0 0.0
      %803 = vmatpush1.msra.mxu0 0.0
      %804 = vmatprep.subr.mxu0 0.0
      %805 = vmatpush1.msra.mxu0 0.0
      %806 = vmatprep.mubr.f32.mxu0 0.0
      %807 = vmatmul.mubr.f32.gmra.mrb[0].mxu0 %v740
      %v808 = vpop.f32.mrb[0].mxu0
      %v809 = vadd.f32 0.0, %v808
      %v810 = vpop.f32.mrb[0].mxu0
      %811 = vdwg.mxu0
      %v813 = vsel %vm516, %v592, 0
      %815 = vmatprep.subr.mxu0 0.0
      %816 = vmatpush1.msra.mxu0 %v218
      %817 = vmatprep.subr.mxu0 0.0
      %818 = vmatpush1.msra.mxu0 0.0
      %819 = vmatprep.subr.mxu0 0.0
      %820 = vmatpush1.msra.mxu0 0.0
      %821 = vmatprep.subr.mxu0 0.0
      %822 = vmatpush1.msra.mxu0 0.0
      %823 = vmatprep.subr.mxu0 0.0
      %824 = vmatpush1.msra.mxu0 0.0
      %825 = vmatprep.subr.mxu0 0.0
      %826 = vmatpush1.msra.mxu0 0.0
      %827 = vmatprep.subr.mxu0 0.0
      %828 = vmatpush1.msra.mxu0 0.0
      %829 = vmatprep.subr.mxu0 0.0
      %830 = vmatpush1.msra.mxu0 0.0
      %831 = vmatprep.subr.mxu0 0.0
      %832 = vmatpush1.msra.mxu0 0.0
      %833 = vmatprep.subr.mxu0 0.0
      %834 = vmatpush1.msra.mxu0 0.0
      %835 = vmatprep.subr.mxu0 0.0
      %836 = vmatpush1.msra.mxu0 0.0
      %837 = vmatprep.subr.mxu0 0.0
      %838 = vmatpush1.msra.mxu0 0.0
      %839 = vmatprep.subr.mxu0 0.0
      %840 = vmatpush1.msra.mxu0 0.0
      %841 = vmatprep.subr.mxu0 0.0
      %842 = vmatpush1.msra.mxu0 0.0
      %843 = vmatprep.subr.mxu0 0.0
      %844 = vmatpush1.msra.mxu0 0.0
      %845 = vmatprep.subr.mxu0 0.0
      %846 = vmatpush1.msra.mxu0 0.0
      %847 = vmatprep.subr.mxu0 0.0
      %848 = vmatpush1.msra.mxu0 0.0
      %849 = vmatprep.subr.mxu0 0.0
      %850 = vmatpush1.msra.mxu0 0.0
      %851 = vmatprep.subr.mxu0 0.0
      %852 = vmatpush1.msra.mxu0 0.0
      %853 = vmatprep.subr.mxu0 0.0
      %854 = vmatpush1.msra.mxu0 0.0
      %855 = vmatprep.subr.mxu0 0.0
      %856 = vmatpush1.msra.mxu0 0.0
      %857 = vmatprep.subr.mxu0 0.0
      %858 = vmatpush1.msra.mxu0 0.0
      %859 = vmatprep.subr.mxu0 0.0
      %860 = vmatpush1.msra.mxu0 0.0
      %861 = vmatprep.subr.mxu0 0.0
      %862 = vmatpush1.msra.mxu0 0.0
      %863 = vmatprep.subr.mxu0 0.0
      %864 = vmatpush1.msra.mxu0 0.0
      %865 = vmatprep.subr.mxu0 0.0
      %866 = vmatpush1.msra.mxu0 0.0
      %867 = vmatprep.subr.mxu0 0.0
      %868 = vmatpush1.msra.mxu0 0.0
      %869 = vmatprep.subr.mxu0 0.0
      %870 = vmatpush1.msra.mxu0 0.0
      %871 = vmatprep.subr.mxu0 0.0
      %872 = vmatpush1.msra.mxu0 0.0
      %873 = vmatprep.subr.mxu0 0.0
      %874 = vmatpush1.msra.mxu0 0.0
      %875 = vmatprep.subr.mxu0 0.0
      %876 = vmatpush1.msra.mxu0 0.0
      %877 = vmatprep.subr.mxu0 0.0
      %878 = vmatpush1.msra.mxu0 0.0
      %879 = vmatprep.mubr.f32.mxu0 0.0
      %880 = vmatmul.mubr.f32.gmra.mrb[0].mxu0 %v813
      %v881 = vpop.f32.mrb[0].mxu0
      %v882 = vadd.f32 0.0, %v881
      %v883 = vpop.f32.mrb[0].mxu0
      %884 = vdwg.mxu0
      %885 = vst.msk [vmem:[%s210] sm:$0xff] %vm516, %v663
      %886 = vst.msk [vmem:[%s210 + $0x8] sm:$0xff] %vm516, %v736
      %887 = vst.msk [vmem:[%s210 + $0x10] sm:$0xff] %vm516, %v809
      %888 = vst.msk [vmem:[%s210 + $0x18] sm:$0xff] %vm516, %v882
      %p889 = scmp.lt.s32.totalorder %s14, 1
      %s890 = scalar_select %p889, %s14, 1
      %s891 = smul.addr %s890, 4
      %s892 = smul.addr %s891, 8
      %s893 = scalar_lea.vmem %s3, %s892
      // Predicated region
      $region33: #{_lambda_.10} parent=31 // pred_check
        %p894 = pneg %p110
      $region34: #{_lambda_.10} parent=31 // pred_check_branch
        %896 = sbr.rel (%p894) target = $region36
      $region35: #{_lambda_.10} parent=31 // pred_region
        _
      $region36: #{_lambda_.10} parent=31 // pred_fallthru
        _
    $region32: #{_lambda_.10} parent=5 // pred_fallthru
      _
    %p897 = scmp.le.s32.totalorder 2, %s9
    // Predicated region
    $region37: #{_lambda_.10} parent=5 // pred_check
      %p898 = pneg %p897
    $region38: #{_lambda_.10} parent=5 // pred_check_branch
      %900 = sbr.rel (%p898) target = $region40
    $region39: #{_lambda_.10} parent=5 // pred_region
      %s901 = ssub.s32 %s9, 2
      // Predicated region
      $region41: #{_lambda_.10} parent=39 // pred_check
        %p902 = pneg %p116
      $region42: #{_lambda_.10} parent=39 // pred_check_branch
        %904 = sbr.rel (%p902) target = $region44
      $region43: #{_lambda_.10} parent=39 // pred_region
        %p905 = scmp.lt.s32.totalorder %s15, 1
        %s906 = scalar_select %p905, %s15, 1
        %s907 = smul.addr %s906, 4
        %s908 = smul.addr %s907, 8
        %s909 = scalar_lea.vmem %s3, %s908
      $region44: #{_lambda_.10} parent=39 // pred_fallthru
        _
    $region40: #{_lambda_.10} parent=5 // pred_fallthru
      _
  $region6: #{_lambda_.10} parent=0 // loop_footer
    %s13 = sadd.s32 1, %s9
  $region7: #{_lambda_.10} parent=0 // loop_footer_branch
    %8 = sbr.rel target = $region3
  $region8: #{_lambda_.10} parent=0 // loop_exit
    _

</llo_original>
